<compile_context>
chip_gen: v7x
topology: tpu7x:2x2x1
jax: 0.10.0
libtpu: 0.0.40
codegen_flags: <defaults>
</compile_context>

<pallas_src>
import functools

import jax
import jax.numpy as jnp
import numpy as np
from jax.experimental import pallas as pl
from jax.experimental.pallas import tpu as pltpu


# ----------------------------- packing layout --------------------------------

def _col_offsets(C, G, I):
    """Static column offsets inside the single packed parameter slab (rows = sublanes)."""
    o_wt = 0                 # interleaved [Wt1 || Wt2]            (2I, C)
    o_wp = o_wt + C          # interleaved [Wp1 || Wp2]            (2I, G)
    o_psi = o_wp + G         # interleaved psi column              (2I, 1)
    o_m = o_psi + 1          # stacked [M1; M2] = [C1@W1; C2@W2]   (2C, C)
    o_bphi = o_m + C         # interleaved phi bias column         (2I, 1)
    o_bpsi = o_bphi + 1      # interleaved psi bias column         (2I, 1)
    o_bz = o_bpsi + 1        # fused output bias b_z               (C, 1)
    ncol = o_bz + 1
    return o_wt, o_wp, o_psi, o_m, o_bphi, o_bpsi, o_bz, ncol


# ----------------------------- Pallas kernel ---------------------------------

def _mab3d_kernel(x_ref, g_ref, p_ref, out_ref, att_ref, *, C, G, I):
    o_wt, o_wp, o_psi, o_m, o_bphi, o_bpsi, o_bz, _ = _col_offsets(C, G, I)
    Rf = 2 * I        # interleaved inter-channel rows (gate1 on even, gate2 on odd)
    Ru = 2 * C        # stacked output rows of [M1; M2]

    x = x_ref[...]    # (C, TN)   channel-major, voxels on the 128-lane axis
    g = g_ref[...]    # (G, TN)
    p = p_ref[...]    # (8, NCOL) packed parameter slab

    # theta = [Wt1||Wt2] @ x  and  u = [M1; M2] @ x, sharing the extracted x rows.
    x0 = x[0:1, :]
    th = p[0:Rf, o_wt:o_wt + 1] * x0
    u = p[0:Ru, o_m:o_m + 1] * x0
    for k in range(1, C):
        xk = x[k:k + 1, :]
        th = th + p[0:Rf, o_wt + k:o_wt + k + 1] * xk
        u = u + p[0:Ru, o_m + k:o_m + k + 1] * xk

    # phi = [Wp1||Wp2] @ g
    ph = p[0:Rf, o_wp:o_wp + 1] * g[0:1, :]
    for k in range(1, G):
        ph = ph + p[0:Rf, o_wp + k:o_wp + k + 1] * g[k:k + 1, :]

    f = jnp.maximum(th + ph + p[0:Rf, o_bphi:o_bphi + 1], 0.0)       # (Rf, TN)

    # psi contraction: one full-occupancy multiply, then an interleaved group reduction
    # via XLU sublane rolls.  After the shift=Rf/2 step the slab is (Rf/2)-periodic, so
    # every following roll is direction-agnostic; rows 0/1 end up with the gate-1/gate-2
    # pre-activations (and the pattern repeats every 2 rows).
    v = f * p[0:Rf, o_psi:o_psi + 1]
    shift = Rf // 2
    while shift >= 2:
        v = v + pltpu.roll(v, shift=shift, axis=0)
        shift //= 2
    v = v + p[0:Rf, o_bpsi:o_bpsi + 1]

    # sigmoid via tanh: the transcendental runs on the idle EUP slot, no VALU divide.
    s_all = 0.5 * (jnp.tanh(0.5 * v) + 1.0)                          # (Rf, TN)

    att_ref[...] = s_all[0:2, :]                                     # [att_1; att_2]

    s1 = s_all[0:1, :]
    s2 = s_all[1:2, :]

    # Fused (combine_gates o BN o W o gate) output: z = relu(s1*M1@x + s2*M2@x + b_z).
    z = s1 * u[0:C, :] + s2 * u[C:Ru, :] + p[0:C, o_bz:o_bz + 1]
    out_ref[...] = jnp.maximum(z, 0.0)


# ------------------------------- wrapper --------------------------------------

def multi_attention_block3d(x, g, p_packed, *, C, G, I, tile_n=32768):
    """x: (B, C, D, H, W), g: (B, G, D, H, W) -> (out: (B,C,D,H,W), att: (B,2,D,H,W))."""
    B, Cx, D, H, Wd = x.shape
    assert Cx == C and g.shape[1] == G
    assert I & (I - 1) == 0, "psi group reduction assumes inter_size is a power of two"
    S = D * H * Wd
    assert S % 128 == 0  # TODO(synk): pad the voxel axis for arbitrary spatial shapes.

    # Largest tile <= tile_n that divides S and is a multiple of 128.  At the 32K cap the
    # per-step footprint is ~2.4 MB (~4.7 MB double-buffered): fits every generation's
    # default scoped VMEM (v5e 16 MiB, v6e/v7x 32 MiB) with headroom.
    tile_n = min(tile_n, S)
    tile_n -= tile_n % 128
    while S % tile_n != 0:
        tile_n -= 128

    # NCDHW is already channel-major; these reshapes are free (no transpose).
    x2 = x.reshape(B, C, S)
    g2 = g.reshape(B, G, S)

    kernel = functools.partial(_mab3d_kernel, C=C, G=G, I=I)
    grid = (B, S // tile_n)   # both axes parallel -> megacore / v7x dual-TC friendly

    out2, att2 = pl.pallas_call(
        kernel,
        grid=grid,
        in_specs=[
            pl.BlockSpec((None, C, tile_n), lambda bi, j: (bi, 0, j)),
            pl.BlockSpec((None, G, tile_n), lambda bi, j: (bi, 0, j)),
            pl.BlockSpec(p_packed.shape, lambda bi, j: (0, 0)),
        ],
        out_specs=[
            pl.BlockSpec((None, C, tile_n), lambda bi, j: (bi, 0, j)),
            pl.BlockSpec((None, 2, tile_n), lambda bi, j: (bi, 0, j)),
        ],
        out_shape=(jax.ShapeDtypeStruct((B, C, S), jnp.float32),
                   jax.ShapeDtypeStruct((B, 2, S), jnp.float32)),
        compiler_params=pltpu.CompilerParams(
            dimension_semantics=("parallel", "parallel")),
    )(x2, g2, p_packed)

    return out2.reshape(B, C, D, H, Wd), att2.reshape(B, 2, D, H, Wd)


# ------------------------- deterministic parameters ---------------------------

def init_raw_params(key, C, G, I):
    """Raw parameters mirroring the PyTorch module (Conv3d 1x1x1 weights as (out, in))."""
    keys = iter(jax.random.split(key, 64))

    def nrm(shape, scale=0.1):
        return (scale * jax.random.normal(next(keys), shape)).astype(jnp.float32)

    def bn_params(c):
        gamma = (1.0 + 0.05 * jax.random.normal(next(keys), (c,))).astype(jnp.float32)
        beta = nrm((c,), 0.05)
        mean = nrm((c,), 0.1)
        var = (1.0 + 0.1 * jax.nn.softplus(jax.random.normal(next(keys), (c,)))).astype(jnp.float32)
        return gamma, beta, mean, var

    def gate():
        g_, b_, m_, v_ = bn_params(C)
        return dict(wt=nrm((I, C)), wp=nrm((I, G)), bp=nrm((I,), 0.05),
                    wpsi=nrm((1, I)), bpsi=nrm((1,), 0.05),
                    ww=nrm((C, C)), bw=nrm((C,), 0.05),
                    bn_g=g_, bn_b=b_, bn_m=m_, bn_v=v_)

    raw = dict(gate1=gate(), gate2=gate())
    g_, b_, m_, v_ = bn_params(C)
    raw.update(wc=nrm((C, 2 * C)), bc=nrm((C,), 0.05),
               bn_g=g_, bn_b=b_, bn_m=m_, bn_v=v_)
    return raw


def pack_params(raw, C, G, I, eps=1e-5):
    """Fold eval-mode BatchNorms AND the whole post-sigmoid linear chain into the packed
    slab:  M1 = C1@W1_bn, M2 = C2@W2_bn, b_z = C1@b1 + C2@b2 + bc (exact algebra, done in
    float64 to keep the reorder at rounding level).  Gate-1/gate-2 inter-channel rows are
    interleaved (even/odd sublanes) for the in-kernel XLU psi reduction."""
    o_wt, o_wp, o_psi, o_m, o_bphi, o_bpsi, o_bz, ncol = _col_offsets(C, G, I)
    RP = ((max(2 * I, 2 * C) + 7) // 8) * 8

    def f64(a):
        return np.asarray(a, dtype=np.float64)

    def fold(gm, bt, mn, vr):
        sc = f64(gm) / np.sqrt(f64(vr) + eps)
        return sc, f64(bt) - f64(mn) * sc

    p1 = {k: f64(v) for k, v in raw['gate1'].items()}
    p2 = {k: f64(v) for k, v in raw['gate2'].items()}

    s1, h1 = fold(p1['bn_g'], p1['bn_b'], p1['bn_m'], p1['bn_v'])
    s2, h2 = fold(p2['bn_g'], p2['bn_b'], p2['bn_m'], p2['bn_v'])
    sc, hc = fold(raw['bn_g'], raw['bn_b'], raw['bn_m'], raw['bn_v'])

    ww1f = p1['ww'] * s1[:, None]
    bw1f = p1['bw'] * s1 + h1
    ww2f = p2['ww'] * s2[:, None]
    bw2f = p2['bw'] * s2 + h2
    wcf = f64(raw['wc']) * sc[:, None]
    bcf = f64(raw['bc']) * sc + hc

    C1, C2 = wcf[:, 0:C], wcf[:, C:2 * C]
    M1 = C1 @ ww1f
    M2 = C2 @ ww2f
    bz = C1 @ bw1f + C2 @ bw2f + bcf

    W = np.zeros((RP, ncol), np.float64)
    W[0:2 * I:2, o_wt:o_wt + C] = p1['wt']        # interleave: gate1 even, gate2 odd rows
    W[1:2 * I:2, o_wt:o_wt + C] = p2['wt']
    W[0:2 * I:2, o_wp:o_wp + G] = p1['wp']
    W[1:2 * I:2, o_wp:o_wp + G] = p2['wp']
    W[0:2 * I:2, o_psi] = p1['wpsi'][0]
    W[1:2 * I:2, o_psi] = p2['wpsi'][0]
    W[0:C, o_m:o_m + C] = M1                       # stacked (not interleaved)
    W[C:2 * C, o_m:o_m + C] = M2
    W[0:2 * I:2, o_bphi] = p1['bp']
    W[1:2 * I:2, o_bphi] = p2['bp']
    W[0:2 * I:2, o_bpsi] = p1['bpsi'][0]
    W[1:2 * I:2, o_bpsi] = p2['bpsi'][0]
    W[0:C, o_bz] = bz
    return jnp.asarray(W, dtype=jnp.float32)


# ----------------------------- pure-JAX reference -----------------------------

def reference(x, g, raw, eps=1e-5):
    """Unfolded, module-faithful forward pass (Conv -> BN(mean/var) -> etc.)."""
    Bsz, C, D, H, Wd = x.shape
    G = g.shape[1]
    S = D * H * Wd
    x2 = x.reshape(Bsz, C, S)
    g2 = g.reshape(Bsz, G, S)
    hi = jax.lax.Precision.HIGHEST

    def conv(w, bias, t):
        r = jnp.einsum('ok,bks->bos', w, t, precision=hi)
        if bias is not None:
            r = r + bias[None, :, None]
        return r

    def bnorm(t, gm, bt, mn, vr):
        sc = gm / jnp.sqrt(vr + eps)
        return (t - mn[None, :, None]) * sc[None, :, None] + bt[None, :, None]

    def gate_block(p):
        theta = conv(p['wt'], None, x2)
        phi = conv(p['wp'], p['bp'], g2)
        f = jnp.maximum(theta + phi, 0.0)
        s = jax.nn.sigmoid(conv(p['wpsi'], p['bpsi'], f))      # (B, 1, S)
        y = s * x2
        wy = conv(p['ww'], p['bw'], y)
        return bnorm(wy, p['bn_g'], p['bn_b'], p['bn_m'], p['bn_v']), s

    g1, a1 = gate_block(raw['gate1'])
    g2_, a2 = gate_block(raw['gate2'])
    cat = jnp.concatenate([g1, g2_], axis=1)
    z = conv(raw['wc'], raw['bc'], cat)
    z = jnp.maximum(bnorm(z, raw['bn_g'], raw['bn_b'], raw['bn_m'], raw['bn_v']), 0.0)
    att = jnp.concatenate([a1, a2], axis=1)
    return z.reshape(Bsz, C, D, H, Wd), att.reshape(Bsz, 2, D, H, Wd)


# ----------------------------------- main --------------------------------------

if __name__ == "__main__":
    Bsz, C, G, I = 2, 4, 8, 4          # in_size=4, gate_size=8, inter_size=4
    D = H = W = 16                     # spatial 16^3, gating signal same spatial size

    key = jax.random.PRNGKey(0)
    kx, kg, kp = jax.random.split(key, 3)
    x = jax.random.normal(kx, (Bsz, C, D, H, W), dtype=jnp.float32)
    gate_sig = jax.random.normal(kg, (Bsz, G, D, H, W), dtype=jnp.float32)

    raw = init_raw_params(kp, C, G, I)
    p_packed = pack_params(raw, C, G, I)

    fn = jax.jit(functools.partial(multi_attention_block3d, C=C, G=G, I=I))
    out, att = fn(x, gate_sig, p_packed)
    out = jax.block_until_ready(out)
    att = jax.block_until_ready(att)

    ref_out, ref_att = reference(x, gate_sig, raw)
    if not (np.allclose(np.asarray(out), np.asarray(ref_out), rtol=1e-5, atol=1e-5)
            and np.allclose(np.asarray(att), np.asarray(ref_att), rtol=1e-5, atol=1e-5)):
        raise AssertionError("Pallas kernel does not match JAX reference")

    assert out.shape == (Bsz, C, D, H, W) and att.shape == (Bsz, 2, D, H, W)
    print("KERNEL_OK")
</pallas_src>

<mosaic_0001>
module attributes {stable_mosaic.version = 11 : i64} {
  func.func @_mab3d_kernel(%arg0: i32, %arg1: i32, %arg2: memref<1x4x4096xf32, #tpu.memory_space<vmem>>, %arg3: memref<1x8x4096xf32, #tpu.memory_space<vmem>>, %arg4: memref<8x20xf32, #tpu.memory_space<vmem>>, %arg5: memref<1x4x4096xf32, #tpu.memory_space<vmem>>, %arg6: memref<1x2x4096xf32, #tpu.memory_space<vmem>>) attributes {dimension_semantics = [#tpu.dimension_semantics<parallel>, #tpu.dimension_semantics<parallel>], iteration_bounds = array<i64: 2, 1>, scalar_prefetch = 0 : i64, scratch_operands = 0 : i64, tpu.core_type = #tpu.core_type<tc>, window_params = [{transform_indices = @transform_0, window_bounds = array<i64: 1, 4, 4096>}, {transform_indices = @transform_1, window_bounds = array<i64: 1, 8, 4096>}, {pipeline_mode = #tpu.pipeline_mode<synchronous>, transform_indices = @transform_2, window_bounds = array<i64: 8, 20>}, {transform_indices = @transform_3, window_bounds = array<i64: 1, 4, 4096>}, {transform_indices = @transform_4, window_bounds = array<i64: 1, 2, 4096>}]} {
    %c0 = arith.constant 0 : index
    %c0_0 = arith.constant 0 : index
    %c0_1 = arith.constant 0 : index
    %0 = vector.load %arg2[%c0, %c0_0, %c0_1] : memref<1x4x4096xf32, #tpu.memory_space<vmem>>, vector<1x4x4096xf32>
    %1 = vector.shape_cast %0 : vector<1x4x4096xf32> to vector<4x4096xf32>
    %c0_2 = arith.constant 0 : index
    %c0_3 = arith.constant 0 : index
    %c0_4 = arith.constant 0 : index
    %2 = vector.load %arg3[%c0_2, %c0_3, %c0_4] : memref<1x8x4096xf32, #tpu.memory_space<vmem>>, vector<1x8x4096xf32>
    %3 = vector.shape_cast %2 : vector<1x8x4096xf32> to vector<8x4096xf32>
    %c0_5 = arith.constant 0 : index
    %c0_6 = arith.constant 0 : index
    %4 = vector.load %arg4[%c0_5, %c0_6] : memref<8x20xf32, #tpu.memory_space<vmem>>, vector<8x20xf32>
    %5 = vector.extract_strided_slice %1 {offsets = [0, 0], sizes = [1, 4096], strides = [1, 1]} : vector<4x4096xf32> to vector<1x4096xf32>
    %6 = vector.extract_strided_slice %4 {offsets = [0, 0], sizes = [8, 1], strides = [1, 1]} : vector<8x20xf32> to vector<8x1xf32>
    %7 = vector.broadcast %6 : vector<8x1xf32> to vector<8x4096xf32>
    %8 = vector.broadcast %5 : vector<1x4096xf32> to vector<8x4096xf32>
    %9 = arith.mulf %7, %8 : vector<8x4096xf32>
    %10 = vector.extract_strided_slice %4 {offsets = [0, 13], sizes = [8, 1], strides = [1, 1]} : vector<8x20xf32> to vector<8x1xf32>
    %11 = vector.broadcast %10 : vector<8x1xf32> to vector<8x4096xf32>
    %12 = vector.broadcast %5 : vector<1x4096xf32> to vector<8x4096xf32>
    %13 = arith.mulf %11, %12 : vector<8x4096xf32>
    %14 = vector.extract_strided_slice %1 {offsets = [1, 0], sizes = [1, 4096], strides = [1, 1]} : vector<4x4096xf32> to vector<1x4096xf32>
    %15 = vector.extract_strided_slice %4 {offsets = [0, 1], sizes = [8, 1], strides = [1, 1]} : vector<8x20xf32> to vector<8x1xf32>
    %16 = vector.broadcast %15 : vector<8x1xf32> to vector<8x4096xf32>
    %17 = vector.broadcast %14 : vector<1x4096xf32> to vector<8x4096xf32>
    %18 = arith.mulf %16, %17 : vector<8x4096xf32>
    %19 = arith.addf %9, %18 : vector<8x4096xf32>
    %20 = vector.extract_strided_slice %4 {offsets = [0, 14], sizes = [8, 1], strides = [1, 1]} : vector<8x20xf32> to vector<8x1xf32>
    %21 = vector.broadcast %20 : vector<8x1xf32> to vector<8x4096xf32>
    %22 = vector.broadcast %14 : vector<1x4096xf32> to vector<8x4096xf32>
    %23 = arith.mulf %21, %22 : vector<8x4096xf32>
    %24 = arith.addf %13, %23 : vector<8x4096xf32>
    %25 = vector.extract_strided_slice %1 {offsets = [2, 0], sizes = [1, 4096], strides = [1, 1]} : vector<4x4096xf32> to vector<1x4096xf32>
    %26 = vector.extract_strided_slice %4 {offsets = [0, 2], sizes = [8, 1], strides = [1, 1]} : vector<8x20xf32> to vector<8x1xf32>
    %27 = vector.broadcast %26 : vector<8x1xf32> to vector<8x4096xf32>
    %28 = vector.broadcast %25 : vector<1x4096xf32> to vector<8x4096xf32>
    %29 = arith.mulf %27, %28 : vector<8x4096xf32>
    %30 = arith.addf %19, %29 : vector<8x4096xf32>
    %31 = vector.extract_strided_slice %4 {offsets = [0, 15], sizes = [8, 1], strides = [1, 1]} : vector<8x20xf32> to vector<8x1xf32>
    %32 = vector.broadcast %31 : vector<8x1xf32> to vector<8x4096xf32>
    %33 = vector.broadcast %25 : vector<1x4096xf32> to vector<8x4096xf32>
    %34 = arith.mulf %32, %33 : vector<8x4096xf32>
    %35 = arith.addf %24, %34 : vector<8x4096xf32>
    %36 = vector.extract_strided_slice %1 {offsets = [3, 0], sizes = [1, 4096], strides = [1, 1]} : vector<4x4096xf32> to vector<1x4096xf32>
    %37 = vector.extract_strided_slice %4 {offsets = [0, 3], sizes = [8, 1], strides = [1, 1]} : vector<8x20xf32> to vector<8x1xf32>
    %38 = vector.broadcast %37 : vector<8x1xf32> to vector<8x4096xf32>
    %39 = vector.broadcast %36 : vector<1x4096xf32> to vector<8x4096xf32>
    %40 = arith.mulf %38, %39 : vector<8x4096xf32>
    %41 = arith.addf %30, %40 : vector<8x4096xf32>
    %42 = vector.extract_strided_slice %4 {offsets = [0, 16], sizes = [8, 1], strides = [1, 1]} : vector<8x20xf32> to vector<8x1xf32>
    %43 = vector.broadcast %42 : vector<8x1xf32> to vector<8x4096xf32>
    %44 = vector.broadcast %36 : vector<1x4096xf32> to vector<8x4096xf32>
    %45 = arith.mulf %43, %44 : vector<8x4096xf32>
    %46 = arith.addf %35, %45 : vector<8x4096xf32>
    %47 = vector.extract_strided_slice %4 {offsets = [0, 4], sizes = [8, 1], strides = [1, 1]} : vector<8x20xf32> to vector<8x1xf32>
    %48 = vector.extract_strided_slice %3 {offsets = [0, 0], sizes = [1, 4096], strides = [1, 1]} : vector<8x4096xf32> to vector<1x4096xf32>
    %49 = vector.broadcast %47 : vector<8x1xf32> to vector<8x4096xf32>
    %50 = vector.broadcast %48 : vector<1x4096xf32> to vector<8x4096xf32>
    %51 = arith.mulf %49, %50 : vector<8x4096xf32>
    %52 = vector.extract_strided_slice %4 {offsets = [0, 5], sizes = [8, 1], strides = [1, 1]} : vector<8x20xf32> to vector<8x1xf32>
    %53 = vector.extract_strided_slice %3 {offsets = [1, 0], sizes = [1, 4096], strides = [1, 1]} : vector<8x4096xf32> to vector<1x4096xf32>
    %54 = vector.broadcast %52 : vector<8x1xf32> to vector<8x4096xf32>
    %55 = vector.broadcast %53 : vector<1x4096xf32> to vector<8x4096xf32>
    %56 = arith.mulf %54, %55 : vector<8x4096xf32>
    %57 = arith.addf %51, %56 : vector<8x4096xf32>
    %58 = vector.extract_strided_slice %4 {offsets = [0, 6], sizes = [8, 1], strides = [1, 1]} : vector<8x20xf32> to vector<8x1xf32>
    %59 = vector.extract_strided_slice %3 {offsets = [2, 0], sizes = [1, 4096], strides = [1, 1]} : vector<8x4096xf32> to vector<1x4096xf32>
    %60 = vector.broadcast %58 : vector<8x1xf32> to vector<8x4096xf32>
    %61 = vector.broadcast %59 : vector<1x4096xf32> to vector<8x4096xf32>
    %62 = arith.mulf %60, %61 : vector<8x4096xf32>
    %63 = arith.addf %57, %62 : vector<8x4096xf32>
    %64 = vector.extract_strided_slice %4 {offsets = [0, 7], sizes = [8, 1], strides = [1, 1]} : vector<8x20xf32> to vector<8x1xf32>
    %65 = vector.extract_strided_slice %3 {offsets = [3, 0], sizes = [1, 4096], strides = [1, 1]} : vector<8x4096xf32> to vector<1x4096xf32>
    %66 = vector.broadcast %64 : vector<8x1xf32> to vector<8x4096xf32>
    %67 = vector.broadcast %65 : vector<1x4096xf32> to vector<8x4096xf32>
    %68 = arith.mulf %66, %67 : vector<8x4096xf32>
    %69 = arith.addf %63, %68 : vector<8x4096xf32>
    %70 = vector.extract_strided_slice %4 {offsets = [0, 8], sizes = [8, 1], strides = [1, 1]} : vector<8x20xf32> to vector<8x1xf32>
    %71 = vector.extract_strided_slice %3 {offsets = [4, 0], sizes = [1, 4096], strides = [1, 1]} : vector<8x4096xf32> to vector<1x4096xf32>
    %72 = vector.broadcast %70 : vector<8x1xf32> to vector<8x4096xf32>
    %73 = vector.broadcast %71 : vector<1x4096xf32> to vector<8x4096xf32>
    %74 = arith.mulf %72, %73 : vector<8x4096xf32>
    %75 = arith.addf %69, %74 : vector<8x4096xf32>
    %76 = vector.extract_strided_slice %4 {offsets = [0, 9], sizes = [8, 1], strides = [1, 1]} : vector<8x20xf32> to vector<8x1xf32>
    %77 = vector.extract_strided_slice %3 {offsets = [5, 0], sizes = [1, 4096], strides = [1, 1]} : vector<8x4096xf32> to vector<1x4096xf32>
    %78 = vector.broadcast %76 : vector<8x1xf32> to vector<8x4096xf32>
    %79 = vector.broadcast %77 : vector<1x4096xf32> to vector<8x4096xf32>
    %80 = arith.mulf %78, %79 : vector<8x4096xf32>
    %81 = arith.addf %75, %80 : vector<8x4096xf32>
    %82 = vector.extract_strided_slice %4 {offsets = [0, 10], sizes = [8, 1], strides = [1, 1]} : vector<8x20xf32> to vector<8x1xf32>
    %83 = vector.extract_strided_slice %3 {offsets = [6, 0], sizes = [1, 4096], strides = [1, 1]} : vector<8x4096xf32> to vector<1x4096xf32>
    %84 = vector.broadcast %82 : vector<8x1xf32> to vector<8x4096xf32>
    %85 = vector.broadcast %83 : vector<1x4096xf32> to vector<8x4096xf32>
    %86 = arith.mulf %84, %85 : vector<8x4096xf32>
    %87 = arith.addf %81, %86 : vector<8x4096xf32>
    %88 = vector.extract_strided_slice %4 {offsets = [0, 11], sizes = [8, 1], strides = [1, 1]} : vector<8x20xf32> to vector<8x1xf32>
    %89 = vector.extract_strided_slice %3 {offsets = [7, 0], sizes = [1, 4096], strides = [1, 1]} : vector<8x4096xf32> to vector<1x4096xf32>
    %90 = vector.broadcast %88 : vector<8x1xf32> to vector<8x4096xf32>
    %91 = vector.broadcast %89 : vector<1x4096xf32> to vector<8x4096xf32>
    %92 = arith.mulf %90, %91 : vector<8x4096xf32>
    %93 = arith.addf %87, %92 : vector<8x4096xf32>
    %94 = arith.addf %41, %93 : vector<8x4096xf32>
    %95 = vector.extract_strided_slice %4 {offsets = [0, 17], sizes = [8, 1], strides = [1, 1]} : vector<8x20xf32> to vector<8x1xf32>
    %96 = vector.broadcast %95 : vector<8x1xf32> to vector<8x4096xf32>
    %97 = arith.addf %94, %96 : vector<8x4096xf32>
    %cst = arith.constant 0.000000e+00 : f32
    %98 = vector.broadcast %cst : f32 to vector<8x4096xf32>
    %99 = arith.maximumf %97, %98 : vector<8x4096xf32>
    %100 = vector.extract_strided_slice %4 {offsets = [0, 12], sizes = [8, 1], strides = [1, 1]} : vector<8x20xf32> to vector<8x1xf32>
    %101 = vector.broadcast %100 : vector<8x1xf32> to vector<8x4096xf32>
    %102 = arith.mulf %99, %101 : vector<8x4096xf32>
    %c4_i32 = arith.constant 4 : i32
    %103 = tpu.dynamic_rotate %102 by %c4_i32 dim 0 : vector<8x4096xf32>, i32 -> vector<8x4096xf32>
    %104 = arith.addf %102, %103 : vector<8x4096xf32>
    %c2_i32 = arith.constant 2 : i32
    %105 = tpu.dynamic_rotate %104 by %c2_i32 dim 0 : vector<8x4096xf32>, i32 -> vector<8x4096xf32>
    %106 = arith.addf %104, %105 : vector<8x4096xf32>
    %107 = vector.extract_strided_slice %4 {offsets = [0, 18], sizes = [8, 1], strides = [1, 1]} : vector<8x20xf32> to vector<8x1xf32>
    %108 = vector.broadcast %107 : vector<8x1xf32> to vector<8x4096xf32>
    %109 = arith.addf %106, %108 : vector<8x4096xf32>
    %cst_7 = arith.constant 5.000000e-01 : f32
    %110 = vector.broadcast %cst_7 : f32 to vector<8x4096xf32>
    %111 = arith.mulf %110, %109 : vector<8x4096xf32>
    %112 = math.tanh %111 : vector<8x4096xf32>
    %cst_8 = arith.constant 1.000000e+00 : f32
    %113 = vector.broadcast %cst_8 : f32 to vector<8x4096xf32>
    %114 = arith.addf %112, %113 : vector<8x4096xf32>
    %cst_9 = arith.constant 5.000000e-01 : f32
    %115 = vector.broadcast %cst_9 : f32 to vector<8x4096xf32>
    %116 = arith.mulf %115, %114 : vector<8x4096xf32>
    %117 = vector.extract_strided_slice %116 {offsets = [0, 0], sizes = [2, 4096], strides = [1, 1]} : vector<8x4096xf32> to vector<2x4096xf32>
    %c0_10 = arith.constant 0 : index
    %c0_11 = arith.constant 0 : index
    %c0_12 = arith.constant 0 : index
    %118 = vector.load %arg6[%c0_10, %c0_11, %c0_12] : memref<1x2x4096xf32, #tpu.memory_space<vmem>>, vector<1x2x4096xf32>
    %119 = vector.shape_cast %118 : vector<1x2x4096xf32> to vector<2x4096xf32>
    %120 = vector.shape_cast %117 : vector<2x4096xf32> to vector<1x2x4096xf32>
    tpu.vector_store %arg6[%c0_10, %c0_11, %c0_12], %120 {strides = array<i32>} : memref<1x2x4096xf32, #tpu.memory_space<vmem>>, vector<1x2x4096xf32>,
    %121 = vector.extract_strided_slice %116 {offsets = [0, 0], sizes = [1, 4096], strides = [1, 1]} : vector<8x4096xf32> to vector<1x4096xf32>
    %122 = vector.extract_strided_slice %116 {offsets = [1, 0], sizes = [1, 4096], strides = [1, 1]} : vector<8x4096xf32> to vector<1x4096xf32>
    %123 = vector.extract_strided_slice %46 {offsets = [0, 0], sizes = [4, 4096], strides = [1, 1]} : vector<8x4096xf32> to vector<4x4096xf32>
    %124 = vector.broadcast %121 : vector<1x4096xf32> to vector<4x4096xf32>
    %125 = arith.mulf %124, %123 : vector<4x4096xf32>
    %126 = vector.extract_strided_slice %46 {offsets = [4, 0], sizes = [4, 4096], strides = [1, 1]} : vector<8x4096xf32> to vector<4x4096xf32>
    %127 = vector.broadcast %122 : vector<1x4096xf32> to vector<4x4096xf32>
    %128 = arith.mulf %127, %126 : vector<4x4096xf32>
    %129 = arith.addf %125, %128 : vector<4x4096xf32>
    %130 = vector.extract_strided_slice %4 {offsets = [0, 19], sizes = [4, 1], strides = [1, 1]} : vector<8x20xf32> to vector<4x1xf32>
    %131 = vector.broadcast %130 : vector<4x1xf32> to vector<4x4096xf32>
    %132 = arith.addf %129, %131 : vector<4x4096xf32>
    %cst_13 = arith.constant 0.000000e+00 : f32
    %133 = vector.broadcast %cst_13 : f32 to vector<4x4096xf32>
    %134 = arith.maximumf %132, %133 : vector<4x4096xf32>
    %c0_14 = arith.constant 0 : index
    %c0_15 = arith.constant 0 : index
    %c0_16 = arith.constant 0 : index
    %135 = vector.load %arg5[%c0_14, %c0_15, %c0_16] : memref<1x4x4096xf32, #tpu.memory_space<vmem>>, vector<1x4x4096xf32>
    %136 = vector.shape_cast %135 : vector<1x4x4096xf32> to vector<4x4096xf32>
    %137 = vector.shape_cast %134 : vector<4x4096xf32> to vector<1x4x4096xf32>
    tpu.vector_store %arg5[%c0_14, %c0_15, %c0_16], %137 {strides = array<i32>} : memref<1x4x4096xf32, #tpu.memory_space<vmem>>, vector<1x4x4096xf32>,
    return
  }
  func.func @transform_0(%arg0: i32, %arg1: i32) -> (i32, i32, i32) {
    %c0_i32 = arith.constant 0 : i32
    %c0_i32_0 = arith.constant 0 : i32
    return %arg0, %c0_i32, %arg1 : i32, i32, i32
  }
  func.func @transform_1(%arg0: i32, %arg1: i32) -> (i32, i32, i32) {
    %c0_i32 = arith.constant 0 : i32
    %c0_i32_0 = arith.constant 0 : i32
    return %arg0, %c0_i32, %arg1 : i32, i32, i32
  }
  func.func @transform_2(%arg0: i32, %arg1: i32) -> (i32, i32) {
    %c0_i32 = arith.constant 0 : i32
    %c0_i32_0 = arith.constant 0 : i32
    %c0_i32_1 = arith.constant 0 : i32
    return %c0_i32, %c0_i32_0 : i32, i32
  }
  func.func @transform_3(%arg0: i32, %arg1: i32) -> (i32, i32, i32) {
    %c0_i32 = arith.constant 0 : i32
    %c0_i32_0 = arith.constant 0 : i32
    return %arg0, %c0_i32, %arg1 : i32, i32, i32
  }
  func.func @transform_4(%arg0: i32, %arg1: i32) -> (i32, i32, i32) {
    %c0_i32 = arith.constant 0 : i32
    %c0_i32_0 = arith.constant 0 : i32
    return %arg0, %c0_i32, %arg1 : i32, i32, i32
  }
}

</mosaic_0001>

<llo_original>
// kernel: multi_attention_block3d.1
$region0: #{multi_attention_block3d.1}
  #allocation0 [shape = 'u32[]', space=smem, size = 0x4, offset = 0x4, fixed_abs, tag = 'smem constant byte address 0x4 - core index']
  #allocation1 [shape = 'u32[144,128]{1,0:T(1,128)}', space=vmem, size = 0x12000, scoped, tag = 'internal scratch']
  %s0 = inlined_call_operand.vmem [shape: f32[2,4,4096], index: 0, kind: input, shape index: {}]
  %s1 = inlined_call_operand.vmem [shape: f32[2,8,4096], index: 1, kind: input, shape index: {}]
  %s2 = inlined_call_operand.vmem [shape: f32[8,20], index: 2, kind: input, shape index: {}]
  %s3 = inlined_call_operand.vmem [shape: f32[2,4,4096], index: 3, kind: output, shape index: {0}]
  %s4 = inlined_call_operand.vmem [shape: f32[2,2,4096], index: 4, kind: output, shape index: {1}]
  %5 = xla_tuple %s3, %s4
  %s6 = sld [smem:[#allocation0]]
  $region53: #{multi_attention_block3d.1} parent=0
    _
  %s8 = ssub.s32 1, %s6
  %s9 = scalar_select 0, %s8, %s6
  loop: start=0, step=1, limit=4
  $region2: #{multi_attention_block3d.1} parent=0 // loop_pre_header
    _
  $region3: #{multi_attention_block3d.1} parent=0 // loop_header
    %s11 = sphi 0, %s15
    %p12 = scmp.ge.s32.totalorder %s11, 4
    %s18 = sphi 0, %s30
    %s19 = sphi 0, %s26
    %s20 = sphi 0, %s18
    %s21 = sphi 0, %s19
    %s22 = sphi 0, %s20
    %s23 = sphi 0, %s21
    %s35 = sphi 0, %s37
    %s38 = sphi 0, %s35
    %s39 = sphi 0, %s38
    %s55 = sphi 0, %s39
    %s63 = sphi 0, %s65
    %s66 = sphi 0, %s63
    %s67 = sphi 0, %s66
    %s83 = sphi 0, %s67
    %s87 = sphi 0, %s87
    %s89 = sphi 0, %s87
    %s90 = sphi 0, %s89
    %s104 = sphi 0, %s90
    %s112 = sphi 0, %s114
    %s115 = sphi 0, %s112
    %s116 = sphi 0, %s115
    %s132 = sphi 0, %s116
    %s140 = sphi 0, %s142
    %s143 = sphi 0, %s140
    %s144 = sphi 0, %s143
    %s160 = sphi 0, %s144
  $region4: #{multi_attention_block3d.1} parent=0 // loop_header_branch
    %14 = sbr.rel (%p12) target = $region8
  $region5: #{multi_attention_block3d.1} parent=0 // loop_body
    %s16 = ssub.s32 %s11, 1
    %s17 = ssub.s32 %s11, 2
    %s24 = sadd.s32 1, %s19
    %p25 = scmp.ge.s32.totalorder %s24, 1
    %s26 = scalar_select %p25, 0, %s24
    %s27 = sadd.s32 1, %s18
    %s28 = scalar_select %p25, %s27, %s18
    %p29 = scmp.ge.s32.totalorder %s28, 2
    %s30 = scalar_select %p29, 0, %s28
    %s31 = ssub.s32 %s18, %s30
    %s32 = ssub.s32 %s19, %s26
    %s33 = sor.u32 %s31, %s32
    %p34 = scmp.eq.s32.totalorder %s33, 0
    %s36 = sadd.s32 %s35, 1
    %s37 = scalar_select %p34, %s35, %s36
    %p40 = pneg %p34
    %p41 = scmp.eq.s32.totalorder %s11, 1
    %p42 = por %p40, %p41
    %p43 = scmp.ne.s32.totalorder %s35, %s38
    %p44 = scmp.eq.s32.totalorder %s11, 0
    %p45 = por %p43, %p44
    %p46 = scmp.ne.s32.totalorder %s35, %s38
    %p47 = scmp.eq.s32.totalorder %s16, 1
    %p48 = por %p46, %p47
    %p49 = scmp.ne.s32.totalorder %s38, %s39
    %p50 = scmp.eq.s32.totalorder %s16, 0
    %p51 = por %p49, %p50
    %p52 = scmp.ne.s32.totalorder %s38, %s39
    %p53 = scmp.eq.s32.totalorder %s17, 1
    %p54 = por %p52, %p53
    %p56 = scmp.ne.s32.totalorder %s39, %s55
    %p57 = scmp.eq.s32.totalorder %s17, 0
    %p58 = por %p56, %p57
    %s59 = ssub.s32 %s18, %s30
    %s60 = ssub.s32 %s19, %s26
    %s61 = sor.u32 %s59, %s60
    %p62 = scmp.eq.s32.totalorder %s61, 0
    %s64 = sadd.s32 %s63, 1
    %s65 = scalar_select %p62, %s63, %s64
    %p68 = pneg %p62
    %p69 = scmp.eq.s32.totalorder %s11, 1
    %p70 = por %p68, %p69
    %p71 = scmp.ne.s32.totalorder %s63, %s66
    %p72 = scmp.eq.s32.totalorder %s11, 0
    %p73 = por %p71, %p72
    %p74 = scmp.ne.s32.totalorder %s63, %s66
    %p75 = scmp.eq.s32.totalorder %s16, 1
    %p76 = por %p74, %p75
    %p77 = scmp.ne.s32.totalorder %s66, %s67
    %p78 = scmp.eq.s32.totalorder %s16, 0
    %p79 = por %p77, %p78
    %p80 = scmp.ne.s32.totalorder %s66, %s67
    %p81 = scmp.eq.s32.totalorder %s17, 1
    %p82 = por %p80, %p81
    %p84 = scmp.ne.s32.totalorder %s67, %s83
    %p85 = scmp.eq.s32.totalorder %s17, 0
    %p86 = por %p84, %p85
    %s88 = sadd.s32 %s87, 1
    %p91 = scmp.eq.s32.totalorder %s11, 1
    %p92 = scmp.ne.s32.totalorder %s87, %s89
    %p93 = scmp.eq.s32.totalorder %s11, 0
    %p94 = por %p92, %p93
    %p95 = scmp.ne.s32.totalorder %s87, %s89
    %p96 = scmp.eq.s32.totalorder %s16, 1
    %p97 = por %p95, %p96
    %p98 = scmp.ne.s32.totalorder %s89, %s90
    %p99 = scmp.eq.s32.totalorder %s16, 0
    %p100 = por %p98, %p99
    %p101 = scmp.ne.s32.totalorder %s89, %s90
    %p102 = scmp.eq.s32.totalorder %s17, 1
    %p103 = por %p101, %p102
    %p105 = scmp.ne.s32.totalorder %s90, %s104
    %p106 = scmp.eq.s32.totalorder %s17, 0
    %p107 = por %p105, %p106
    %s108 = ssub.s32 %s18, %s30
    %s109 = ssub.s32 %s19, %s26
    %s110 = sor.u32 %s108, %s109
    %p111 = scmp.eq.s32.totalorder %s110, 0
    %s113 = sadd.s32 %s112, 1
    %s114 = scalar_select %p111, %s112, %s113
    %p117 = pneg %p111
    %p118 = scmp.eq.s32.totalorder %s11, 1
    %p119 = por %p117, %p118
    %p120 = scmp.ne.s32.totalorder %s112, %s115
    %p121 = scmp.eq.s32.totalorder %s11, 0
    %p122 = por %p120, %p121
    %p123 = scmp.ne.s32.totalorder %s112, %s115
    %p124 = scmp.eq.s32.totalorder %s16, 1
    %p125 = por %p123, %p124
    %p126 = scmp.ne.s32.totalorder %s115, %s116
    %p127 = scmp.eq.s32.totalorder %s16, 0
    %p128 = por %p126, %p127
    %p129 = scmp.ne.s32.totalorder %s115, %s116
    %p130 = scmp.eq.s32.totalorder %s17, 1
    %p131 = por %p129, %p130
    %p133 = scmp.ne.s32.totalorder %s116, %s132
    %p134 = scmp.eq.s32.totalorder %s17, 0
    %p135 = por %p133, %p134
    %s136 = ssub.s32 %s18, %s30
    %s137 = ssub.s32 %s19, %s26
    %s138 = sor.u32 %s136, %s137
    %p139 = scmp.eq.s32.totalorder %s138, 0
    %s141 = sadd.s32 %s140, 1
    %s142 = scalar_select %p139, %s140, %s141
    %p145 = pneg %p139
    %p146 = scmp.eq.s32.totalorder %s11, 1
    %p147 = por %p145, %p146
    %p148 = scmp.ne.s32.totalorder %s140, %s143
    %p149 = scmp.eq.s32.totalorder %s11, 0
    %p150 = por %p148, %p149
    %p151 = scmp.ne.s32.totalorder %s140, %s143
    %p152 = scmp.eq.s32.totalorder %s16, 1
    %p153 = por %p151, %p152
    %p154 = scmp.ne.s32.totalorder %s143, %s144
    %p155 = scmp.eq.s32.totalorder %s16, 0
    %p156 = por %p154, %p155
    %p157 = scmp.ne.s32.totalorder %s143, %s144
    %p158 = scmp.eq.s32.totalorder %s17, 1
    %p159 = por %p157, %p158
    %p161 = scmp.ne.s32.totalorder %s144, %s160
    %p162 = scmp.eq.s32.totalorder %s17, 0
    %p163 = por %p161, %p162
    %p164 = scmp.le.s32.totalorder 1, %s11
    %p165 = scmp.lt.s32.totalorder %s11, 3
    %p166 = pnand %p164, %p165
    %p167 = pneg %p166
    // Predicated region
    $region9: #{multi_attention_block3d.1} parent=5 // pred_check
      _
    $region10: #{multi_attention_block3d.1} parent=5 // pred_check_branch
      %169 = sbr.rel (%p166) target = $region12
    $region11: #{multi_attention_block3d.1} parent=5 // pred_region
      %s170 = ssub.s32 %s11, 1
      // Predicated region
      $region13: #{multi_attention_block3d.1} parent=11 // pred_check
        %p171 = pneg %p100
      $region14: #{multi_attention_block3d.1} parent=11 // pred_check_branch
        %173 = sbr.rel (%p171) target = $region16
      $region15: #{multi_attention_block3d.1} parent=11 // pred_region
        _
      $region16: #{multi_attention_block3d.1} parent=11 // pred_fallthru
        _
    $region12: #{multi_attention_block3d.1} parent=5 // pred_fallthru
      _
    %p174 = scmp.lt.s32.totalorder %s11, 2
    // Predicated region
    $region17: #{multi_attention_block3d.1} parent=5 // pred_check
      %p175 = pneg %p174
    $region18: #{multi_attention_block3d.1} parent=5 // pred_check_branch
      %177 = sbr.rel (%p175) target = $region20
    $region19: #{multi_attention_block3d.1} parent=5 // pred_region
      // Predicated region
      $region21: #{multi_attention_block3d.1} parent=19 // pred_check
        %p178 = pneg %p45
      $region22: #{multi_attention_block3d.1} parent=19 // pred_check_branch
        %180 = sbr.rel (%p178) target = $region24
      $region23: #{multi_attention_block3d.1} parent=19 // pred_region
        %s181 = smul.u32 32, %s19
        %p182 = scmp.lt.s32.totalorder %s18, 1
        %s183 = scalar_select %p182, %s18, 1
        %p184 = scmp.lt.s32.totalorder %s181, 31
        %s185 = scalar_select %p184, %s181, 31
        %s186 = smul.addr %s183, 32
        %s187 = sadd.s32 %s185, %s186
        %s188 = smul.addr %s187, 4
        %s189 = scalar_lea.vmem %s0, %s188
        %s190 = smul.u32 32, %s19
      $region24: #{multi_attention_block3d.1} parent=19 // pred_fallthru
        _
      // Predicated region
      $region25: #{multi_attention_block3d.1} parent=19 // pred_check
        %p191 = pneg %p73
      $region26: #{multi_attention_block3d.1} parent=19 // pred_check_branch
        %193 = sbr.rel (%p191) target = $region28
      $region27: #{multi_attention_block3d.1} parent=19 // pred_region
        %s194 = smul.u32 32, %s19
        %p195 = scmp.lt.s32.totalorder %s18, 1
        %s196 = scalar_select %p195, %s18, 1
        %p197 = scmp.lt.s32.totalorder %s194, 31
        %s198 = scalar_select %p197, %s194, 31
        %s199 = smul.addr %s196, 32
        %s200 = sadd.s32 %s198, %s199
        %s201 = smul.addr %s200, 8
        %s202 = scalar_lea.vmem %s1, %s201
        %s203 = smul.u32 32, %s19
      $region28: #{multi_attention_block3d.1} parent=19 // pred_fallthru
        _
    $region20: #{multi_attention_block3d.1} parent=5 // pred_fallthru
      _
    %p204 = scmp.le.s32.totalorder 1, %s11
    %p205 = scmp.lt.s32.totalorder %s11, 3
    %p206 = pnand %p204, %p205
    %p207 = pneg %p206
    // Predicated region
    $region29: #{multi_attention_block3d.1} parent=5 // pred_check
      _
    $region30: #{multi_attention_block3d.1} parent=5 // pred_check_branch
      %209 = sbr.rel (%p206) target = $region32
    $region31: #{multi_attention_block3d.1} parent=5 // pred_region
      %s210 = ssub.s32 %s11, 1
      %s211 = smul.u32 32, %s21
      %p212 = scmp.lt.s32.totalorder %s20, 1
      %s213 = scalar_select %p212, %s20, 1
      %p214 = scmp.lt.s32.totalorder %s211, 31
      %s215 = scalar_select %p214, %s211, 31
      %s216 = smul.addr %s213, 32
      %s217 = sadd.s32 %s215, %s216
      %s218 = smul.addr %s217, 4
      %s219 = scalar_lea.vmem %s0, %s218
      %p220 = pneg %p51
      %p221 = pneg %p48
      %s222 = smul.u32 32, %s21
      %p223 = scmp.lt.s32.totalorder %s20, 1
      %s224 = scalar_select %p223, %s20, 1
      %p225 = scmp.lt.s32.totalorder %s222, 31
      %s226 = scalar_select %p225, %s222, 31
      %s227 = smul.addr %s224, 32
      %s228 = sadd.s32 %s226, %s227
      %s229 = smul.addr %s228, 8
      %s230 = scalar_lea.vmem %s1, %s229
      %p231 = pneg %p79
      %p232 = pneg %p76
      %p233 = pneg %p100
      %p234 = pneg %p97
      %p235 = pneg %p128
      %p236 = pneg %p125
      %s237 = smul.u32 32, %s21
      %p238 = scmp.lt.s32.totalorder %s20, 1
      %s239 = scalar_select %p238, %s20, 1
      %p240 = scmp.lt.s32.totalorder %s237, 31
      %s241 = scalar_select %p240, %s237, 31
      %s242 = smul.addr %s239, 32
      %s243 = sadd.s32 %s241, %s242
      %s244 = smul.addr %s243, 4
      %s245 = scalar_lea.vmem %s3, %s244
      %p246 = pneg %p156
      %p247 = pneg %p153
      %s248 = smul.u32 32, %s21
      %p249 = scmp.lt.s32.totalorder %s20, 1
      %s250 = scalar_select %p249, %s20, 1
      %p251 = scmp.lt.s32.totalorder %s248, 31
      %s252 = scalar_select %p251, %s248, 31
      %s253 = smul.addr %s250, 32
      %s254 = sadd.s32 %s252, %s253
      %s255 = smul.addr %s254, 2
      %s256 = scalar_lea.vmem %s4, %s255
      %s257 = smul.u32 32, %s21
      %p258 = scmp.lt.s32.totalorder %s20, 1
      %s259 = scalar_select %p258, %s20, 1
      %p260 = scmp.lt.s32.totalorder %s257, 31
      %s261 = scalar_select %p260, %s257, 31
      %s262 = smul.addr %s259, 32
      %s263 = sadd.s32 %s261, %s262
      %s264 = smul.addr %s263, 4
      %s265 = scalar_lea.vmem %s0, %s264
      %s266 = smul.u32 32, %s21
      %s267 = smul.u32 32, %s21
      %p268 = scmp.lt.s32.totalorder %s20, 1
      %s269 = scalar_select %p268, %s20, 1
      %p270 = scmp.lt.s32.totalorder %s267, 31
      %s271 = scalar_select %p270, %s267, 31
      %s272 = smul.addr %s269, 32
      %s273 = sadd.s32 %s271, %s272
      %s274 = smul.addr %s273, 8
      %s275 = scalar_lea.vmem %s1, %s274
      %s276 = smul.u32 32, %s21
      %s277 = smul.u32 32, %s21
      %p278 = scmp.lt.s32.totalorder %s20, 1
      %s279 = scalar_select %p278, %s20, 1
      %p280 = scmp.lt.s32.totalorder %s277, 31
      %s281 = scalar_select %p280, %s277, 31
      %s282 = smul.addr %s279, 32
      %s283 = sadd.s32 %s281, %s282
      %s284 = smul.addr %s283, 4
      %s285 = scalar_lea.vmem %s3, %s284
      %s286 = smul.u32 32, %s21
      %s287 = smul.u32 32, %s21
      %p288 = scmp.lt.s32.totalorder %s20, 1
      %s289 = scalar_select %p288, %s20, 1
      %p290 = scmp.lt.s32.totalorder %s287, 31
      %s291 = scalar_select %p290, %s287, 31
      %s292 = smul.addr %s289, 32
      %s293 = sadd.s32 %s291, %s292
      %s294 = smul.addr %s293, 2
      %s295 = scalar_lea.vmem %s4, %s294
      %s296 = smul.u32 32, %s21
      %v297 = vld [vmem:[%s265] sm:$0xff]
      %v298 = vld [vmem:[%s265 + $0x8] sm:$0xff]
      %v299 = vld [vmem:[%s265 + $0x10] sm:$0xff]
      %v300 = vld [vmem:[%s265 + $0x18] sm:$0xff]
      %v301 = vld [vmem:[%s265 + $0x20] sm:$0xff]
      %v302 = vld [vmem:[%s265 + $0x28] sm:$0xff]
      %v303 = vld [vmem:[%s265 + $0x30] sm:$0xff]
      %v304 = vld [vmem:[%s265 + $0x38] sm:$0xff]
      %v305 = vld [vmem:[%s265 + $0x40] sm:$0xff]
      %v306 = vld [vmem:[%s265 + $0x48] sm:$0xff]
      %v307 = vld [vmem:[%s265 + $0x50] sm:$0xff]
      %v308 = vld [vmem:[%s265 + $0x58] sm:$0xff]
      %v309 = vld [vmem:[%s265 + $0x60] sm:$0xff]
      %v310 = vld [vmem:[%s265 + $0x68] sm:$0xff]
      %v311 = vld [vmem:[%s265 + $0x70] sm:$0xff]
      %v312 = vld [vmem:[%s265 + $0x78] sm:$0xff]
      %v313 = vld [vmem:[%s275] sm:$0xff]
      %v314 = vld [vmem:[%s275 + $0x8] sm:$0xff]
      %v315 = vld [vmem:[%s275 + $0x10] sm:$0xff]
      %v316 = vld [vmem:[%s275 + $0x18] sm:$0xff]
      %v317 = vld [vmem:[%s275 + $0x20] sm:$0xff]
      %v318 = vld [vmem:[%s275 + $0x28] sm:$0xff]
      %v319 = vld [vmem:[%s275 + $0x30] sm:$0xff]
      %v320 = vld [vmem:[%s275 + $0x38] sm:$0xff]
      %v321 = vld [vmem:[%s275 + $0x40] sm:$0xff]
      %v322 = vld [vmem:[%s275 + $0x48] sm:$0xff]
      %v323 = vld [vmem:[%s275 + $0x50] sm:$0xff]
      %v324 = vld [vmem:[%s275 + $0x58] sm:$0xff]
      %v325 = vld [vmem:[%s275 + $0x60] sm:$0xff]
      %v326 = vld [vmem:[%s275 + $0x68] sm:$0xff]
      %v327 = vld [vmem:[%s275 + $0x70] sm:$0xff]
      %v328 = vld [vmem:[%s275 + $0x78] sm:$0xff]
      %v329 = vld [vmem:[%s275 + $0x80] sm:$0xff]
      %v330 = vld [vmem:[%s275 + $0x88] sm:$0xff]
      %v331 = vld [vmem:[%s275 + $0x90] sm:$0xff]
      %v332 = vld [vmem:[%s275 + $0x98] sm:$0xff]
      %v333 = vld [vmem:[%s275 + $0xa0] sm:$0xff]
      %v334 = vld [vmem:[%s275 + $0xa8] sm:$0xff]
      %v335 = vld [vmem:[%s275 + $0xb0] sm:$0xff]
      %v336 = vld [vmem:[%s275 + $0xb8] sm:$0xff]
      %v337 = vld [vmem:[%s275 + $0xc0] sm:$0xff]
      %v338 = vld [vmem:[%s275 + $0xc8] sm:$0xff]
      %v339 = vld [vmem:[%s275 + $0xd0] sm:$0xff]
      %v340 = vld [vmem:[%s275 + $0xd8] sm:$0xff]
      %v341 = vld [vmem:[%s275 + $0xe0] sm:$0xff]
      %v342 = vld [vmem:[%s275 + $0xe8] sm:$0xff]
      %v343 = vld [vmem:[%s275 + $0xf0] sm:$0xff]
      %v344 = vld [vmem:[%s275 + $0xf8] sm:$0xff]
      %v345 = vld [vmem:[%s2] sm:$0xff]
      %347 = vset.pattern.permute.xlu0 0
      %348 = vperm.xlu0 %347, %v345
      %v349 = vpop.permute.xlu0 %348
      %v367 = vlaneseq
      %v368 = vshrl.u32 %v367, 7
      %v369 = vsub.s32 0, %v368
      %v370 = vrot.slane %v297, %v369
      %v371 = vlaneseq
      %v372 = vshrl.u32 %v371, 7
      %v373 = vsub.s32 4, %v372
      %v374 = vrot.slane %v297, %v373
      %v375 = vlaneseq
      %v376 = vshrl.u32 %v375, 7
      %v377 = vsub.s32 0, %v376
      %v378 = vrot.slane %v298, %v377
      %v379 = vlaneseq
      %v380 = vshrl.u32 %v379, 7
      %v381 = vsub.s32 4, %v380
      %v382 = vrot.slane %v298, %v381
      %v383 = vlaneseq
      %v384 = vshrl.u32 %v383, 7
      %v385 = vsub.s32 0, %v384
      %v386 = vrot.slane %v299, %v385
      %v387 = vlaneseq
      %v388 = vshrl.u32 %v387, 7
      %v389 = vsub.s32 4, %v388
      %v390 = vrot.slane %v299, %v389
      %v391 = vlaneseq
      %v392 = vshrl.u32 %v391, 7
      %v393 = vsub.s32 0, %v392
      %v394 = vrot.slane %v300, %v393
      %v395 = vlaneseq
      %v396 = vshrl.u32 %v395, 7
      %v397 = vsub.s32 4, %v396
      %v398 = vrot.slane %v300, %v397
      %v399 = vlaneseq
      %v400 = vshrl.u32 %v399, 7
      %v401 = vsub.s32 0, %v400
      %v402 = vrot.slane %v301, %v401
      %v403 = vlaneseq
      %v404 = vshrl.u32 %v403, 7
      %v405 = vsub.s32 4, %v404
      %v406 = vrot.slane %v301, %v405
      %v407 = vlaneseq
      %v408 = vshrl.u32 %v407, 7
      %v409 = vsub.s32 0, %v408
      %v410 = vrot.slane %v302, %v409
      %v411 = vlaneseq
      %v412 = vshrl.u32 %v411, 7
      %v413 = vsub.s32 4, %v412
      %v414 = vrot.slane %v302, %v413
      %v415 = vlaneseq
      %v416 = vshrl.u32 %v415, 7
      %v417 = vsub.s32 0, %v416
      %v418 = vrot.slane %v303, %v417
      %v419 = vlaneseq
      %v420 = vshrl.u32 %v419, 7
      %v421 = vsub.s32 4, %v420
      %v422 = vrot.slane %v303, %v421
      %v423 = vlaneseq
      %v424 = vshrl.u32 %v423, 7
      %v425 = vsub.s32 0, %v424
      %v426 = vrot.slane %v304, %v425
      %v427 = vlaneseq
      %v428 = vshrl.u32 %v427, 7
      %v429 = vsub.s32 4, %v428
      %v430 = vrot.slane %v304, %v429
      %v431 = vlaneseq
      %v432 = vshrl.u32 %v431, 7
      %v433 = vsub.s32 0, %v432
      %v434 = vrot.slane %v305, %v433
      %v435 = vlaneseq
      %v436 = vshrl.u32 %v435, 7
      %v437 = vsub.s32 4, %v436
      %v438 = vrot.slane %v305, %v437
      %v439 = vlaneseq
      %v440 = vshrl.u32 %v439, 7
      %v441 = vsub.s32 0, %v440
      %v442 = vrot.slane %v306, %v441
      %v443 = vlaneseq
      %v444 = vshrl.u32 %v443, 7
      %v445 = vsub.s32 4, %v444
      %v446 = vrot.slane %v306, %v445
      %v447 = vlaneseq
      %v448 = vshrl.u32 %v447, 7
      %v449 = vsub.s32 0, %v448
      %v450 = vrot.slane %v307, %v449
      %v451 = vlaneseq
      %v452 = vshrl.u32 %v451, 7
      %v453 = vsub.s32 4, %v452
      %v454 = vrot.slane %v307, %v453
      %v455 = vlaneseq
      %v456 = vshrl.u32 %v455, 7
      %v457 = vsub.s32 0, %v456
      %v458 = vrot.slane %v308, %v457
      %v459 = vlaneseq
      %v460 = vshrl.u32 %v459, 7
      %v461 = vsub.s32 4, %v460
      %v462 = vrot.slane %v308, %v461
      %v463 = vlaneseq
      %v464 = vshrl.u32 %v463, 7
      %v465 = vsub.s32 0, %v464
      %v466 = vrot.slane %v309, %v465
      %v467 = vlaneseq
      %v468 = vshrl.u32 %v467, 7
      %v469 = vsub.s32 4, %v468
      %v470 = vrot.slane %v309, %v469
      %v471 = vlaneseq
      %v472 = vshrl.u32 %v471, 7
      %v473 = vsub.s32 0, %v472
      %v474 = vrot.slane %v310, %v473
      %v475 = vlaneseq
      %v476 = vshrl.u32 %v475, 7
      %v477 = vsub.s32 4, %v476
      %v478 = vrot.slane %v310, %v477
      %v479 = vlaneseq
      %v480 = vshrl.u32 %v479, 7
      %v481 = vsub.s32 0, %v480
      %v482 = vrot.slane %v311, %v481
      %v483 = vlaneseq
      %v484 = vshrl.u32 %v483, 7
      %v485 = vsub.s32 4, %v484
      %v486 = vrot.slane %v311, %v485
      %v487 = vlaneseq
      %v488 = vshrl.u32 %v487, 7
      %v489 = vsub.s32 0, %v488
      %v490 = vrot.slane %v312, %v489
      %v491 = vlaneseq
      %v492 = vshrl.u32 %v491, 7
      %v493 = vsub.s32 4, %v492
      %v494 = vrot.slane %v312, %v493
      %v527 = vlaneseq
      %v528 = vshrl.u32 %v527, 7
      %v529 = vsub.s32 0, %v528
      %v530 = vrot.slane %v370, %v529
      %v531 = vlaneseq
      %v532 = vshrl.u32 %v531, 7
      %v533 = vsub.s32 0, %v532
      %v534 = vrot.slane %v374, %v533
      %v535 = vlaneseq
      %v536 = vshrl.u32 %v535, 7
      %v537 = vsub.s32 0, %v536
      %v538 = vrot.slane %v378, %v537
      %v539 = vlaneseq
      %v540 = vshrl.u32 %v539, 7
      %v541 = vsub.s32 0, %v540
      %v542 = vrot.slane %v382, %v541
      %v543 = vlaneseq
      %v544 = vshrl.u32 %v543, 7
      %v545 = vsub.s32 0, %v544
      %v546 = vrot.slane %v386, %v545
      %v547 = vlaneseq
      %v548 = vshrl.u32 %v547, 7
      %v549 = vsub.s32 0, %v548
      %v550 = vrot.slane %v390, %v549
      %v551 = vlaneseq
      %v552 = vshrl.u32 %v551, 7
      %v553 = vsub.s32 0, %v552
      %v554 = vrot.slane %v394, %v553
      %v555 = vlaneseq
      %v556 = vshrl.u32 %v555, 7
      %v557 = vsub.s32 0, %v556
      %v558 = vrot.slane %v398, %v557
      %v559 = vlaneseq
      %v560 = vshrl.u32 %v559, 7
      %v561 = vsub.s32 0, %v560
      %v562 = vrot.slane %v402, %v561
      %v563 = vlaneseq
      %v564 = vshrl.u32 %v563, 7
      %v565 = vsub.s32 0, %v564
      %v566 = vrot.slane %v406, %v565
      %v567 = vlaneseq
      %v568 = vshrl.u32 %v567, 7
      %v569 = vsub.s32 0, %v568
      %v570 = vrot.slane %v410, %v569
      %v571 = vlaneseq
      %v572 = vshrl.u32 %v571, 7
      %v573 = vsub.s32 0, %v572
      %v574 = vrot.slane %v414, %v573
      %v575 = vlaneseq
      %v576 = vshrl.u32 %v575, 7
      %v577 = vsub.s32 0, %v576
      %v578 = vrot.slane %v418, %v577
      %v579 = vlaneseq
      %v580 = vshrl.u32 %v579, 7
      %v581 = vsub.s32 0, %v580
      %v582 = vrot.slane %v422, %v581
      %v583 = vlaneseq
      %v584 = vshrl.u32 %v583, 7
      %v585 = vsub.s32 0, %v584
      %v586 = vrot.slane %v426, %v585
      %v587 = vlaneseq
      %v588 = vshrl.u32 %v587, 7
      %v589 = vsub.s32 0, %v588
      %v590 = vrot.slane %v430, %v589
      %v591 = vlaneseq
      %v592 = vshrl.u32 %v591, 7
      %v593 = vsub.s32 0, %v592
      %v594 = vrot.slane %v434, %v593
      %v595 = vlaneseq
      %v596 = vshrl.u32 %v595, 7
      %v597 = vsub.s32 0, %v596
      %v598 = vrot.slane %v438, %v597
      %v599 = vlaneseq
      %v600 = vshrl.u32 %v599, 7
      %v601 = vsub.s32 0, %v600
      %v602 = vrot.slane %v442, %v601
      %v603 = vlaneseq
      %v604 = vshrl.u32 %v603, 7
      %v605 = vsub.s32 0, %v604
      %v606 = vrot.slane %v446, %v605
      %v607 = vlaneseq
      %v608 = vshrl.u32 %v607, 7
      %v609 = vsub.s32 0, %v608
      %v610 = vrot.slane %v450, %v609
      %v611 = vlaneseq
      %v612 = vshrl.u32 %v611, 7
      %v613 = vsub.s32 0, %v612
      %v614 = vrot.slane %v454, %v613
      %v615 = vlaneseq
      %v616 = vshrl.u32 %v615, 7
      %v617 = vsub.s32 0, %v616
      %v618 = vrot.slane %v458, %v617
      %v619 = vlaneseq
      %v620 = vshrl.u32 %v619, 7
      %v621 = vsub.s32 0, %v620
      %v622 = vrot.slane %v462, %v621
      %v623 = vlaneseq
      %v624 = vshrl.u32 %v623, 7
      %v625 = vsub.s32 0, %v624
      %v626 = vrot.slane %v466, %v625
      %v627 = vlaneseq
      %v628 = vshrl.u32 %v627, 7
      %v629 = vsub.s32 0, %v628
      %v630 = vrot.slane %v470, %v629
      %v631 = vlaneseq
      %v632 = vshrl.u32 %v631, 7
      %v633 = vsub.s32 0, %v632
      %v634 = vrot.slane %v474, %v633
      %v635 = vlaneseq
      %v636 = vshrl.u32 %v635, 7
      %v637 = vsub.s32 0, %v636
      %v638 = vrot.slane %v478, %v637
      %v639 = vlaneseq
      %v640 = vshrl.u32 %v639, 7
      %v641 = vsub.s32 0, %v640
      %v642 = vrot.slane %v482, %v641
      %v643 = vlaneseq
      %v644 = vshrl.u32 %v643, 7
      %v645 = vsub.s32 0, %v644
      %v646 = vrot.slane %v486, %v645
      %v647 = vlaneseq
      %v648 = vshrl.u32 %v647, 7
      %v649 = vsub.s32 0, %v648
      %v650 = vrot.slane %v490, %v649
      %v651 = vlaneseq
      %v652 = vshrl.u32 %v651, 7
      %v653 = vsub.s32 0, %v652
      %v654 = vrot.slane %v494, %v653
      %v655 = vmul.f32 %v349, %v530
      %v656 = vmul.f32 %v349, %v534
      %v657 = vmul.f32 %v349, %v538
      %v658 = vmul.f32 %v349, %v542
      %v659 = vmul.f32 %v349, %v546
      %v660 = vmul.f32 %v349, %v550
      %v661 = vmul.f32 %v349, %v554
      %v662 = vmul.f32 %v349, %v558
      %v663 = vmul.f32 %v349, %v562
      %v664 = vmul.f32 %v349, %v566
      %v665 = vmul.f32 %v349, %v570
      %v666 = vmul.f32 %v349, %v574
      %v667 = vmul.f32 %v349, %v578
      %v668 = vmul.f32 %v349, %v582
      %v669 = vmul.f32 %v349, %v586
      %v670 = vmul.f32 %v349, %v590
      %v671 = vmul.f32 %v349, %v594
      %v672 = vmul.f32 %v349, %v598
      %v673 = vmul.f32 %v349, %v602
      %v674 = vmul.f32 %v349, %v606
      %v675 = vmul.f32 %v349, %v610
      %v676 = vmul.f32 %v349, %v614
      %v677 = vmul.f32 %v349, %v618
      %v678 = vmul.f32 %v349, %v622
      %v679 = vmul.f32 %v349, %v626
      %v680 = vmul.f32 %v349, %v630
      %v681 = vmul.f32 %v349, %v634
      %v682 = vmul.f32 %v349, %v638
      %v683 = vmul.f32 %v349, %v642
      %v684 = vmul.f32 %v349, %v646
      %v685 = vmul.f32 %v349, %v650
      %v686 = vmul.f32 %v349, %v654
      %687 = vset.pattern.permute.xlu0 13
      %688 = vperm.xlu0 %687, %v345
      %v689 = vpop.permute.xlu0 %688
      %v691 = vmul.f32 %v689, %v530
      %v692 = vmul.f32 %v689, %v534
      %v693 = vmul.f32 %v689, %v538
      %v694 = vmul.f32 %v689, %v542
      %v695 = vmul.f32 %v689, %v546
      %v696 = vmul.f32 %v689, %v550
      %v697 = vmul.f32 %v689, %v554
      %v698 = vmul.f32 %v689, %v558
      %v699 = vmul.f32 %v689, %v562
      %v700 = vmul.f32 %v689, %v566
      %v701 = vmul.f32 %v689, %v570
      %v702 = vmul.f32 %v689, %v574
      %v703 = vmul.f32 %v689, %v578
      %v704 = vmul.f32 %v689, %v582
      %v705 = vmul.f32 %v689, %v586
      %v706 = vmul.f32 %v689, %v590
      %v707 = vmul.f32 %v689, %v594
      %v708 = vmul.f32 %v689, %v598
      %v709 = vmul.f32 %v689, %v602
      %v710 = vmul.f32 %v689, %v606
      %v711 = vmul.f32 %v689, %v610
      %v712 = vmul.f32 %v689, %v614
      %v713 = vmul.f32 %v689, %v618
      %v714 = vmul.f32 %v689, %v622
      %v715 = vmul.f32 %v689, %v626
      %v716 = vmul.f32 %v689, %v630
      %v717 = vmul.f32 %v689, %v634
      %v718 = vmul.f32 %v689, %v638
      %v719 = vmul.f32 %v689, %v642
      %v720 = vmul.f32 %v689, %v646
      %v721 = vmul.f32 %v689, %v650
      %v722 = vmul.f32 %v689, %v654
      %723 = vset.pattern.permute.xlu0 1
      %724 = vperm.xlu0 %723, %v345
      %v725 = vpop.permute.xlu0 %724
      %v727 = vlaneseq
      %v728 = vshrl.u32 %v727, 7
      %v729 = vsub.s32 1, %v728
      %v730 = vrot.slane %v297, %v729
      %v731 = vlaneseq
      %v732 = vshrl.u32 %v731, 7
      %v733 = vsub.s32 5, %v732
      %v734 = vrot.slane %v297, %v733
      %v735 = vlaneseq
      %v736 = vshrl.u32 %v735, 7
      %v737 = vsub.s32 1, %v736
      %v738 = vrot.slane %v298, %v737
      %v739 = vlaneseq
      %v740 = vshrl.u32 %v739, 7
      %v741 = vsub.s32 5, %v740
      %v742 = vrot.slane %v298, %v741
      %v743 = vlaneseq
      %v744 = vshrl.u32 %v743, 7
      %v745 = vsub.s32 1, %v744
      %v746 = vrot.slane %v299, %v745
      %v747 = vlaneseq
      %v748 = vshrl.u32 %v747, 7
      %v749 = vsub.s32 5, %v748
      %v750 = vrot.slane %v299, %v749
      %v751 = vlaneseq
      %v752 = vshrl.u32 %v751, 7
      %v753 = vsub.s32 1, %v752
      %v754 = vrot.slane %v300, %v753
      %v755 = vlaneseq
      %v756 = vshrl.u32 %v755, 7
      %v757 = vsub.s32 5, %v756
      %v758 = vrot.slane %v300, %v757
      %v759 = vlaneseq
      %v760 = vshrl.u32 %v759, 7
      %v761 = vsub.s32 1, %v760
      %v762 = vrot.slane %v301, %v761
      %v763 = vlaneseq
      %v764 = vshrl.u32 %v763, 7
      %v765 = vsub.s32 5, %v764
      %v766 = vrot.slane %v301, %v765
      %v767 = vlaneseq
      %v768 = vshrl.u32 %v767, 7
      %v769 = vsub.s32 1, %v768
      %v770 = vrot.slane %v302, %v769
      %v771 = vlaneseq
      %v772 = vshrl.u32 %v771, 7
      %v773 = vsub.s32 5, %v772
      %v774 = vrot.slane %v302, %v773
      %v775 = vlaneseq
      %v776 = vshrl.u32 %v775, 7
      %v777 = vsub.s32 1, %v776
      %v778 = vrot.slane %v303, %v777
      %v779 = vlaneseq
      %v780 = vshrl.u32 %v779, 7
      %v781 = vsub.s32 5, %v780
      %v782 = vrot.slane %v303, %v781
      %v783 = vlaneseq
      %v784 = vshrl.u32 %v783, 7
      %v785 = vsub.s32 1, %v784
      %v786 = vrot.slane %v304, %v785
      %v787 = vlaneseq
      %v788 = vshrl.u32 %v787, 7
      %v789 = vsub.s32 5, %v788
      %v790 = vrot.slane %v304, %v789
      %v791 = vlaneseq
      %v792 = vshrl.u32 %v791, 7
      %v793 = vsub.s32 1, %v792
      %v794 = vrot.slane %v305, %v793
      %v795 = vlaneseq
      %v796 = vshrl.u32 %v795, 7
      %v797 = vsub.s32 5, %v796
      %v798 = vrot.slane %v305, %v797
      %v799 = vlaneseq
      %v800 = vshrl.u32 %v799, 7
      %v801 = vsub.s32 1, %v800
      %v802 = vrot.slane %v306, %v801
      %v803 = vlaneseq
      %v804 = vshrl.u32 %v803, 7
      %v805 = vsub.s32 5, %v804
      %v806 = vrot.slane %v306, %v805
      %v807 = vlaneseq
      %v808 = vshrl.u32 %v807, 7
      %v809 = vsub.s32 1, %v808
      %v810 = vrot.slane %v307, %v809
      %v811 = vlaneseq
      %v812 = vshrl.u32 %v811, 7
      %v813 = vsub.s32 5, %v812
      %v814 = vrot.slane %v307, %v813
      %v815 = vlaneseq
      %v816 = vshrl.u32 %v815, 7
      %v817 = vsub.s32 1, %v816
      %v818 = vrot.slane %v308, %v817
      %v819 = vlaneseq
      %v820 = vshrl.u32 %v819, 7
      %v821 = vsub.s32 5, %v820
      %v822 = vrot.slane %v308, %v821
      %v823 = vlaneseq
      %v824 = vshrl.u32 %v823, 7
      %v825 = vsub.s32 1, %v824
      %v826 = vrot.slane %v309, %v825
      %v827 = vlaneseq
      %v828 = vshrl.u32 %v827, 7
      %v829 = vsub.s32 5, %v828
      %v830 = vrot.slane %v309, %v829
      %v831 = vlaneseq
      %v832 = vshrl.u32 %v831, 7
      %v833 = vsub.s32 1, %v832
      %v834 = vrot.slane %v310, %v833
      %v835 = vlaneseq
      %v836 = vshrl.u32 %v835, 7
      %v837 = vsub.s32 5, %v836
      %v838 = vrot.slane %v310, %v837
      %v839 = vlaneseq
      %v840 = vshrl.u32 %v839, 7
      %v841 = vsub.s32 1, %v840
      %v842 = vrot.slane %v311, %v841
      %v843 = vlaneseq
      %v844 = vshrl.u32 %v843, 7
      %v845 = vsub.s32 5, %v844
      %v846 = vrot.slane %v311, %v845
      %v847 = vlaneseq
      %v848 = vshrl.u32 %v847, 7
      %v849 = vsub.s32 1, %v848
      %v850 = vrot.slane %v312, %v849
      %v851 = vlaneseq
      %v852 = vshrl.u32 %v851, 7
      %v853 = vsub.s32 5, %v852
      %v854 = vrot.slane %v312, %v853
      %v887 = vlaneseq
      %v888 = vshrl.u32 %v887, 7
      %v889 = vsub.s32 1, %v888
      %v890 = vrot.slane %v730, %v889
      %v891 = vlaneseq
      %v892 = vshrl.u32 %v891, 7
      %v893 = vsub.s32 1, %v892
      %v894 = vrot.slane %v734, %v893
      %v895 = vlaneseq
      %v896 = vshrl.u32 %v895, 7
      %v897 = vsub.s32 1, %v896
      %v898 = vrot.slane %v738, %v897
      %v899 = vlaneseq
      %v900 = vshrl.u32 %v899, 7
      %v901 = vsub.s32 1, %v900
      %v902 = vrot.slane %v742, %v901
      %v903 = vlaneseq
      %v904 = vshrl.u32 %v903, 7
      %v905 = vsub.s32 1, %v904
      %v906 = vrot.slane %v746, %v905
      %v907 = vlaneseq
      %v908 = vshrl.u32 %v907, 7
      %v909 = vsub.s32 1, %v908
      %v910 = vrot.slane %v750, %v909
      %v911 = vlaneseq
      %v912 = vshrl.u32 %v911, 7
      %v913 = vsub.s32 1, %v912
      %v914 = vrot.slane %v754, %v913
      %v915 = vlaneseq
      %v916 = vshrl.u32 %v915, 7
      %v917 = vsub.s32 1, %v916
      %v918 = vrot.slane %v758, %v917
      %v919 = vlaneseq
      %v920 = vshrl.u32 %v919, 7
      %v921 = vsub.s32 1, %v920
      %v922 = vrot.slane %v762, %v921
      %v923 = vlaneseq
      %v924 = vshrl.u32 %v923, 7
      %v925 = vsub.s32 1, %v924
      %v926 = vrot.slane %v766, %v925
      %v927 = vlaneseq
      %v928 = vshrl.u32 %v927, 7
      %v929 = vsub.s32 1, %v928
      %v930 = vrot.slane %v770, %v929
      %v931 = vlaneseq
      %v932 = vshrl.u32 %v931, 7
      %v933 = vsub.s32 1, %v932
      %v934 = vrot.slane %v774, %v933
      %v935 = vlaneseq
      %v936 = vshrl.u32 %v935, 7
      %v937 = vsub.s32 1, %v936
      %v938 = vrot.slane %v778, %v937
      %v939 = vlaneseq
      %v940 = vshrl.u32 %v939, 7
      %v941 = vsub.s32 1, %v940
      %v942 = vrot.slane %v782, %v941
      %v943 = vlaneseq
      %v944 = vshrl.u32 %v943, 7
      %v945 = vsub.s32 1, %v944
      %v946 = vrot.slane %v786, %v945
      %v947 = vlaneseq
      %v948 = vshrl.u32 %v947, 7
      %v949 = vsub.s32 1, %v948
      %v950 = vrot.slane %v790, %v949
      %v951 = vlaneseq
      %v952 = vshrl.u32 %v951, 7
      %v953 = vsub.s32 1, %v952
      %v954 = vrot.slane %v794, %v953
      %v955 = vlaneseq
      %v956 = vshrl.u32 %v955, 7
      %v957 = vsub.s32 1, %v956
      %v958 = vrot.slane %v798, %v957
      %v959 = vlaneseq
      %v960 = vshrl.u32 %v959, 7
      %v961 = vsub.s32 1, %v960
      %v962 = vrot.slane %v802, %v961
      %v963 = vlaneseq
      %v964 = vshrl.u32 %v963, 7
      %v965 = vsub.s32 1, %v964
      %v966 = vrot.slane %v806, %v965
      %v967 = vlaneseq
      %v968 = vshrl.u32 %v967, 7
      %v969 = vsub.s32 1, %v968
      %v970 = vrot.slane %v810, %v969
      %v971 = vlaneseq
      %v972 = vshrl.u32 %v971, 7
      %v973 = vsub.s32 1, %v972
      %v974 = vrot.slane %v814, %v973
      %v975 = vlaneseq
      %v976 = vshrl.u32 %v975, 7
      %v977 = vsub.s32 1, %v976
      %v978 = vrot.slane %v818, %v977
      %v979 = vlaneseq
      %v980 = vshrl.u32 %v979, 7
      %v981 = vsub.s32 1, %v980
      %v982 = vrot.slane %v822, %v981
      %v983 = vlaneseq
      %v984 = vshrl.u32 %v983, 7
      %v985 = vsub.s32 1, %v984
      %v986 = vrot.slane %v826, %v985
      %v987 = vlaneseq
      %v988 = vshrl.u32 %v987, 7
      %v989 = vsub.s32 1, %v988
      %v990 = vrot.slane %v830, %v989
      %v991 = vlaneseq
      %v992 = vshrl.u32 %v991, 7
      %v993 = vsub.s32 1, %v992
      %v994 = vrot.slane %v834, %v993
      %v995 = vlaneseq
      %v996 = vshrl.u32 %v995, 7
      %v997 = vsub.s32 1, %v996
      %v998 = vrot.slane %v838, %v997
      %v999 = vlaneseq
      %v1000 = vshrl.u32 %v999, 7
      %v1001 = vsub.s32 1, %v1000
      %v1002 = vrot.slane %v842, %v1001
      %v1003 = vlaneseq
      %v1004 = vshrl.u32 %v1003, 7
      %v1005 = vsub.s32 1, %v1004
      %v1006 = vrot.slane %v846, %v1005
      %v1007 = vlaneseq
      %v1008 = vshrl.u32 %v1007, 7
      %v1009 = vsub.s32 1, %v1008
      %v1010 = vrot.slane %v850, %v1009
      %v1011 = vlaneseq
      %v1012 = vshrl.u32 %v1011, 7
      %v1013 = vsub.s32 1, %v1012
      %v1014 = vrot.slane %v854, %v1013
      %v1015 = vmul.f32 %v725, %v890
      %v1016 = vmul.f32 %v725, %v894
      %v1017 = vmul.f32 %v725, %v898
      %v1018 = vmul.f32 %v725, %v902
      %v1019 = vmul.f32 %v725, %v906
      %v1020 = vmul.f32 %v725, %v910
      %v1021 = vmul.f32 %v725, %v914
      %v1022 = vmul.f32 %v725, %v918
      %v1023 = vmul.f32 %v725, %v922
      %v1024 = vmul.f32 %v725, %v926
      %v1025 = vmul.f32 %v725, %v930
      %v1026 = vmul.f32 %v725, %v934
      %v1027 = vmul.f32 %v725, %v938
      %v1028 = vmul.f32 %v725, %v942
      %v1029 = vmul.f32 %v725, %v946
      %v1030 = vmul.f32 %v725, %v950
      %v1031 = vmul.f32 %v725, %v954
      %v1032 = vmul.f32 %v725, %v958
      %v1033 = vmul.f32 %v725, %v962
      %v1034 = vmul.f32 %v725, %v966
      %v1035 = vmul.f32 %v725, %v970
      %v1036 = vmul.f32 %v725, %v974
      %v1037 = vmul.f32 %v725, %v978
      %v1038 = vmul.f32 %v725, %v982
      %v1039 = vmul.f32 %v725, %v986
      %v1040 = vmul.f32 %v725, %v990
      %v1041 = vmul.f32 %v725, %v994
      %v1042 = vmul.f32 %v725, %v998
      %v1043 = vmul.f32 %v725, %v1002
      %v1044 = vmul.f32 %v725, %v1006
      %v1045 = vmul.f32 %v725, %v1010
      %v1046 = vmul.f32 %v725, %v1014
      %v1047 = vadd.f32 %v655, %v1015
      %v1048 = vadd.f32 %v656, %v1016
      %v1049 = vadd.f32 %v657, %v1017
      %v1050 = vadd.f32 %v658, %v1018
      %v1051 = vadd.f32 %v659, %v1019
      %v1052 = vadd.f32 %v660, %v1020
      %v1053 = vadd.f32 %v661, %v1021
      %v1054 = vadd.f32 %v662, %v1022
      %v1055 = vadd.f32 %v663, %v1023
      %v1056 = vadd.f32 %v664, %v1024
      %v1057 = vadd.f32 %v665, %v1025
      %v1058 = vadd.f32 %v666, %v1026
      %v1059 = vadd.f32 %v667, %v1027
      %v1060 = vadd.f32 %v668, %v1028
      %v1061 = vadd.f32 %v669, %v1029
      %v1062 = vadd.f32 %v670, %v1030
      %v1063 = vadd.f32 %v671, %v1031
      %v1064 = vadd.f32 %v672, %v1032
      %v1065 = vadd.f32 %v673, %v1033
      %v1066 = vadd.f32 %v674, %v1034
      %v1067 = vadd.f32 %v675, %v1035
      %v1068 = vadd.f32 %v676, %v1036
      %v1069 = vadd.f32 %v677, %v1037
      %v1070 = vadd.f32 %v678, %v1038
      %v1071 = vadd.f32 %v679, %v1039
      %v1072 = vadd.f32 %v680, %v1040
      %v1073 = vadd.f32 %v681, %v1041
      %v1074 = vadd.f32 %v682, %v1042
      %v1075 = vadd.f32 %v683, %v1043
      %v1076 = vadd.f32 %v684, %v1044
      %v1077 = vadd.f32 %v685, %v1045
      %v1078 = vadd.f32 %v686, %v1046
      %1079 = vset.pattern.permute.xlu0 14
      %1080 = vperm.xlu0 %1079, %v345
      %v1081 = vpop.permute.xlu0 %1080
      %v1083 = vmul.f32 %v1081, %v890
      %v1084 = vmul.f32 %v1081, %v894
      %v1085 = vmul.f32 %v1081, %v898
      %v1086 = vmul.f32 %v1081, %v902
      %v1087 = vmul.f32 %v1081, %v906
      %v1088 = vmul.f32 %v1081, %v910
      %v1089 = vmul.f32 %v1081, %v914
      %v1090 = vmul.f32 %v1081, %v918
      %v1091 = vmul.f32 %v1081, %v922
      %v1092 = vmul.f32 %v1081, %v926
      %v1093 = vmul.f32 %v1081, %v930
      %v1094 = vmul.f32 %v1081, %v934
      %v1095 = vmul.f32 %v1081, %v938
      %v1096 = vmul.f32 %v1081, %v942
      %v1097 = vmul.f32 %v1081, %v946
      %v1098 = vmul.f32 %v1081, %v950
      %v1099 = vmul.f32 %v1081, %v954
      %v1100 = vmul.f32 %v1081, %v958
      %v1101 = vmul.f32 %v1081, %v962
      %v1102 = vmul.f32 %v1081, %v966
      %v1103 = vmul.f32 %v1081, %v970
      %v1104 = vmul.f32 %v1081, %v974
      %v1105 = vmul.f32 %v1081, %v978
      %v1106 = vmul.f32 %v1081, %v982
      %v1107 = vmul.f32 %v1081, %v986
      %v1108 = vmul.f32 %v1081, %v990
      %v1109 = vmul.f32 %v1081, %v994
      %v1110 = vmul.f32 %v1081, %v998
      %v1111 = vmul.f32 %v1081, %v1002
      %v1112 = vmul.f32 %v1081, %v1006
      %v1113 = vmul.f32 %v1081, %v1010
      %v1114 = vmul.f32 %v1081, %v1014
      %v1115 = vadd.f32 %v691, %v1083
      %v1116 = vadd.f32 %v692, %v1084
      %v1117 = vadd.f32 %v693, %v1085
      %v1118 = vadd.f32 %v694, %v1086
      %v1119 = vadd.f32 %v695, %v1087
      %v1120 = vadd.f32 %v696, %v1088
      %v1121 = vadd.f32 %v697, %v1089
      %v1122 = vadd.f32 %v698, %v1090
      %v1123 = vadd.f32 %v699, %v1091
      %v1124 = vadd.f32 %v700, %v1092
      %v1125 = vadd.f32 %v701, %v1093
      %v1126 = vadd.f32 %v702, %v1094
      %v1127 = vadd.f32 %v703, %v1095
      %v1128 = vadd.f32 %v704, %v1096
      %v1129 = vadd.f32 %v705, %v1097
      %v1130 = vadd.f32 %v706, %v1098
      %v1131 = vadd.f32 %v707, %v1099
      %v1132 = vadd.f32 %v708, %v1100
      %v1133 = vadd.f32 %v709, %v1101
      %v1134 = vadd.f32 %v710, %v1102
      %v1135 = vadd.f32 %v711, %v1103
      %v1136 = vadd.f32 %v712, %v1104
      %v1137 = vadd.f32 %v713, %v1105
      %v1138 = vadd.f32 %v714, %v1106
      %v1139 = vadd.f32 %v715, %v1107
      %v1140 = vadd.f32 %v716, %v1108
      %v1141 = vadd.f32 %v717, %v1109
      %v1142 = vadd.f32 %v718, %v1110
      %v1143 = vadd.f32 %v719, %v1111
      %v1144 = vadd.f32 %v720, %v1112
      %v1145 = vadd.f32 %v721, %v1113
      %v1146 = vadd.f32 %v722, %v1114
      %1147 = vset.pattern.permute.xlu0 2
      %1148 = vperm.xlu0 %1147, %v345
      %v1149 = vpop.permute.xlu0 %1148
      %v1151 = vlaneseq
      %v1152 = vshrl.u32 %v1151, 7
      %v1153 = vsub.s32 2, %v1152
      %v1154 = vrot.slane %v297, %v1153
      %v1155 = vlaneseq
      %v1156 = vshrl.u32 %v1155, 7
      %v1157 = vsub.s32 6, %v1156
      %v1158 = vrot.slane %v297, %v1157
      %v1159 = vlaneseq
      %v1160 = vshrl.u32 %v1159, 7
      %v1161 = vsub.s32 2, %v1160
      %v1162 = vrot.slane %v298, %v1161
      %v1163 = vlaneseq
      %v1164 = vshrl.u32 %v1163, 7
      %v1165 = vsub.s32 6, %v1164
      %v1166 = vrot.slane %v298, %v1165
      %v1167 = vlaneseq
      %v1168 = vshrl.u32 %v1167, 7
      %v1169 = vsub.s32 2, %v1168
      %v1170 = vrot.slane %v299, %v1169
      %v1171 = vlaneseq
      %v1172 = vshrl.u32 %v1171, 7
      %v1173 = vsub.s32 6, %v1172
      %v1174 = vrot.slane %v299, %v1173
      %v1175 = vlaneseq
      %v1176 = vshrl.u32 %v1175, 7
      %v1177 = vsub.s32 2, %v1176
      %v1178 = vrot.slane %v300, %v1177
      %v1179 = vlaneseq
      %v1180 = vshrl.u32 %v1179, 7
      %v1181 = vsub.s32 6, %v1180
      %v1182 = vrot.slane %v300, %v1181
      %v1183 = vlaneseq
      %v1184 = vshrl.u32 %v1183, 7
      %v1185 = vsub.s32 2, %v1184
      %v1186 = vrot.slane %v301, %v1185
      %v1187 = vlaneseq
      %v1188 = vshrl.u32 %v1187, 7
      %v1189 = vsub.s32 6, %v1188
      %v1190 = vrot.slane %v301, %v1189
      %v1191 = vlaneseq
      %v1192 = vshrl.u32 %v1191, 7
      %v1193 = vsub.s32 2, %v1192
      %v1194 = vrot.slane %v302, %v1193
      %v1195 = vlaneseq
      %v1196 = vshrl.u32 %v1195, 7
      %v1197 = vsub.s32 6, %v1196
      %v1198 = vrot.slane %v302, %v1197
      %v1199 = vlaneseq
      %v1200 = vshrl.u32 %v1199, 7
      %v1201 = vsub.s32 2, %v1200
      %v1202 = vrot.slane %v303, %v1201
      %v1203 = vlaneseq
      %v1204 = vshrl.u32 %v1203, 7
      %v1205 = vsub.s32 6, %v1204
      %v1206 = vrot.slane %v303, %v1205
      %v1207 = vlaneseq
      %v1208 = vshrl.u32 %v1207, 7
      %v1209 = vsub.s32 2, %v1208
      %v1210 = vrot.slane %v304, %v1209
      %v1211 = vlaneseq
      %v1212 = vshrl.u32 %v1211, 7
      %v1213 = vsub.s32 6, %v1212
      %v1214 = vrot.slane %v304, %v1213
      %v1215 = vlaneseq
      %v1216 = vshrl.u32 %v1215, 7
      %v1217 = vsub.s32 2, %v1216
      %v1218 = vrot.slane %v305, %v1217
      %v1219 = vlaneseq
      %v1220 = vshrl.u32 %v1219, 7
      %v1221 = vsub.s32 6, %v1220
      %v1222 = vrot.slane %v305, %v1221
      %v1223 = vlaneseq
      %v1224 = vshrl.u32 %v1223, 7
      %v1225 = vsub.s32 2, %v1224
      %v1226 = vrot.slane %v306, %v1225
      %v1227 = vlaneseq
      %v1228 = vshrl.u32 %v1227, 7
      %v1229 = vsub.s32 6, %v1228
      %v1230 = vrot.slane %v306, %v1229
      %v1231 = vlaneseq
      %v1232 = vshrl.u32 %v1231, 7
      %v1233 = vsub.s32 2, %v1232
      %v1234 = vrot.slane %v307, %v1233
      %v1235 = vlaneseq
      %v1236 = vshrl.u32 %v1235, 7
      %v1237 = vsub.s32 6, %v1236
      %v1238 = vrot.slane %v307, %v1237
      %v1239 = vlaneseq
      %v1240 = vshrl.u32 %v1239, 7
      %v1241 = vsub.s32 2, %v1240
      %v1242 = vrot.slane %v308, %v1241
      %v1243 = vlaneseq
      %v1244 = vshrl.u32 %v1243, 7
      %v1245 = vsub.s32 6, %v1244
      %v1246 = vrot.slane %v308, %v1245
      %v1247 = vlaneseq
      %v1248 = vshrl.u32 %v1247, 7
      %v1249 = vsub.s32 2, %v1248
      %v1250 = vrot.slane %v309, %v1249
      %v1251 = vlaneseq
      %v1252 = vshrl.u32 %v1251, 7
      %v1253 = vsub.s32 6, %v1252
      %v1254 = vrot.slane %v309, %v1253
      %v1255 = vlaneseq
      %v1256 = vshrl.u32 %v1255, 7
      %v1257 = vsub.s32 2, %v1256
      %v1258 = vrot.slane %v310, %v1257
      %v1259 = vlaneseq
      %v1260 = vshrl.u32 %v1259, 7
      %v1261 = vsub.s32 6, %v1260
      %v1262 = vrot.slane %v310, %v1261
      %v1263 = vlaneseq
      %v1264 = vshrl.u32 %v1263, 7
      %v1265 = vsub.s32 2, %v1264
      %v1266 = vrot.slane %v311, %v1265
      %v1267 = vlaneseq
      %v1268 = vshrl.u32 %v1267, 7
      %v1269 = vsub.s32 6, %v1268
      %v1270 = vrot.slane %v311, %v1269
      %v1271 = vlaneseq
      %v1272 = vshrl.u32 %v1271, 7
      %v1273 = vsub.s32 2, %v1272
      %v1274 = vrot.slane %v312, %v1273
      %v1275 = vlaneseq
      %v1276 = vshrl.u32 %v1275, 7
      %v1277 = vsub.s32 6, %v1276
      %v1278 = vrot.slane %v312, %v1277
      %v1311 = vlaneseq
      %v1312 = vshrl.u32 %v1311, 7
      %v1313 = vsub.s32 2, %v1312
      %v1314 = vrot.slane %v1154, %v1313
      %v1315 = vlaneseq
      %v1316 = vshrl.u32 %v1315, 7
      %v1317 = vsub.s32 2, %v1316
      %v1318 = vrot.slane %v1158, %v1317
      %v1319 = vlaneseq
      %v1320 = vshrl.u32 %v1319, 7
      %v1321 = vsub.s32 2, %v1320
      %v1322 = vrot.slane %v1162, %v1321
      %v1323 = vlaneseq
      %v1324 = vshrl.u32 %v1323, 7
      %v1325 = vsub.s32 2, %v1324
      %v1326 = vrot.slane %v1166, %v1325
      %v1327 = vlaneseq
      %v1328 = vshrl.u32 %v1327, 7
      %v1329 = vsub.s32 2, %v1328
      %v1330 = vrot.slane %v1170, %v1329
      %v1331 = vlaneseq
      %v1332 = vshrl.u32 %v1331, 7
      %v1333 = vsub.s32 2, %v1332
      %v1334 = vrot.slane %v1174, %v1333
      %v1335 = vlaneseq
      %v1336 = vshrl.u32 %v1335, 7
      %v1337 = vsub.s32 2, %v1336
      %v1338 = vrot.slane %v1178, %v1337
      %v1339 = vlaneseq
      %v1340 = vshrl.u32 %v1339, 7
      %v1341 = vsub.s32 2, %v1340
      %v1342 = vrot.slane %v1182, %v1341
      %v1343 = vlaneseq
      %v1344 = vshrl.u32 %v1343, 7
      %v1345 = vsub.s32 2, %v1344
      %v1346 = vrot.slane %v1186, %v1345
      %v1347 = vlaneseq
      %v1348 = vshrl.u32 %v1347, 7
      %v1349 = vsub.s32 2, %v1348
      %v1350 = vrot.slane %v1190, %v1349
      %v1351 = vlaneseq
      %v1352 = vshrl.u32 %v1351, 7
      %v1353 = vsub.s32 2, %v1352
      %v1354 = vrot.slane %v1194, %v1353
      %v1355 = vlaneseq
      %v1356 = vshrl.u32 %v1355, 7
      %v1357 = vsub.s32 2, %v1356
      %v1358 = vrot.slane %v1198, %v1357
      %v1359 = vlaneseq
      %v1360 = vshrl.u32 %v1359, 7
      %v1361 = vsub.s32 2, %v1360
      %v1362 = vrot.slane %v1202, %v1361
      %v1363 = vlaneseq
      %v1364 = vshrl.u32 %v1363, 7
      %v1365 = vsub.s32 2, %v1364
      %v1366 = vrot.slane %v1206, %v1365
      %v1367 = vlaneseq
      %v1368 = vshrl.u32 %v1367, 7
      %v1369 = vsub.s32 2, %v1368
      %v1370 = vrot.slane %v1210, %v1369
      %v1371 = vlaneseq
      %v1372 = vshrl.u32 %v1371, 7
      %v1373 = vsub.s32 2, %v1372
      %v1374 = vrot.slane %v1214, %v1373
      %v1375 = vlaneseq
      %v1376 = vshrl.u32 %v1375, 7
      %v1377 = vsub.s32 2, %v1376
      %v1378 = vrot.slane %v1218, %v1377
      %v1379 = vlaneseq
      %v1380 = vshrl.u32 %v1379, 7
      %v1381 = vsub.s32 2, %v1380
      %v1382 = vrot.slane %v1222, %v1381
      %v1383 = vlaneseq
      %v1384 = vshrl.u32 %v1383, 7
      %v1385 = vsub.s32 2, %v1384
      %v1386 = vrot.slane %v1226, %v1385
      %v1387 = vlaneseq
      %v1388 = vshrl.u32 %v1387, 7
      %v1389 = vsub.s32 2, %v1388
      %v1390 = vrot.slane %v1230, %v1389
      %v1391 = vlaneseq
      %v1392 = vshrl.u32 %v1391, 7
      %v1393 = vsub.s32 2, %v1392
      %v1394 = vrot.slane %v1234, %v1393
      %v1395 = vlaneseq
      %v1396 = vshrl.u32 %v1395, 7
      %v1397 = vsub.s32 2, %v1396
      %v1398 = vrot.slane %v1238, %v1397
      %v1399 = vlaneseq
      %v1400 = vshrl.u32 %v1399, 7
      %v1401 = vsub.s32 2, %v1400
      %v1402 = vrot.slane %v1242, %v1401
      %v1403 = vlaneseq
      %v1404 = vshrl.u32 %v1403, 7
      %v1405 = vsub.s32 2, %v1404
      %v1406 = vrot.slane %v1246, %v1405
      %v1407 = vlaneseq
      %v1408 = vshrl.u32 %v1407, 7
      %v1409 = vsub.s32 2, %v1408
      %v1410 = vrot.slane %v1250, %v1409
      %v1411 = vlaneseq
      %v1412 = vshrl.u32 %v1411, 7
      %v1413 = vsub.s32 2, %v1412
      %v1414 = vrot.slane %v1254, %v1413
      %v1415 = vlaneseq
      %v1416 = vshrl.u32 %v1415, 7
      %v1417 = vsub.s32 2, %v1416
      %v1418 = vrot.slane %v1258, %v1417
      %v1419 = vlaneseq
      %v1420 = vshrl.u32 %v1419, 7
      %v1421 = vsub.s32 2, %v1420
      %v1422 = vrot.slane %v1262, %v1421
      %v1423 = vlaneseq
      %v1424 = vshrl.u32 %v1423, 7
      %v1425 = vsub.s32 2, %v1424
      %v1426 = vrot.slane %v1266, %v1425
      %v1427 = vlaneseq
      %v1428 = vshrl.u32 %v1427, 7
      %v1429 = vsub.s32 2, %v1428
      %v1430 = vrot.slane %v1270, %v1429
      %v1431 = vlaneseq
      %v1432 = vshrl.u32 %v1431, 7
      %v1433 = vsub.s32 2, %v1432
      %v1434 = vrot.slane %v1274, %v1433
      %v1435 = vlaneseq
      %v1436 = vshrl.u32 %v1435, 7
      %v1437 = vsub.s32 2, %v1436
      %v1438 = vrot.slane %v1278, %v1437
      %v1439 = vmul.f32 %v1149, %v1314
      %v1440 = vmul.f32 %v1149, %v1318
      %v1441 = vmul.f32 %v1149, %v1322
      %v1442 = vmul.f32 %v1149, %v1326
      %v1443 = vmul.f32 %v1149, %v1330
      %v1444 = vmul.f32 %v1149, %v1334
      %v1445 = vmul.f32 %v1149, %v1338
      %v1446 = vmul.f32 %v1149, %v1342
      %v1447 = vmul.f32 %v1149, %v1346
      %v1448 = vmul.f32 %v1149, %v1350
      %v1449 = vmul.f32 %v1149, %v1354
      %v1450 = vmul.f32 %v1149, %v1358
      %v1451 = vmul.f32 %v1149, %v1362
      %v1452 = vmul.f32 %v1149, %v1366
      %v1453 = vmul.f32 %v1149, %v1370
      %v1454 = vmul.f32 %v1149, %v1374
      %v1455 = vmul.f32 %v1149, %v1378
      %v1456 = vmul.f32 %v1149, %v1382
      %v1457 = vmul.f32 %v1149, %v1386
      %v1458 = vmul.f32 %v1149, %v1390
      %v1459 = vmul.f32 %v1149, %v1394
      %v1460 = vmul.f32 %v1149, %v1398
      %v1461 = vmul.f32 %v1149, %v1402
      %v1462 = vmul.f32 %v1149, %v1406
      %v1463 = vmul.f32 %v1149, %v1410
      %v1464 = vmul.f32 %v1149, %v1414
      %v1465 = vmul.f32 %v1149, %v1418
      %v1466 = vmul.f32 %v1149, %v1422
      %v1467 = vmul.f32 %v1149, %v1426
      %v1468 = vmul.f32 %v1149, %v1430
      %v1469 = vmul.f32 %v1149, %v1434
      %v1470 = vmul.f32 %v1149, %v1438
      %v1471 = vadd.f32 %v1047, %v1439
      %v1472 = vadd.f32 %v1048, %v1440
      %v1473 = vadd.f32 %v1049, %v1441
      %v1474 = vadd.f32 %v1050, %v1442
      %v1475 = vadd.f32 %v1051, %v1443
      %v1476 = vadd.f32 %v1052, %v1444
      %v1477 = vadd.f32 %v1053, %v1445
      %v1478 = vadd.f32 %v1054, %v1446
      %v1479 = vadd.f32 %v1055, %v1447
      %v1480 = vadd.f32 %v1056, %v1448
      %v1481 = vadd.f32 %v1057, %v1449
      %v1482 = vadd.f32 %v1058, %v1450
      %v1483 = vadd.f32 %v1059, %v1451
      %v1484 = vadd.f32 %v1060, %v1452
      %v1485 = vadd.f32 %v1061, %v1453
      %v1486 = vadd.f32 %v1062, %v1454
      %v1487 = vadd.f32 %v1063, %v1455
      %v1488 = vadd.f32 %v1064, %v1456
      %v1489 = vadd.f32 %v1065, %v1457
      %v1490 = vadd.f32 %v1066, %v1458
      %v1491 = vadd.f32 %v1067, %v1459
      %v1492 = vadd.f32 %v1068, %v1460
      %v1493 = vadd.f32 %v1069, %v1461
      %v1494 = vadd.f32 %v1070, %v1462
      %v1495 = vadd.f32 %v1071, %v1463
      %v1496 = vadd.f32 %v1072, %v1464
      %v1497 = vadd.f32 %v1073, %v1465
      %v1498 = vadd.f32 %v1074, %v1466
      %v1499 = vadd.f32 %v1075, %v1467
      %v1500 = vadd.f32 %v1076, %v1468
      %v1501 = vadd.f32 %v1077, %v1469
      %v1502 = vadd.f32 %v1078, %v1470
      %1503 = vset.pattern.permute.xlu0 15
      %1504 = vperm.xlu0 %1503, %v345
      %v1505 = vpop.permute.xlu0 %1504
      %v1507 = vmul.f32 %v1505, %v1314
      %v1508 = vmul.f32 %v1505, %v1318
      %v1509 = vmul.f32 %v1505, %v1322
      %v1510 = vmul.f32 %v1505, %v1326
      %v1511 = vmul.f32 %v1505, %v1330
      %v1512 = vmul.f32 %v1505, %v1334
      %v1513 = vmul.f32 %v1505, %v1338
      %v1514 = vmul.f32 %v1505, %v1342
      %v1515 = vmul.f32 %v1505, %v1346
      %v1516 = vmul.f32 %v1505, %v1350
      %v1517 = vmul.f32 %v1505, %v1354
      %v1518 = vmul.f32 %v1505, %v1358
      %v1519 = vmul.f32 %v1505, %v1362
      %v1520 = vmul.f32 %v1505, %v1366
      %v1521 = vmul.f32 %v1505, %v1370
      %v1522 = vmul.f32 %v1505, %v1374
      %v1523 = vmul.f32 %v1505, %v1378
      %v1524 = vmul.f32 %v1505, %v1382
      %v1525 = vmul.f32 %v1505, %v1386
      %v1526 = vmul.f32 %v1505, %v1390
      %v1527 = vmul.f32 %v1505, %v1394
      %v1528 = vmul.f32 %v1505, %v1398
      %v1529 = vmul.f32 %v1505, %v1402
      %v1530 = vmul.f32 %v1505, %v1406
      %v1531 = vmul.f32 %v1505, %v1410
      %v1532 = vmul.f32 %v1505, %v1414
      %v1533 = vmul.f32 %v1505, %v1418
      %v1534 = vmul.f32 %v1505, %v1422
      %v1535 = vmul.f32 %v1505, %v1426
      %v1536 = vmul.f32 %v1505, %v1430
      %v1537 = vmul.f32 %v1505, %v1434
      %v1538 = vmul.f32 %v1505, %v1438
      %v1539 = vadd.f32 %v1115, %v1507
      %v1540 = vadd.f32 %v1116, %v1508
      %v1541 = vadd.f32 %v1117, %v1509
      %v1542 = vadd.f32 %v1118, %v1510
      %v1543 = vadd.f32 %v1119, %v1511
      %v1544 = vadd.f32 %v1120, %v1512
      %v1545 = vadd.f32 %v1121, %v1513
      %v1546 = vadd.f32 %v1122, %v1514
      %v1547 = vadd.f32 %v1123, %v1515
      %v1548 = vadd.f32 %v1124, %v1516
      %v1549 = vadd.f32 %v1125, %v1517
      %v1550 = vadd.f32 %v1126, %v1518
      %v1551 = vadd.f32 %v1127, %v1519
      %v1552 = vadd.f32 %v1128, %v1520
      %v1553 = vadd.f32 %v1129, %v1521
      %v1554 = vadd.f32 %v1130, %v1522
      %v1555 = vadd.f32 %v1131, %v1523
      %v1556 = vadd.f32 %v1132, %v1524
      %v1557 = vadd.f32 %v1133, %v1525
      %v1558 = vadd.f32 %v1134, %v1526
      %v1559 = vadd.f32 %v1135, %v1527
      %v1560 = vadd.f32 %v1136, %v1528
      %v1561 = vadd.f32 %v1137, %v1529
      %v1562 = vadd.f32 %v1138, %v1530
      %v1563 = vadd.f32 %v1139, %v1531
      %v1564 = vadd.f32 %v1140, %v1532
      %v1565 = vadd.f32 %v1141, %v1533
      %v1566 = vadd.f32 %v1142, %v1534
      %v1567 = vadd.f32 %v1143, %v1535
      %v1568 = vadd.f32 %v1144, %v1536
      %v1569 = vadd.f32 %v1145, %v1537
      %v1570 = vadd.f32 %v1146, %v1538
      %1571 = vset.pattern.permute.xlu0 3
      %1572 = vperm.xlu0 %1571, %v345
      %v1573 = vpop.permute.xlu0 %1572
      %v1575 = vlaneseq
      %v1576 = vshrl.u32 %v1575, 7
      %v1577 = vsub.s32 3, %v1576
      %v1578 = vrot.slane %v297, %v1577
      %v1579 = vlaneseq
      %v1580 = vshrl.u32 %v1579, 7
      %v1581 = vsub.s32 7, %v1580
      %v1582 = vrot.slane %v297, %v1581
      %v1583 = vlaneseq
      %v1584 = vshrl.u32 %v1583, 7
      %v1585 = vsub.s32 3, %v1584
      %v1586 = vrot.slane %v298, %v1585
      %v1587 = vlaneseq
      %v1588 = vshrl.u32 %v1587, 7
      %v1589 = vsub.s32 7, %v1588
      %v1590 = vrot.slane %v298, %v1589
      %v1591 = vlaneseq
      %v1592 = vshrl.u32 %v1591, 7
      %v1593 = vsub.s32 3, %v1592
      %v1594 = vrot.slane %v299, %v1593
      %v1595 = vlaneseq
      %v1596 = vshrl.u32 %v1595, 7
      %v1597 = vsub.s32 7, %v1596
      %v1598 = vrot.slane %v299, %v1597
      %v1599 = vlaneseq
      %v1600 = vshrl.u32 %v1599, 7
      %v1601 = vsub.s32 3, %v1600
      %v1602 = vrot.slane %v300, %v1601
      %v1603 = vlaneseq
      %v1604 = vshrl.u32 %v1603, 7
      %v1605 = vsub.s32 7, %v1604
      %v1606 = vrot.slane %v300, %v1605
      %v1607 = vlaneseq
      %v1608 = vshrl.u32 %v1607, 7
      %v1609 = vsub.s32 3, %v1608
      %v1610 = vrot.slane %v301, %v1609
      %v1611 = vlaneseq
      %v1612 = vshrl.u32 %v1611, 7
      %v1613 = vsub.s32 7, %v1612
      %v1614 = vrot.slane %v301, %v1613
      %v1615 = vlaneseq
      %v1616 = vshrl.u32 %v1615, 7
      %v1617 = vsub.s32 3, %v1616
      %v1618 = vrot.slane %v302, %v1617
      %v1619 = vlaneseq
      %v1620 = vshrl.u32 %v1619, 7
      %v1621 = vsub.s32 7, %v1620
      %v1622 = vrot.slane %v302, %v1621
      %v1623 = vlaneseq
      %v1624 = vshrl.u32 %v1623, 7
      %v1625 = vsub.s32 3, %v1624
      %v1626 = vrot.slane %v303, %v1625
      %v1627 = vlaneseq
      %v1628 = vshrl.u32 %v1627, 7
      %v1629 = vsub.s32 7, %v1628
      %v1630 = vrot.slane %v303, %v1629
      %v1631 = vlaneseq
      %v1632 = vshrl.u32 %v1631, 7
      %v1633 = vsub.s32 3, %v1632
      %v1634 = vrot.slane %v304, %v1633
      %v1635 = vlaneseq
      %v1636 = vshrl.u32 %v1635, 7
      %v1637 = vsub.s32 7, %v1636
      %v1638 = vrot.slane %v304, %v1637
      %v1639 = vlaneseq
      %v1640 = vshrl.u32 %v1639, 7
      %v1641 = vsub.s32 3, %v1640
      %v1642 = vrot.slane %v305, %v1641
      %v1643 = vlaneseq
      %v1644 = vshrl.u32 %v1643, 7
      %v1645 = vsub.s32 7, %v1644
      %v1646 = vrot.slane %v305, %v1645
      %v1647 = vlaneseq
      %v1648 = vshrl.u32 %v1647, 7
      %v1649 = vsub.s32 3, %v1648
      %v1650 = vrot.slane %v306, %v1649
      %v1651 = vlaneseq
      %v1652 = vshrl.u32 %v1651, 7
      %v1653 = vsub.s32 7, %v1652
      %v1654 = vrot.slane %v306, %v1653
      %v1655 = vlaneseq
      %v1656 = vshrl.u32 %v1655, 7
      %v1657 = vsub.s32 3, %v1656
      %v1658 = vrot.slane %v307, %v1657
      %v1659 = vlaneseq
      %v1660 = vshrl.u32 %v1659, 7
      %v1661 = vsub.s32 7, %v1660
      %v1662 = vrot.slane %v307, %v1661
      %v1663 = vlaneseq
      %v1664 = vshrl.u32 %v1663, 7
      %v1665 = vsub.s32 3, %v1664
      %v1666 = vrot.slane %v308, %v1665
      %v1667 = vlaneseq
      %v1668 = vshrl.u32 %v1667, 7
      %v1669 = vsub.s32 7, %v1668
      %v1670 = vrot.slane %v308, %v1669
      %v1671 = vlaneseq
      %v1672 = vshrl.u32 %v1671, 7
      %v1673 = vsub.s32 3, %v1672
      %v1674 = vrot.slane %v309, %v1673
      %v1675 = vlaneseq
      %v1676 = vshrl.u32 %v1675, 7
      %v1677 = vsub.s32 7, %v1676
      %v1678 = vrot.slane %v309, %v1677
      %v1679 = vlaneseq
      %v1680 = vshrl.u32 %v1679, 7
      %v1681 = vsub.s32 3, %v1680
      %v1682 = vrot.slane %v310, %v1681
      %v1683 = vlaneseq
      %v1684 = vshrl.u32 %v1683, 7
      %v1685 = vsub.s32 7, %v1684
      %v1686 = vrot.slane %v310, %v1685
      %v1687 = vlaneseq
      %v1688 = vshrl.u32 %v1687, 7
      %v1689 = vsub.s32 3, %v1688
      %v1690 = vrot.slane %v311, %v1689
      %v1691 = vlaneseq
      %v1692 = vshrl.u32 %v1691, 7
      %v1693 = vsub.s32 7, %v1692
      %v1694 = vrot.slane %v311, %v1693
      %v1695 = vlaneseq
      %v1696 = vshrl.u32 %v1695, 7
      %v1697 = vsub.s32 3, %v1696
      %v1698 = vrot.slane %v312, %v1697
      %v1699 = vlaneseq
      %v1700 = vshrl.u32 %v1699, 7
      %v1701 = vsub.s32 7, %v1700
      %v1702 = vrot.slane %v312, %v1701
      %v1735 = vlaneseq
      %v1736 = vshrl.u32 %v1735, 7
      %v1737 = vsub.s32 3, %v1736
      %v1738 = vrot.slane %v1578, %v1737
      %v1739 = vlaneseq
      %v1740 = vshrl.u32 %v1739, 7
      %v1741 = vsub.s32 3, %v1740
      %v1742 = vrot.slane %v1582, %v1741
      %v1743 = vlaneseq
      %v1744 = vshrl.u32 %v1743, 7
      %v1745 = vsub.s32 3, %v1744
      %v1746 = vrot.slane %v1586, %v1745
      %v1747 = vlaneseq
      %v1748 = vshrl.u32 %v1747, 7
      %v1749 = vsub.s32 3, %v1748
      %v1750 = vrot.slane %v1590, %v1749
      %v1751 = vlaneseq
      %v1752 = vshrl.u32 %v1751, 7
      %v1753 = vsub.s32 3, %v1752
      %v1754 = vrot.slane %v1594, %v1753
      %v1755 = vlaneseq
      %v1756 = vshrl.u32 %v1755, 7
      %v1757 = vsub.s32 3, %v1756
      %v1758 = vrot.slane %v1598, %v1757
      %v1759 = vlaneseq
      %v1760 = vshrl.u32 %v1759, 7
      %v1761 = vsub.s32 3, %v1760
      %v1762 = vrot.slane %v1602, %v1761
      %v1763 = vlaneseq
      %v1764 = vshrl.u32 %v1763, 7
      %v1765 = vsub.s32 3, %v1764
      %v1766 = vrot.slane %v1606, %v1765
      %v1767 = vlaneseq
      %v1768 = vshrl.u32 %v1767, 7
      %v1769 = vsub.s32 3, %v1768
      %v1770 = vrot.slane %v1610, %v1769
      %v1771 = vlaneseq
      %v1772 = vshrl.u32 %v1771, 7
      %v1773 = vsub.s32 3, %v1772
      %v1774 = vrot.slane %v1614, %v1773
      %v1775 = vlaneseq
      %v1776 = vshrl.u32 %v1775, 7
      %v1777 = vsub.s32 3, %v1776
      %v1778 = vrot.slane %v1618, %v1777
      %v1779 = vlaneseq
      %v1780 = vshrl.u32 %v1779, 7
      %v1781 = vsub.s32 3, %v1780
      %v1782 = vrot.slane %v1622, %v1781
      %v1783 = vlaneseq
      %v1784 = vshrl.u32 %v1783, 7
      %v1785 = vsub.s32 3, %v1784
      %v1786 = vrot.slane %v1626, %v1785
      %v1787 = vlaneseq
      %v1788 = vshrl.u32 %v1787, 7
      %v1789 = vsub.s32 3, %v1788
      %v1790 = vrot.slane %v1630, %v1789
      %v1791 = vlaneseq
      %v1792 = vshrl.u32 %v1791, 7
      %v1793 = vsub.s32 3, %v1792
      %v1794 = vrot.slane %v1634, %v1793
      %v1795 = vlaneseq
      %v1796 = vshrl.u32 %v1795, 7
      %v1797 = vsub.s32 3, %v1796
      %v1798 = vrot.slane %v1638, %v1797
      %v1799 = vlaneseq
      %v1800 = vshrl.u32 %v1799, 7
      %v1801 = vsub.s32 3, %v1800
      %v1802 = vrot.slane %v1642, %v1801
      %v1803 = vlaneseq
      %v1804 = vshrl.u32 %v1803, 7
      %v1805 = vsub.s32 3, %v1804
      %v1806 = vrot.slane %v1646, %v1805
      %v1807 = vlaneseq
      %v1808 = vshrl.u32 %v1807, 7
      %v1809 = vsub.s32 3, %v1808
      %v1810 = vrot.slane %v1650, %v1809
      %v1811 = vlaneseq
      %v1812 = vshrl.u32 %v1811, 7
      %v1813 = vsub.s32 3, %v1812
      %v1814 = vrot.slane %v1654, %v1813
      %v1815 = vlaneseq
      %v1816 = vshrl.u32 %v1815, 7
      %v1817 = vsub.s32 3, %v1816
      %v1818 = vrot.slane %v1658, %v1817
      %v1819 = vlaneseq
      %v1820 = vshrl.u32 %v1819, 7
      %v1821 = vsub.s32 3, %v1820
      %v1822 = vrot.slane %v1662, %v1821
      %v1823 = vlaneseq
      %v1824 = vshrl.u32 %v1823, 7
      %v1825 = vsub.s32 3, %v1824
      %v1826 = vrot.slane %v1666, %v1825
      %v1827 = vlaneseq
      %v1828 = vshrl.u32 %v1827, 7
      %v1829 = vsub.s32 3, %v1828
      %v1830 = vrot.slane %v1670, %v1829
      %v1831 = vlaneseq
      %v1832 = vshrl.u32 %v1831, 7
      %v1833 = vsub.s32 3, %v1832
      %v1834 = vrot.slane %v1674, %v1833
      %v1835 = vlaneseq
      %v1836 = vshrl.u32 %v1835, 7
      %v1837 = vsub.s32 3, %v1836
      %v1838 = vrot.slane %v1678, %v1837
      %v1839 = vlaneseq
      %v1840 = vshrl.u32 %v1839, 7
      %v1841 = vsub.s32 3, %v1840
      %v1842 = vrot.slane %v1682, %v1841
      %v1843 = vlaneseq
      %v1844 = vshrl.u32 %v1843, 7
      %v1845 = vsub.s32 3, %v1844
      %v1846 = vrot.slane %v1686, %v1845
      %v1847 = vlaneseq
      %v1848 = vshrl.u32 %v1847, 7
      %v1849 = vsub.s32 3, %v1848
      %v1850 = vrot.slane %v1690, %v1849
      %v1851 = vlaneseq
      %v1852 = vshrl.u32 %v1851, 7
      %v1853 = vsub.s32 3, %v1852
      %v1854 = vrot.slane %v1694, %v1853
      %v1855 = vlaneseq
      %v1856 = vshrl.u32 %v1855, 7
      %v1857 = vsub.s32 3, %v1856
      %v1858 = vrot.slane %v1698, %v1857
      %v1859 = vlaneseq
      %v1860 = vshrl.u32 %v1859, 7
      %v1861 = vsub.s32 3, %v1860
      %v1862 = vrot.slane %v1702, %v1861
      %v1863 = vmul.f32 %v1573, %v1738
      %v1864 = vmul.f32 %v1573, %v1742
      %v1865 = vmul.f32 %v1573, %v1746
      %v1866 = vmul.f32 %v1573, %v1750
      %v1867 = vmul.f32 %v1573, %v1754
      %v1868 = vmul.f32 %v1573, %v1758
      %v1869 = vmul.f32 %v1573, %v1762
      %v1870 = vmul.f32 %v1573, %v1766
      %v1871 = vmul.f32 %v1573, %v1770
      %v1872 = vmul.f32 %v1573, %v1774
      %v1873 = vmul.f32 %v1573, %v1778
      %v1874 = vmul.f32 %v1573, %v1782
      %v1875 = vmul.f32 %v1573, %v1786
      %v1876 = vmul.f32 %v1573, %v1790
      %v1877 = vmul.f32 %v1573, %v1794
      %v1878 = vmul.f32 %v1573, %v1798
      %v1879 = vmul.f32 %v1573, %v1802
      %v1880 = vmul.f32 %v1573, %v1806
      %v1881 = vmul.f32 %v1573, %v1810
      %v1882 = vmul.f32 %v1573, %v1814
      %v1883 = vmul.f32 %v1573, %v1818
      %v1884 = vmul.f32 %v1573, %v1822
      %v1885 = vmul.f32 %v1573, %v1826
      %v1886 = vmul.f32 %v1573, %v1830
      %v1887 = vmul.f32 %v1573, %v1834
      %v1888 = vmul.f32 %v1573, %v1838
      %v1889 = vmul.f32 %v1573, %v1842
      %v1890 = vmul.f32 %v1573, %v1846
      %v1891 = vmul.f32 %v1573, %v1850
      %v1892 = vmul.f32 %v1573, %v1854
      %v1893 = vmul.f32 %v1573, %v1858
      %v1894 = vmul.f32 %v1573, %v1862
      %v1895 = vadd.f32 %v1471, %v1863
      %v1896 = vadd.f32 %v1472, %v1864
      %v1897 = vadd.f32 %v1473, %v1865
      %v1898 = vadd.f32 %v1474, %v1866
      %v1899 = vadd.f32 %v1475, %v1867
      %v1900 = vadd.f32 %v1476, %v1868
      %v1901 = vadd.f32 %v1477, %v1869
      %v1902 = vadd.f32 %v1478, %v1870
      %v1903 = vadd.f32 %v1479, %v1871
      %v1904 = vadd.f32 %v1480, %v1872
      %v1905 = vadd.f32 %v1481, %v1873
      %v1906 = vadd.f32 %v1482, %v1874
      %v1907 = vadd.f32 %v1483, %v1875
      %v1908 = vadd.f32 %v1484, %v1876
      %v1909 = vadd.f32 %v1485, %v1877
      %v1910 = vadd.f32 %v1486, %v1878
      %v1911 = vadd.f32 %v1487, %v1879
      %v1912 = vadd.f32 %v1488, %v1880
      %v1913 = vadd.f32 %v1489, %v1881
      %v1914 = vadd.f32 %v1490, %v1882
      %v1915 = vadd.f32 %v1491, %v1883
      %v1916 = vadd.f32 %v1492, %v1884
      %v1917 = vadd.f32 %v1493, %v1885
      %v1918 = vadd.f32 %v1494, %v1886
      %v1919 = vadd.f32 %v1495, %v1887
      %v1920 = vadd.f32 %v1496, %v1888
      %v1921 = vadd.f32 %v1497, %v1889
      %v1922 = vadd.f32 %v1498, %v1890
      %v1923 = vadd.f32 %v1499, %v1891
      %v1924 = vadd.f32 %v1500, %v1892
      %v1925 = vadd.f32 %v1501, %v1893
      %v1926 = vadd.f32 %v1502, %v1894
      %1927 = vset.pattern.permute.xlu0 16
      %1928 = vperm.xlu0 %1927, %v345
      %v1929 = vpop.permute.xlu0 %1928
      %v1931 = vmul.f32 %v1929, %v1738
      %v1932 = vmul.f32 %v1929, %v1742
      %v1933 = vmul.f32 %v1929, %v1746
      %v1934 = vmul.f32 %v1929, %v1750
      %v1935 = vmul.f32 %v1929, %v1754
      %v1936 = vmul.f32 %v1929, %v1758
      %v1937 = vmul.f32 %v1929, %v1762
      %v1938 = vmul.f32 %v1929, %v1766
      %v1939 = vmul.f32 %v1929, %v1770
      %v1940 = vmul.f32 %v1929, %v1774
      %v1941 = vmul.f32 %v1929, %v1778
      %v1942 = vmul.f32 %v1929, %v1782
      %v1943 = vmul.f32 %v1929, %v1786
      %v1944 = vmul.f32 %v1929, %v1790
      %v1945 = vmul.f32 %v1929, %v1794
      %v1946 = vmul.f32 %v1929, %v1798
      %v1947 = vmul.f32 %v1929, %v1802
      %v1948 = vmul.f32 %v1929, %v1806
      %v1949 = vmul.f32 %v1929, %v1810
      %v1950 = vmul.f32 %v1929, %v1814
      %v1951 = vmul.f32 %v1929, %v1818
      %v1952 = vmul.f32 %v1929, %v1822
      %v1953 = vmul.f32 %v1929, %v1826
      %v1954 = vmul.f32 %v1929, %v1830
      %v1955 = vmul.f32 %v1929, %v1834
      %v1956 = vmul.f32 %v1929, %v1838
      %v1957 = vmul.f32 %v1929, %v1842
      %v1958 = vmul.f32 %v1929, %v1846
      %v1959 = vmul.f32 %v1929, %v1850
      %v1960 = vmul.f32 %v1929, %v1854
      %v1961 = vmul.f32 %v1929, %v1858
      %v1962 = vmul.f32 %v1929, %v1862
      %v1963 = vadd.f32 %v1539, %v1931
      %v1964 = vadd.f32 %v1540, %v1932
      %v1965 = vadd.f32 %v1541, %v1933
      %v1966 = vadd.f32 %v1542, %v1934
      %v1967 = vadd.f32 %v1543, %v1935
      %v1968 = vadd.f32 %v1544, %v1936
      %v1969 = vadd.f32 %v1545, %v1937
      %v1970 = vadd.f32 %v1546, %v1938
      %v1971 = vadd.f32 %v1547, %v1939
      %v1972 = vadd.f32 %v1548, %v1940
      %v1973 = vadd.f32 %v1549, %v1941
      %v1974 = vadd.f32 %v1550, %v1942
      %v1975 = vadd.f32 %v1551, %v1943
      %v1976 = vadd.f32 %v1552, %v1944
      %v1977 = vadd.f32 %v1553, %v1945
      %v1978 = vadd.f32 %v1554, %v1946
      %v1979 = vadd.f32 %v1555, %v1947
      %v1980 = vadd.f32 %v1556, %v1948
      %v1981 = vadd.f32 %v1557, %v1949
      %v1982 = vadd.f32 %v1558, %v1950
      %v1983 = vadd.f32 %v1559, %v1951
      %v1984 = vadd.f32 %v1560, %v1952
      %v1985 = vadd.f32 %v1561, %v1953
      %v1986 = vadd.f32 %v1562, %v1954
      %v1987 = vadd.f32 %v1563, %v1955
      %v1988 = vadd.f32 %v1564, %v1956
      %v1989 = vadd.f32 %v1565, %v1957
      %v1990 = vadd.f32 %v1566, %v1958
      %v1991 = vadd.f32 %v1567, %v1959
      %v1992 = vadd.f32 %v1568, %v1960
      %v1993 = vadd.f32 %v1569, %v1961
      %v1994 = vadd.f32 %v1570, %v1962
      %1995 = vset.pattern.permute.xlu0 4
      %1996 = vperm.xlu0 %1995, %v345
      %v1997 = vpop.permute.xlu0 %1996
      %v1999 = vlaneseq
      %v2000 = vshrl.u32 %v1999, 7
      %v2001 = vsub.s32 0, %v2000
      %v2002 = vrot.slane %v313, %v2001
      %v2003 = vlaneseq
      %v2004 = vshrl.u32 %v2003, 7
      %v2005 = vsub.s32 0, %v2004
      %v2006 = vrot.slane %v314, %v2005
      %v2007 = vlaneseq
      %v2008 = vshrl.u32 %v2007, 7
      %v2009 = vsub.s32 0, %v2008
      %v2010 = vrot.slane %v315, %v2009
      %v2011 = vlaneseq
      %v2012 = vshrl.u32 %v2011, 7
      %v2013 = vsub.s32 0, %v2012
      %v2014 = vrot.slane %v316, %v2013
      %v2015 = vlaneseq
      %v2016 = vshrl.u32 %v2015, 7
      %v2017 = vsub.s32 0, %v2016
      %v2018 = vrot.slane %v317, %v2017
      %v2019 = vlaneseq
      %v2020 = vshrl.u32 %v2019, 7
      %v2021 = vsub.s32 0, %v2020
      %v2022 = vrot.slane %v318, %v2021
      %v2023 = vlaneseq
      %v2024 = vshrl.u32 %v2023, 7
      %v2025 = vsub.s32 0, %v2024
      %v2026 = vrot.slane %v319, %v2025
      %v2027 = vlaneseq
      %v2028 = vshrl.u32 %v2027, 7
      %v2029 = vsub.s32 0, %v2028
      %v2030 = vrot.slane %v320, %v2029
      %v2031 = vlaneseq
      %v2032 = vshrl.u32 %v2031, 7
      %v2033 = vsub.s32 0, %v2032
      %v2034 = vrot.slane %v321, %v2033
      %v2035 = vlaneseq
      %v2036 = vshrl.u32 %v2035, 7
      %v2037 = vsub.s32 0, %v2036
      %v2038 = vrot.slane %v322, %v2037
      %v2039 = vlaneseq
      %v2040 = vshrl.u32 %v2039, 7
      %v2041 = vsub.s32 0, %v2040
      %v2042 = vrot.slane %v323, %v2041
      %v2043 = vlaneseq
      %v2044 = vshrl.u32 %v2043, 7
      %v2045 = vsub.s32 0, %v2044
      %v2046 = vrot.slane %v324, %v2045
      %v2047 = vlaneseq
      %v2048 = vshrl.u32 %v2047, 7
      %v2049 = vsub.s32 0, %v2048
      %v2050 = vrot.slane %v325, %v2049
      %v2051 = vlaneseq
      %v2052 = vshrl.u32 %v2051, 7
      %v2053 = vsub.s32 0, %v2052
      %v2054 = vrot.slane %v326, %v2053
      %v2055 = vlaneseq
      %v2056 = vshrl.u32 %v2055, 7
      %v2057 = vsub.s32 0, %v2056
      %v2058 = vrot.slane %v327, %v2057
      %v2059 = vlaneseq
      %v2060 = vshrl.u32 %v2059, 7
      %v2061 = vsub.s32 0, %v2060
      %v2062 = vrot.slane %v328, %v2061
      %v2063 = vlaneseq
      %v2064 = vshrl.u32 %v2063, 7
      %v2065 = vsub.s32 0, %v2064
      %v2066 = vrot.slane %v329, %v2065
      %v2067 = vlaneseq
      %v2068 = vshrl.u32 %v2067, 7
      %v2069 = vsub.s32 0, %v2068
      %v2070 = vrot.slane %v330, %v2069
      %v2071 = vlaneseq
      %v2072 = vshrl.u32 %v2071, 7
      %v2073 = vsub.s32 0, %v2072
      %v2074 = vrot.slane %v331, %v2073
      %v2075 = vlaneseq
      %v2076 = vshrl.u32 %v2075, 7
      %v2077 = vsub.s32 0, %v2076
      %v2078 = vrot.slane %v332, %v2077
      %v2079 = vlaneseq
      %v2080 = vshrl.u32 %v2079, 7
      %v2081 = vsub.s32 0, %v2080
      %v2082 = vrot.slane %v333, %v2081
      %v2083 = vlaneseq
      %v2084 = vshrl.u32 %v2083, 7
      %v2085 = vsub.s32 0, %v2084
      %v2086 = vrot.slane %v334, %v2085
      %v2087 = vlaneseq
      %v2088 = vshrl.u32 %v2087, 7
      %v2089 = vsub.s32 0, %v2088
      %v2090 = vrot.slane %v335, %v2089
      %v2091 = vlaneseq
      %v2092 = vshrl.u32 %v2091, 7
      %v2093 = vsub.s32 0, %v2092
      %v2094 = vrot.slane %v336, %v2093
      %v2095 = vlaneseq
      %v2096 = vshrl.u32 %v2095, 7
      %v2097 = vsub.s32 0, %v2096
      %v2098 = vrot.slane %v337, %v2097
      %v2099 = vlaneseq
      %v2100 = vshrl.u32 %v2099, 7
      %v2101 = vsub.s32 0, %v2100
      %v2102 = vrot.slane %v338, %v2101
      %v2103 = vlaneseq
      %v2104 = vshrl.u32 %v2103, 7
      %v2105 = vsub.s32 0, %v2104
      %v2106 = vrot.slane %v339, %v2105
      %v2107 = vlaneseq
      %v2108 = vshrl.u32 %v2107, 7
      %v2109 = vsub.s32 0, %v2108
      %v2110 = vrot.slane %v340, %v2109
      %v2111 = vlaneseq
      %v2112 = vshrl.u32 %v2111, 7
      %v2113 = vsub.s32 0, %v2112
      %v2114 = vrot.slane %v341, %v2113
      %v2115 = vlaneseq
      %v2116 = vshrl.u32 %v2115, 7
      %v2117 = vsub.s32 0, %v2116
      %v2118 = vrot.slane %v342, %v2117
      %v2119 = vlaneseq
      %v2120 = vshrl.u32 %v2119, 7
      %v2121 = vsub.s32 0, %v2120
      %v2122 = vrot.slane %v343, %v2121
      %v2123 = vlaneseq
      %v2124 = vshrl.u32 %v2123, 7
      %v2125 = vsub.s32 0, %v2124
      %v2126 = vrot.slane %v344, %v2125
      %v2127 = vmul.f32 %v1997, %v2002
      %v2128 = vmul.f32 %v1997, %v2006
      %v2129 = vmul.f32 %v1997, %v2010
      %v2130 = vmul.f32 %v1997, %v2014
      %v2131 = vmul.f32 %v1997, %v2018
      %v2132 = vmul.f32 %v1997, %v2022
      %v2133 = vmul.f32 %v1997, %v2026
      %v2134 = vmul.f32 %v1997, %v2030
      %v2135 = vmul.f32 %v1997, %v2034
      %v2136 = vmul.f32 %v1997, %v2038
      %v2137 = vmul.f32 %v1997, %v2042
      %v2138 = vmul.f32 %v1997, %v2046
      %v2139 = vmul.f32 %v1997, %v2050
      %v2140 = vmul.f32 %v1997, %v2054
      %v2141 = vmul.f32 %v1997, %v2058
      %v2142 = vmul.f32 %v1997, %v2062
      %v2143 = vmul.f32 %v1997, %v2066
      %v2144 = vmul.f32 %v1997, %v2070
      %v2145 = vmul.f32 %v1997, %v2074
      %v2146 = vmul.f32 %v1997, %v2078
      %v2147 = vmul.f32 %v1997, %v2082
      %v2148 = vmul.f32 %v1997, %v2086
      %v2149 = vmul.f32 %v1997, %v2090
      %v2150 = vmul.f32 %v1997, %v2094
      %v2151 = vmul.f32 %v1997, %v2098
      %v2152 = vmul.f32 %v1997, %v2102
      %v2153 = vmul.f32 %v1997, %v2106
      %v2154 = vmul.f32 %v1997, %v2110
      %v2155 = vmul.f32 %v1997, %v2114
      %v2156 = vmul.f32 %v1997, %v2118
      %v2157 = vmul.f32 %v1997, %v2122
      %v2158 = vmul.f32 %v1997, %v2126
      %2159 = vset.pattern.permute.xlu0 5
      %2160 = vperm.xlu0 %2159, %v345
      %v2161 = vpop.permute.xlu0 %2160
      %v2163 = vlaneseq
      %v2164 = vshrl.u32 %v2163, 7
      %v2165 = vsub.s32 1, %v2164
      %v2166 = vrot.slane %v313, %v2165
      %v2167 = vlaneseq
      %v2168 = vshrl.u32 %v2167, 7
      %v2169 = vsub.s32 1, %v2168
      %v2170 = vrot.slane %v314, %v2169
      %v2171 = vlaneseq
      %v2172 = vshrl.u32 %v2171, 7
      %v2173 = vsub.s32 1, %v2172
      %v2174 = vrot.slane %v315, %v2173
      %v2175 = vlaneseq
      %v2176 = vshrl.u32 %v2175, 7
      %v2177 = vsub.s32 1, %v2176
      %v2178 = vrot.slane %v316, %v2177
      %v2179 = vlaneseq
      %v2180 = vshrl.u32 %v2179, 7
      %v2181 = vsub.s32 1, %v2180
      %v2182 = vrot.slane %v317, %v2181
      %v2183 = vlaneseq
      %v2184 = vshrl.u32 %v2183, 7
      %v2185 = vsub.s32 1, %v2184
      %v2186 = vrot.slane %v318, %v2185
      %v2187 = vlaneseq
      %v2188 = vshrl.u32 %v2187, 7
      %v2189 = vsub.s32 1, %v2188
      %v2190 = vrot.slane %v319, %v2189
      %v2191 = vlaneseq
      %v2192 = vshrl.u32 %v2191, 7
      %v2193 = vsub.s32 1, %v2192
      %v2194 = vrot.slane %v320, %v2193
      %v2195 = vlaneseq
      %v2196 = vshrl.u32 %v2195, 7
      %v2197 = vsub.s32 1, %v2196
      %v2198 = vrot.slane %v321, %v2197
      %v2199 = vlaneseq
      %v2200 = vshrl.u32 %v2199, 7
      %v2201 = vsub.s32 1, %v2200
      %v2202 = vrot.slane %v322, %v2201
      %v2203 = vlaneseq
      %v2204 = vshrl.u32 %v2203, 7
      %v2205 = vsub.s32 1, %v2204
      %v2206 = vrot.slane %v323, %v2205
      %v2207 = vlaneseq
      %v2208 = vshrl.u32 %v2207, 7
      %v2209 = vsub.s32 1, %v2208
      %v2210 = vrot.slane %v324, %v2209
      %v2211 = vlaneseq
      %v2212 = vshrl.u32 %v2211, 7
      %v2213 = vsub.s32 1, %v2212
      %v2214 = vrot.slane %v325, %v2213
      %v2215 = vlaneseq
      %v2216 = vshrl.u32 %v2215, 7
      %v2217 = vsub.s32 1, %v2216
      %v2218 = vrot.slane %v326, %v2217
      %v2219 = vlaneseq
      %v2220 = vshrl.u32 %v2219, 7
      %v2221 = vsub.s32 1, %v2220
      %v2222 = vrot.slane %v327, %v2221
      %v2223 = vlaneseq
      %v2224 = vshrl.u32 %v2223, 7
      %v2225 = vsub.s32 1, %v2224
      %v2226 = vrot.slane %v328, %v2225
      %v2227 = vlaneseq
      %v2228 = vshrl.u32 %v2227, 7
      %v2229 = vsub.s32 1, %v2228
      %v2230 = vrot.slane %v329, %v2229
      %v2231 = vlaneseq
      %v2232 = vshrl.u32 %v2231, 7
      %v2233 = vsub.s32 1, %v2232
      %v2234 = vrot.slane %v330, %v2233
      %v2235 = vlaneseq
      %v2236 = vshrl.u32 %v2235, 7
      %v2237 = vsub.s32 1, %v2236
      %v2238 = vrot.slane %v331, %v2237
      %v2239 = vlaneseq
      %v2240 = vshrl.u32 %v2239, 7
      %v2241 = vsub.s32 1, %v2240
      %v2242 = vrot.slane %v332, %v2241
      %v2243 = vlaneseq
      %v2244 = vshrl.u32 %v2243, 7
      %v2245 = vsub.s32 1, %v2244
      %v2246 = vrot.slane %v333, %v2245
      %v2247 = vlaneseq
      %v2248 = vshrl.u32 %v2247, 7
      %v2249 = vsub.s32 1, %v2248
      %v2250 = vrot.slane %v334, %v2249
      %v2251 = vlaneseq
      %v2252 = vshrl.u32 %v2251, 7
      %v2253 = vsub.s32 1, %v2252
      %v2254 = vrot.slane %v335, %v2253
      %v2255 = vlaneseq
      %v2256 = vshrl.u32 %v2255, 7
      %v2257 = vsub.s32 1, %v2256
      %v2258 = vrot.slane %v336, %v2257
      %v2259 = vlaneseq
      %v2260 = vshrl.u32 %v2259, 7
      %v2261 = vsub.s32 1, %v2260
      %v2262 = vrot.slane %v337, %v2261
      %v2263 = vlaneseq
      %v2264 = vshrl.u32 %v2263, 7
      %v2265 = vsub.s32 1, %v2264
      %v2266 = vrot.slane %v338, %v2265
      %v2267 = vlaneseq
      %v2268 = vshrl.u32 %v2267, 7
      %v2269 = vsub.s32 1, %v2268
      %v2270 = vrot.slane %v339, %v2269
      %v2271 = vlaneseq
      %v2272 = vshrl.u32 %v2271, 7
      %v2273 = vsub.s32 1, %v2272
      %v2274 = vrot.slane %v340, %v2273
      %v2275 = vlaneseq
      %v2276 = vshrl.u32 %v2275, 7
      %v2277 = vsub.s32 1, %v2276
      %v2278 = vrot.slane %v341, %v2277
      %v2279 = vlaneseq
      %v2280 = vshrl.u32 %v2279, 7
      %v2281 = vsub.s32 1, %v2280
      %v2282 = vrot.slane %v342, %v2281
      %v2283 = vlaneseq
      %v2284 = vshrl.u32 %v2283, 7
      %v2285 = vsub.s32 1, %v2284
      %v2286 = vrot.slane %v343, %v2285
      %v2287 = vlaneseq
      %v2288 = vshrl.u32 %v2287, 7
      %v2289 = vsub.s32 1, %v2288
      %v2290 = vrot.slane %v344, %v2289
      %v2291 = vmul.f32 %v2161, %v2166
      %v2292 = vmul.f32 %v2161, %v2170
      %v2293 = vmul.f32 %v2161, %v2174
      %v2294 = vmul.f32 %v2161, %v2178
      %v2295 = vmul.f32 %v2161, %v2182
      %v2296 = vmul.f32 %v2161, %v2186
      %v2297 = vmul.f32 %v2161, %v2190
      %v2298 = vmul.f32 %v2161, %v2194
      %v2299 = vmul.f32 %v2161, %v2198
      %v2300 = vmul.f32 %v2161, %v2202
      %v2301 = vmul.f32 %v2161, %v2206
      %v2302 = vmul.f32 %v2161, %v2210
      %v2303 = vmul.f32 %v2161, %v2214
      %v2304 = vmul.f32 %v2161, %v2218
      %v2305 = vmul.f32 %v2161, %v2222
      %v2306 = vmul.f32 %v2161, %v2226
      %v2307 = vmul.f32 %v2161, %v2230
      %v2308 = vmul.f32 %v2161, %v2234
      %v2309 = vmul.f32 %v2161, %v2238
      %v2310 = vmul.f32 %v2161, %v2242
      %v2311 = vmul.f32 %v2161, %v2246
      %v2312 = vmul.f32 %v2161, %v2250
      %v2313 = vmul.f32 %v2161, %v2254
      %v2314 = vmul.f32 %v2161, %v2258
      %v2315 = vmul.f32 %v2161, %v2262
      %v2316 = vmul.f32 %v2161, %v2266
      %v2317 = vmul.f32 %v2161, %v2270
      %v2318 = vmul.f32 %v2161, %v2274
      %v2319 = vmul.f32 %v2161, %v2278
      %v2320 = vmul.f32 %v2161, %v2282
      %v2321 = vmul.f32 %v2161, %v2286
      %v2322 = vmul.f32 %v2161, %v2290
      %v2323 = vadd.f32 %v2127, %v2291
      %v2324 = vadd.f32 %v2128, %v2292
      %v2325 = vadd.f32 %v2129, %v2293
      %v2326 = vadd.f32 %v2130, %v2294
      %v2327 = vadd.f32 %v2131, %v2295
      %v2328 = vadd.f32 %v2132, %v2296
      %v2329 = vadd.f32 %v2133, %v2297
      %v2330 = vadd.f32 %v2134, %v2298
      %v2331 = vadd.f32 %v2135, %v2299
      %v2332 = vadd.f32 %v2136, %v2300
      %v2333 = vadd.f32 %v2137, %v2301
      %v2334 = vadd.f32 %v2138, %v2302
      %v2335 = vadd.f32 %v2139, %v2303
      %v2336 = vadd.f32 %v2140, %v2304
      %v2337 = vadd.f32 %v2141, %v2305
      %v2338 = vadd.f32 %v2142, %v2306
      %v2339 = vadd.f32 %v2143, %v2307
      %v2340 = vadd.f32 %v2144, %v2308
      %v2341 = vadd.f32 %v2145, %v2309
      %v2342 = vadd.f32 %v2146, %v2310
      %v2343 = vadd.f32 %v2147, %v2311
      %v2344 = vadd.f32 %v2148, %v2312
      %v2345 = vadd.f32 %v2149, %v2313
      %v2346 = vadd.f32 %v2150, %v2314
      %v2347 = vadd.f32 %v2151, %v2315
      %v2348 = vadd.f32 %v2152, %v2316
      %v2349 = vadd.f32 %v2153, %v2317
      %v2350 = vadd.f32 %v2154, %v2318
      %v2351 = vadd.f32 %v2155, %v2319
      %v2352 = vadd.f32 %v2156, %v2320
      %v2353 = vadd.f32 %v2157, %v2321
      %v2354 = vadd.f32 %v2158, %v2322
      %2355 = vset.pattern.permute.xlu0 6
      %2356 = vperm.xlu0 %2355, %v345
      %v2357 = vpop.permute.xlu0 %2356
      %v2359 = vlaneseq
      %v2360 = vshrl.u32 %v2359, 7
      %v2361 = vsub.s32 2, %v2360
      %v2362 = vrot.slane %v313, %v2361
      %v2363 = vlaneseq
      %v2364 = vshrl.u32 %v2363, 7
      %v2365 = vsub.s32 2, %v2364
      %v2366 = vrot.slane %v314, %v2365
      %v2367 = vlaneseq
      %v2368 = vshrl.u32 %v2367, 7
      %v2369 = vsub.s32 2, %v2368
      %v2370 = vrot.slane %v315, %v2369
      %v2371 = vlaneseq
      %v2372 = vshrl.u32 %v2371, 7
      %v2373 = vsub.s32 2, %v2372
      %v2374 = vrot.slane %v316, %v2373
      %v2375 = vlaneseq
      %v2376 = vshrl.u32 %v2375, 7
      %v2377 = vsub.s32 2, %v2376
      %v2378 = vrot.slane %v317, %v2377
      %v2379 = vlaneseq
      %v2380 = vshrl.u32 %v2379, 7
      %v2381 = vsub.s32 2, %v2380
      %v2382 = vrot.slane %v318, %v2381
      %v2383 = vlaneseq
      %v2384 = vshrl.u32 %v2383, 7
      %v2385 = vsub.s32 2, %v2384
      %v2386 = vrot.slane %v319, %v2385
      %v2387 = vlaneseq
      %v2388 = vshrl.u32 %v2387, 7
      %v2389 = vsub.s32 2, %v2388
      %v2390 = vrot.slane %v320, %v2389
      %v2391 = vlaneseq
      %v2392 = vshrl.u32 %v2391, 7
      %v2393 = vsub.s32 2, %v2392
      %v2394 = vrot.slane %v321, %v2393
      %v2395 = vlaneseq
      %v2396 = vshrl.u32 %v2395, 7
      %v2397 = vsub.s32 2, %v2396
      %v2398 = vrot.slane %v322, %v2397
      %v2399 = vlaneseq
      %v2400 = vshrl.u32 %v2399, 7
      %v2401 = vsub.s32 2, %v2400
      %v2402 = vrot.slane %v323, %v2401
      %v2403 = vlaneseq
      %v2404 = vshrl.u32 %v2403, 7
      %v2405 = vsub.s32 2, %v2404
      %v2406 = vrot.slane %v324, %v2405
      %v2407 = vlaneseq
      %v2408 = vshrl.u32 %v2407, 7
      %v2409 = vsub.s32 2, %v2408
      %v2410 = vrot.slane %v325, %v2409
      %v2411 = vlaneseq
      %v2412 = vshrl.u32 %v2411, 7
      %v2413 = vsub.s32 2, %v2412
      %v2414 = vrot.slane %v326, %v2413
      %v2415 = vlaneseq
      %v2416 = vshrl.u32 %v2415, 7
      %v2417 = vsub.s32 2, %v2416
      %v2418 = vrot.slane %v327, %v2417
      %v2419 = vlaneseq
      %v2420 = vshrl.u32 %v2419, 7
      %v2421 = vsub.s32 2, %v2420
      %v2422 = vrot.slane %v328, %v2421
      %v2423 = vlaneseq
      %v2424 = vshrl.u32 %v2423, 7
      %v2425 = vsub.s32 2, %v2424
      %v2426 = vrot.slane %v329, %v2425
      %v2427 = vlaneseq
      %v2428 = vshrl.u32 %v2427, 7
      %v2429 = vsub.s32 2, %v2428
      %v2430 = vrot.slane %v330, %v2429
      %v2431 = vlaneseq
      %v2432 = vshrl.u32 %v2431, 7
      %v2433 = vsub.s32 2, %v2432
      %v2434 = vrot.slane %v331, %v2433
      %v2435 = vlaneseq
      %v2436 = vshrl.u32 %v2435, 7
      %v2437 = vsub.s32 2, %v2436
      %v2438 = vrot.slane %v332, %v2437
      %v2439 = vlaneseq
      %v2440 = vshrl.u32 %v2439, 7
      %v2441 = vsub.s32 2, %v2440
      %v2442 = vrot.slane %v333, %v2441
      %v2443 = vlaneseq
      %v2444 = vshrl.u32 %v2443, 7
      %v2445 = vsub.s32 2, %v2444
      %v2446 = vrot.slane %v334, %v2445
      %v2447 = vlaneseq
      %v2448 = vshrl.u32 %v2447, 7
      %v2449 = vsub.s32 2, %v2448
      %v2450 = vrot.slane %v335, %v2449
      %v2451 = vlaneseq
      %v2452 = vshrl.u32 %v2451, 7
      %v2453 = vsub.s32 2, %v2452
      %v2454 = vrot.slane %v336, %v2453
      %v2455 = vlaneseq
      %v2456 = vshrl.u32 %v2455, 7
      %v2457 = vsub.s32 2, %v2456
      %v2458 = vrot.slane %v337, %v2457
      %v2459 = vlaneseq
      %v2460 = vshrl.u32 %v2459, 7
      %v2461 = vsub.s32 2, %v2460
      %v2462 = vrot.slane %v338, %v2461
      %v2463 = vlaneseq
      %v2464 = vshrl.u32 %v2463, 7
      %v2465 = vsub.s32 2, %v2464
      %v2466 = vrot.slane %v339, %v2465
      %v2467 = vlaneseq
      %v2468 = vshrl.u32 %v2467, 7
      %v2469 = vsub.s32 2, %v2468
      %v2470 = vrot.slane %v340, %v2469
      %v2471 = vlaneseq
      %v2472 = vshrl.u32 %v2471, 7
      %v2473 = vsub.s32 2, %v2472
      %v2474 = vrot.slane %v341, %v2473
      %v2475 = vlaneseq
      %v2476 = vshrl.u32 %v2475, 7
      %v2477 = vsub.s32 2, %v2476
      %v2478 = vrot.slane %v342, %v2477
      %v2479 = vlaneseq
      %v2480 = vshrl.u32 %v2479, 7
      %v2481 = vsub.s32 2, %v2480
      %v2482 = vrot.slane %v343, %v2481
      %v2483 = vlaneseq
      %v2484 = vshrl.u32 %v2483, 7
      %v2485 = vsub.s32 2, %v2484
      %v2486 = vrot.slane %v344, %v2485
      %v2487 = vmul.f32 %v2357, %v2362
      %v2488 = vmul.f32 %v2357, %v2366
      %v2489 = vmul.f32 %v2357, %v2370
      %v2490 = vmul.f32 %v2357, %v2374
      %v2491 = vmul.f32 %v2357, %v2378
      %v2492 = vmul.f32 %v2357, %v2382
      %v2493 = vmul.f32 %v2357, %v2386
      %v2494 = vmul.f32 %v2357, %v2390
      %v2495 = vmul.f32 %v2357, %v2394
      %v2496 = vmul.f32 %v2357, %v2398
      %v2497 = vmul.f32 %v2357, %v2402
      %v2498 = vmul.f32 %v2357, %v2406
      %v2499 = vmul.f32 %v2357, %v2410
      %v2500 = vmul.f32 %v2357, %v2414
      %v2501 = vmul.f32 %v2357, %v2418
      %v2502 = vmul.f32 %v2357, %v2422
      %v2503 = vmul.f32 %v2357, %v2426
      %v2504 = vmul.f32 %v2357, %v2430
      %v2505 = vmul.f32 %v2357, %v2434
      %v2506 = vmul.f32 %v2357, %v2438
      %v2507 = vmul.f32 %v2357, %v2442
      %v2508 = vmul.f32 %v2357, %v2446
      %v2509 = vmul.f32 %v2357, %v2450
      %v2510 = vmul.f32 %v2357, %v2454
      %v2511 = vmul.f32 %v2357, %v2458
      %v2512 = vmul.f32 %v2357, %v2462
      %v2513 = vmul.f32 %v2357, %v2466
      %v2514 = vmul.f32 %v2357, %v2470
      %v2515 = vmul.f32 %v2357, %v2474
      %v2516 = vmul.f32 %v2357, %v2478
      %v2517 = vmul.f32 %v2357, %v2482
      %v2518 = vmul.f32 %v2357, %v2486
      %v2519 = vadd.f32 %v2323, %v2487
      %v2520 = vadd.f32 %v2324, %v2488
      %v2521 = vadd.f32 %v2325, %v2489
      %v2522 = vadd.f32 %v2326, %v2490
      %v2523 = vadd.f32 %v2327, %v2491
      %v2524 = vadd.f32 %v2328, %v2492
      %v2525 = vadd.f32 %v2329, %v2493
      %v2526 = vadd.f32 %v2330, %v2494
      %v2527 = vadd.f32 %v2331, %v2495
      %v2528 = vadd.f32 %v2332, %v2496
      %v2529 = vadd.f32 %v2333, %v2497
      %v2530 = vadd.f32 %v2334, %v2498
      %v2531 = vadd.f32 %v2335, %v2499
      %v2532 = vadd.f32 %v2336, %v2500
      %v2533 = vadd.f32 %v2337, %v2501
      %v2534 = vadd.f32 %v2338, %v2502
      %v2535 = vadd.f32 %v2339, %v2503
      %v2536 = vadd.f32 %v2340, %v2504
      %v2537 = vadd.f32 %v2341, %v2505
      %v2538 = vadd.f32 %v2342, %v2506
      %v2539 = vadd.f32 %v2343, %v2507
      %v2540 = vadd.f32 %v2344, %v2508
      %v2541 = vadd.f32 %v2345, %v2509
      %v2542 = vadd.f32 %v2346, %v2510
      %v2543 = vadd.f32 %v2347, %v2511
      %v2544 = vadd.f32 %v2348, %v2512
      %v2545 = vadd.f32 %v2349, %v2513
      %v2546 = vadd.f32 %v2350, %v2514
      %v2547 = vadd.f32 %v2351, %v2515
      %v2548 = vadd.f32 %v2352, %v2516
      %v2549 = vadd.f32 %v2353, %v2517
      %v2550 = vadd.f32 %v2354, %v2518
      %2551 = vset.pattern.permute.xlu0 7
      %2552 = vperm.xlu0 %2551, %v345
      %v2553 = vpop.permute.xlu0 %2552
      %v2555 = vlaneseq
      %v2556 = vshrl.u32 %v2555, 7
      %v2557 = vsub.s32 3, %v2556
      %v2558 = vrot.slane %v313, %v2557
      %v2559 = vlaneseq
      %v2560 = vshrl.u32 %v2559, 7
      %v2561 = vsub.s32 3, %v2560
      %v2562 = vrot.slane %v314, %v2561
      %v2563 = vlaneseq
      %v2564 = vshrl.u32 %v2563, 7
      %v2565 = vsub.s32 3, %v2564
      %v2566 = vrot.slane %v315, %v2565
      %v2567 = vlaneseq
      %v2568 = vshrl.u32 %v2567, 7
      %v2569 = vsub.s32 3, %v2568
      %v2570 = vrot.slane %v316, %v2569
      %v2571 = vlaneseq
      %v2572 = vshrl.u32 %v2571, 7
      %v2573 = vsub.s32 3, %v2572
      %v2574 = vrot.slane %v317, %v2573
      %v2575 = vlaneseq
      %v2576 = vshrl.u32 %v2575, 7
      %v2577 = vsub.s32 3, %v2576
      %v2578 = vrot.slane %v318, %v2577
      %v2579 = vlaneseq
      %v2580 = vshrl.u32 %v2579, 7
      %v2581 = vsub.s32 3, %v2580
      %v2582 = vrot.slane %v319, %v2581
      %v2583 = vlaneseq
      %v2584 = vshrl.u32 %v2583, 7
      %v2585 = vsub.s32 3, %v2584
      %v2586 = vrot.slane %v320, %v2585
      %v2587 = vlaneseq
      %v2588 = vshrl.u32 %v2587, 7
      %v2589 = vsub.s32 3, %v2588
      %v2590 = vrot.slane %v321, %v2589
      %v2591 = vlaneseq
      %v2592 = vshrl.u32 %v2591, 7
      %v2593 = vsub.s32 3, %v2592
      %v2594 = vrot.slane %v322, %v2593
      %v2595 = vlaneseq
      %v2596 = vshrl.u32 %v2595, 7
      %v2597 = vsub.s32 3, %v2596
      %v2598 = vrot.slane %v323, %v2597
      %v2599 = vlaneseq
      %v2600 = vshrl.u32 %v2599, 7
      %v2601 = vsub.s32 3, %v2600
      %v2602 = vrot.slane %v324, %v2601
      %v2603 = vlaneseq
      %v2604 = vshrl.u32 %v2603, 7
      %v2605 = vsub.s32 3, %v2604
      %v2606 = vrot.slane %v325, %v2605
      %v2607 = vlaneseq
      %v2608 = vshrl.u32 %v2607, 7
      %v2609 = vsub.s32 3, %v2608
      %v2610 = vrot.slane %v326, %v2609
      %v2611 = vlaneseq
      %v2612 = vshrl.u32 %v2611, 7
      %v2613 = vsub.s32 3, %v2612
      %v2614 = vrot.slane %v327, %v2613
      %v2615 = vlaneseq
      %v2616 = vshrl.u32 %v2615, 7
      %v2617 = vsub.s32 3, %v2616
      %v2618 = vrot.slane %v328, %v2617
      %v2619 = vlaneseq
      %v2620 = vshrl.u32 %v2619, 7
      %v2621 = vsub.s32 3, %v2620
      %v2622 = vrot.slane %v329, %v2621
      %v2623 = vlaneseq
      %v2624 = vshrl.u32 %v2623, 7
      %v2625 = vsub.s32 3, %v2624
      %v2626 = vrot.slane %v330, %v2625
      %v2627 = vlaneseq
      %v2628 = vshrl.u32 %v2627, 7
      %v2629 = vsub.s32 3, %v2628
      %v2630 = vrot.slane %v331, %v2629
      %v2631 = vlaneseq
      %v2632 = vshrl.u32 %v2631, 7
      %v2633 = vsub.s32 3, %v2632
      %v2634 = vrot.slane %v332, %v2633
      %v2635 = vlaneseq
      %v2636 = vshrl.u32 %v2635, 7
      %v2637 = vsub.s32 3, %v2636
      %v2638 = vrot.slane %v333, %v2637
      %v2639 = vlaneseq
      %v2640 = vshrl.u32 %v2639, 7
      %v2641 = vsub.s32 3, %v2640
      %v2642 = vrot.slane %v334, %v2641
      %v2643 = vlaneseq
      %v2644 = vshrl.u32 %v2643, 7
      %v2645 = vsub.s32 3, %v2644
      %v2646 = vrot.slane %v335, %v2645
      %v2647 = vlaneseq
      %v2648 = vshrl.u32 %v2647, 7
      %v2649 = vsub.s32 3, %v2648
      %v2650 = vrot.slane %v336, %v2649
      %v2651 = vlaneseq
      %v2652 = vshrl.u32 %v2651, 7
      %v2653 = vsub.s32 3, %v2652
      %v2654 = vrot.slane %v337, %v2653
      %v2655 = vlaneseq
      %v2656 = vshrl.u32 %v2655, 7
      %v2657 = vsub.s32 3, %v2656
      %v2658 = vrot.slane %v338, %v2657
      %v2659 = vlaneseq
      %v2660 = vshrl.u32 %v2659, 7
      %v2661 = vsub.s32 3, %v2660
      %v2662 = vrot.slane %v339, %v2661
      %v2663 = vlaneseq
      %v2664 = vshrl.u32 %v2663, 7
      %v2665 = vsub.s32 3, %v2664
      %v2666 = vrot.slane %v340, %v2665
      %v2667 = vlaneseq
      %v2668 = vshrl.u32 %v2667, 7
      %v2669 = vsub.s32 3, %v2668
      %v2670 = vrot.slane %v341, %v2669
      %v2671 = vlaneseq
      %v2672 = vshrl.u32 %v2671, 7
      %v2673 = vsub.s32 3, %v2672
      %v2674 = vrot.slane %v342, %v2673
      %v2675 = vlaneseq
      %v2676 = vshrl.u32 %v2675, 7
      %v2677 = vsub.s32 3, %v2676
      %v2678 = vrot.slane %v343, %v2677
      %v2679 = vlaneseq
      %v2680 = vshrl.u32 %v2679, 7
      %v2681 = vsub.s32 3, %v2680
      %v2682 = vrot.slane %v344, %v2681
      %v2683 = vmul.f32 %v2553, %v2558
      %v2684 = vmul.f32 %v2553, %v2562
      %v2685 = vmul.f32 %v2553, %v2566
      %v2686 = vmul.f32 %v2553, %v2570
      %v2687 = vmul.f32 %v2553, %v2574
      %v2688 = vmul.f32 %v2553, %v2578
      %v2689 = vmul.f32 %v2553, %v2582
      %v2690 = vmul.f32 %v2553, %v2586
      %v2691 = vmul.f32 %v2553, %v2590
      %v2692 = vmul.f32 %v2553, %v2594
      %v2693 = vmul.f32 %v2553, %v2598
      %v2694 = vmul.f32 %v2553, %v2602
      %v2695 = vmul.f32 %v2553, %v2606
      %v2696 = vmul.f32 %v2553, %v2610
      %v2697 = vmul.f32 %v2553, %v2614
      %v2698 = vmul.f32 %v2553, %v2618
      %v2699 = vmul.f32 %v2553, %v2622
      %v2700 = vmul.f32 %v2553, %v2626
      %v2701 = vmul.f32 %v2553, %v2630
      %v2702 = vmul.f32 %v2553, %v2634
      %v2703 = vmul.f32 %v2553, %v2638
      %v2704 = vmul.f32 %v2553, %v2642
      %v2705 = vmul.f32 %v2553, %v2646
      %v2706 = vmul.f32 %v2553, %v2650
      %v2707 = vmul.f32 %v2553, %v2654
      %v2708 = vmul.f32 %v2553, %v2658
      %v2709 = vmul.f32 %v2553, %v2662
      %v2710 = vmul.f32 %v2553, %v2666
      %v2711 = vmul.f32 %v2553, %v2670
      %v2712 = vmul.f32 %v2553, %v2674
      %v2713 = vmul.f32 %v2553, %v2678
      %v2714 = vmul.f32 %v2553, %v2682
      %v2715 = vadd.f32 %v2519, %v2683
      %v2716 = vadd.f32 %v2520, %v2684
      %v2717 = vadd.f32 %v2521, %v2685
      %v2718 = vadd.f32 %v2522, %v2686
      %v2719 = vadd.f32 %v2523, %v2687
      %v2720 = vadd.f32 %v2524, %v2688
      %v2721 = vadd.f32 %v2525, %v2689
      %v2722 = vadd.f32 %v2526, %v2690
      %v2723 = vadd.f32 %v2527, %v2691
      %v2724 = vadd.f32 %v2528, %v2692
      %v2725 = vadd.f32 %v2529, %v2693
      %v2726 = vadd.f32 %v2530, %v2694
      %v2727 = vadd.f32 %v2531, %v2695
      %v2728 = vadd.f32 %v2532, %v2696
      %v2729 = vadd.f32 %v2533, %v2697
      %v2730 = vadd.f32 %v2534, %v2698
      %v2731 = vadd.f32 %v2535, %v2699
      %v2732 = vadd.f32 %v2536, %v2700
      %v2733 = vadd.f32 %v2537, %v2701
      %v2734 = vadd.f32 %v2538, %v2702
      %v2735 = vadd.f32 %v2539, %v2703
      %v2736 = vadd.f32 %v2540, %v2704
      %v2737 = vadd.f32 %v2541, %v2705
      %v2738 = vadd.f32 %v2542, %v2706
      %v2739 = vadd.f32 %v2543, %v2707
      %v2740 = vadd.f32 %v2544, %v2708
      %v2741 = vadd.f32 %v2545, %v2709
      %v2742 = vadd.f32 %v2546, %v2710
      %v2743 = vadd.f32 %v2547, %v2711
      %v2744 = vadd.f32 %v2548, %v2712
      %v2745 = vadd.f32 %v2549, %v2713
      %v2746 = vadd.f32 %v2550, %v2714
      %2747 = vset.pattern.permute.xlu0 8
      %2748 = vperm.xlu0 %2747, %v345
      %v2749 = vpop.permute.xlu0 %2748
      %v2751 = vlaneseq
      %v2752 = vshrl.u32 %v2751, 7
      %v2753 = vsub.s32 4, %v2752
      %v2754 = vrot.slane %v313, %v2753
      %v2755 = vlaneseq
      %v2756 = vshrl.u32 %v2755, 7
      %v2757 = vsub.s32 4, %v2756
      %v2758 = vrot.slane %v314, %v2757
      %v2759 = vlaneseq
      %v2760 = vshrl.u32 %v2759, 7
      %v2761 = vsub.s32 4, %v2760
      %v2762 = vrot.slane %v315, %v2761
      %v2763 = vlaneseq
      %v2764 = vshrl.u32 %v2763, 7
      %v2765 = vsub.s32 4, %v2764
      %v2766 = vrot.slane %v316, %v2765
      %v2767 = vlaneseq
      %v2768 = vshrl.u32 %v2767, 7
      %v2769 = vsub.s32 4, %v2768
      %v2770 = vrot.slane %v317, %v2769
      %v2771 = vlaneseq
      %v2772 = vshrl.u32 %v2771, 7
      %v2773 = vsub.s32 4, %v2772
      %v2774 = vrot.slane %v318, %v2773
      %v2775 = vlaneseq
      %v2776 = vshrl.u32 %v2775, 7
      %v2777 = vsub.s32 4, %v2776
      %v2778 = vrot.slane %v319, %v2777
      %v2779 = vlaneseq
      %v2780 = vshrl.u32 %v2779, 7
      %v2781 = vsub.s32 4, %v2780
      %v2782 = vrot.slane %v320, %v2781
      %v2783 = vlaneseq
      %v2784 = vshrl.u32 %v2783, 7
      %v2785 = vsub.s32 4, %v2784
      %v2786 = vrot.slane %v321, %v2785
      %v2787 = vlaneseq
      %v2788 = vshrl.u32 %v2787, 7
      %v2789 = vsub.s32 4, %v2788
      %v2790 = vrot.slane %v322, %v2789
      %v2791 = vlaneseq
      %v2792 = vshrl.u32 %v2791, 7
      %v2793 = vsub.s32 4, %v2792
      %v2794 = vrot.slane %v323, %v2793
      %v2795 = vlaneseq
      %v2796 = vshrl.u32 %v2795, 7
      %v2797 = vsub.s32 4, %v2796
      %v2798 = vrot.slane %v324, %v2797
      %v2799 = vlaneseq
      %v2800 = vshrl.u32 %v2799, 7
      %v2801 = vsub.s32 4, %v2800
      %v2802 = vrot.slane %v325, %v2801
      %v2803 = vlaneseq
      %v2804 = vshrl.u32 %v2803, 7
      %v2805 = vsub.s32 4, %v2804
      %v2806 = vrot.slane %v326, %v2805
      %v2807 = vlaneseq
      %v2808 = vshrl.u32 %v2807, 7
      %v2809 = vsub.s32 4, %v2808
      %v2810 = vrot.slane %v327, %v2809
      %v2811 = vlaneseq
      %v2812 = vshrl.u32 %v2811, 7
      %v2813 = vsub.s32 4, %v2812
      %v2814 = vrot.slane %v328, %v2813
      %v2815 = vlaneseq
      %v2816 = vshrl.u32 %v2815, 7
      %v2817 = vsub.s32 4, %v2816
      %v2818 = vrot.slane %v329, %v2817
      %v2819 = vlaneseq
      %v2820 = vshrl.u32 %v2819, 7
      %v2821 = vsub.s32 4, %v2820
      %v2822 = vrot.slane %v330, %v2821
      %v2823 = vlaneseq
      %v2824 = vshrl.u32 %v2823, 7
      %v2825 = vsub.s32 4, %v2824
      %v2826 = vrot.slane %v331, %v2825
      %v2827 = vlaneseq
      %v2828 = vshrl.u32 %v2827, 7
      %v2829 = vsub.s32 4, %v2828
      %v2830 = vrot.slane %v332, %v2829
      %v2831 = vlaneseq
      %v2832 = vshrl.u32 %v2831, 7
      %v2833 = vsub.s32 4, %v2832
      %v2834 = vrot.slane %v333, %v2833
      %v2835 = vlaneseq
      %v2836 = vshrl.u32 %v2835, 7
      %v2837 = vsub.s32 4, %v2836
      %v2838 = vrot.slane %v334, %v2837
      %v2839 = vlaneseq
      %v2840 = vshrl.u32 %v2839, 7
      %v2841 = vsub.s32 4, %v2840
      %v2842 = vrot.slane %v335, %v2841
      %v2843 = vlaneseq
      %v2844 = vshrl.u32 %v2843, 7
      %v2845 = vsub.s32 4, %v2844
      %v2846 = vrot.slane %v336, %v2845
      %v2847 = vlaneseq
      %v2848 = vshrl.u32 %v2847, 7
      %v2849 = vsub.s32 4, %v2848
      %v2850 = vrot.slane %v337, %v2849
      %v2851 = vlaneseq
      %v2852 = vshrl.u32 %v2851, 7
      %v2853 = vsub.s32 4, %v2852
      %v2854 = vrot.slane %v338, %v2853
      %v2855 = vlaneseq
      %v2856 = vshrl.u32 %v2855, 7
      %v2857 = vsub.s32 4, %v2856
      %v2858 = vrot.slane %v339, %v2857
      %v2859 = vlaneseq
      %v2860 = vshrl.u32 %v2859, 7
      %v2861 = vsub.s32 4, %v2860
      %v2862 = vrot.slane %v340, %v2861
      %v2863 = vlaneseq
      %v2864 = vshrl.u32 %v2863, 7
      %v2865 = vsub.s32 4, %v2864
      %v2866 = vrot.slane %v341, %v2865
      %v2867 = vlaneseq
      %v2868 = vshrl.u32 %v2867, 7
      %v2869 = vsub.s32 4, %v2868
      %v2870 = vrot.slane %v342, %v2869
      %v2871 = vlaneseq
      %v2872 = vshrl.u32 %v2871, 7
      %v2873 = vsub.s32 4, %v2872
      %v2874 = vrot.slane %v343, %v2873
      %v2875 = vlaneseq
      %v2876 = vshrl.u32 %v2875, 7
      %v2877 = vsub.s32 4, %v2876
      %v2878 = vrot.slane %v344, %v2877
      %v2879 = vmul.f32 %v2749, %v2754
      %v2880 = vmul.f32 %v2749, %v2758
      %v2881 = vmul.f32 %v2749, %v2762
      %v2882 = vmul.f32 %v2749, %v2766
      %v2883 = vmul.f32 %v2749, %v2770
      %v2884 = vmul.f32 %v2749, %v2774
      %v2885 = vmul.f32 %v2749, %v2778
      %v2886 = vmul.f32 %v2749, %v2782
      %v2887 = vmul.f32 %v2749, %v2786
      %v2888 = vmul.f32 %v2749, %v2790
      %v2889 = vmul.f32 %v2749, %v2794
      %v2890 = vmul.f32 %v2749, %v2798
      %v2891 = vmul.f32 %v2749, %v2802
      %v2892 = vmul.f32 %v2749, %v2806
      %v2893 = vmul.f32 %v2749, %v2810
      %v2894 = vmul.f32 %v2749, %v2814
      %v2895 = vmul.f32 %v2749, %v2818
      %v2896 = vmul.f32 %v2749, %v2822
      %v2897 = vmul.f32 %v2749, %v2826
      %v2898 = vmul.f32 %v2749, %v2830
      %v2899 = vmul.f32 %v2749, %v2834
      %v2900 = vmul.f32 %v2749, %v2838
      %v2901 = vmul.f32 %v2749, %v2842
      %v2902 = vmul.f32 %v2749, %v2846
      %v2903 = vmul.f32 %v2749, %v2850
      %v2904 = vmul.f32 %v2749, %v2854
      %v2905 = vmul.f32 %v2749, %v2858
      %v2906 = vmul.f32 %v2749, %v2862
      %v2907 = vmul.f32 %v2749, %v2866
      %v2908 = vmul.f32 %v2749, %v2870
      %v2909 = vmul.f32 %v2749, %v2874
      %v2910 = vmul.f32 %v2749, %v2878
      %v2911 = vadd.f32 %v2715, %v2879
      %v2912 = vadd.f32 %v2716, %v2880
      %v2913 = vadd.f32 %v2717, %v2881
      %v2914 = vadd.f32 %v2718, %v2882
      %v2915 = vadd.f32 %v2719, %v2883
      %v2916 = vadd.f32 %v2720, %v2884
      %v2917 = vadd.f32 %v2721, %v2885
      %v2918 = vadd.f32 %v2722, %v2886
      %v2919 = vadd.f32 %v2723, %v2887
      %v2920 = vadd.f32 %v2724, %v2888
      %v2921 = vadd.f32 %v2725, %v2889
      %v2922 = vadd.f32 %v2726, %v2890
      %v2923 = vadd.f32 %v2727, %v2891
      %v2924 = vadd.f32 %v2728, %v2892
      %v2925 = vadd.f32 %v2729, %v2893
      %v2926 = vadd.f32 %v2730, %v2894
      %v2927 = vadd.f32 %v2731, %v2895
      %v2928 = vadd.f32 %v2732, %v2896
      %v2929 = vadd.f32 %v2733, %v2897
      %v2930 = vadd.f32 %v2734, %v2898
      %v2931 = vadd.f32 %v2735, %v2899
      %v2932 = vadd.f32 %v2736, %v2900
      %v2933 = vadd.f32 %v2737, %v2901
      %v2934 = vadd.f32 %v2738, %v2902
      %v2935 = vadd.f32 %v2739, %v2903
      %v2936 = vadd.f32 %v2740, %v2904
      %v2937 = vadd.f32 %v2741, %v2905
      %v2938 = vadd.f32 %v2742, %v2906
      %v2939 = vadd.f32 %v2743, %v2907
      %v2940 = vadd.f32 %v2744, %v2908
      %v2941 = vadd.f32 %v2745, %v2909
      %v2942 = vadd.f32 %v2746, %v2910
      %2943 = vset.pattern.permute.xlu0 9
      %2944 = vperm.xlu0 %2943, %v345
      %v2945 = vpop.permute.xlu0 %2944
      %v2947 = vlaneseq
      %v2948 = vshrl.u32 %v2947, 7
      %v2949 = vsub.s32 5, %v2948
      %v2950 = vrot.slane %v313, %v2949
      %v2951 = vlaneseq
      %v2952 = vshrl.u32 %v2951, 7
      %v2953 = vsub.s32 5, %v2952
      %v2954 = vrot.slane %v314, %v2953
      %v2955 = vlaneseq
      %v2956 = vshrl.u32 %v2955, 7
      %v2957 = vsub.s32 5, %v2956
      %v2958 = vrot.slane %v315, %v2957
      %v2959 = vlaneseq
      %v2960 = vshrl.u32 %v2959, 7
      %v2961 = vsub.s32 5, %v2960
      %v2962 = vrot.slane %v316, %v2961
      %v2963 = vlaneseq
      %v2964 = vshrl.u32 %v2963, 7
      %v2965 = vsub.s32 5, %v2964
      %v2966 = vrot.slane %v317, %v2965
      %v2967 = vlaneseq
      %v2968 = vshrl.u32 %v2967, 7
      %v2969 = vsub.s32 5, %v2968
      %v2970 = vrot.slane %v318, %v2969
      %v2971 = vlaneseq
      %v2972 = vshrl.u32 %v2971, 7
      %v2973 = vsub.s32 5, %v2972
      %v2974 = vrot.slane %v319, %v2973
      %v2975 = vlaneseq
      %v2976 = vshrl.u32 %v2975, 7
      %v2977 = vsub.s32 5, %v2976
      %v2978 = vrot.slane %v320, %v2977
      %v2979 = vlaneseq
      %v2980 = vshrl.u32 %v2979, 7
      %v2981 = vsub.s32 5, %v2980
      %v2982 = vrot.slane %v321, %v2981
      %v2983 = vlaneseq
      %v2984 = vshrl.u32 %v2983, 7
      %v2985 = vsub.s32 5, %v2984
      %v2986 = vrot.slane %v322, %v2985
      %v2987 = vlaneseq
      %v2988 = vshrl.u32 %v2987, 7
      %v2989 = vsub.s32 5, %v2988
      %v2990 = vrot.slane %v323, %v2989
      %v2991 = vlaneseq
      %v2992 = vshrl.u32 %v2991, 7
      %v2993 = vsub.s32 5, %v2992
      %v2994 = vrot.slane %v324, %v2993
      %v2995 = vlaneseq
      %v2996 = vshrl.u32 %v2995, 7
      %v2997 = vsub.s32 5, %v2996
      %v2998 = vrot.slane %v325, %v2997
      %v2999 = vlaneseq
      %v3000 = vshrl.u32 %v2999, 7
      %v3001 = vsub.s32 5, %v3000
      %v3002 = vrot.slane %v326, %v3001
      %v3003 = vlaneseq
      %v3004 = vshrl.u32 %v3003, 7
      %v3005 = vsub.s32 5, %v3004
      %v3006 = vrot.slane %v327, %v3005
      %v3007 = vlaneseq
      %v3008 = vshrl.u32 %v3007, 7
      %v3009 = vsub.s32 5, %v3008
      %v3010 = vrot.slane %v328, %v3009
      %v3011 = vlaneseq
      %v3012 = vshrl.u32 %v3011, 7
      %v3013 = vsub.s32 5, %v3012
      %v3014 = vrot.slane %v329, %v3013
      %v3015 = vlaneseq
      %v3016 = vshrl.u32 %v3015, 7
      %v3017 = vsub.s32 5, %v3016
      %v3018 = vrot.slane %v330, %v3017
      %v3019 = vlaneseq
      %v3020 = vshrl.u32 %v3019, 7
      %v3021 = vsub.s32 5, %v3020
      %v3022 = vrot.slane %v331, %v3021
      %v3023 = vlaneseq
      %v3024 = vshrl.u32 %v3023, 7
      %v3025 = vsub.s32 5, %v3024
      %v3026 = vrot.slane %v332, %v3025
      %v3027 = vlaneseq
      %v3028 = vshrl.u32 %v3027, 7
      %v3029 = vsub.s32 5, %v3028
      %v3030 = vrot.slane %v333, %v3029
      %v3031 = vlaneseq
      %v3032 = vshrl.u32 %v3031, 7
      %v3033 = vsub.s32 5, %v3032
      %v3034 = vrot.slane %v334, %v3033
      %v3035 = vlaneseq
      %v3036 = vshrl.u32 %v3035, 7
      %v3037 = vsub.s32 5, %v3036
      %v3038 = vrot.slane %v335, %v3037
      %v3039 = vlaneseq
      %v3040 = vshrl.u32 %v3039, 7
      %v3041 = vsub.s32 5, %v3040
      %v3042 = vrot.slane %v336, %v3041
      %v3043 = vlaneseq
      %v3044 = vshrl.u32 %v3043, 7
      %v3045 = vsub.s32 5, %v3044
      %v3046 = vrot.slane %v337, %v3045
      %v3047 = vlaneseq
      %v3048 = vshrl.u32 %v3047, 7
      %v3049 = vsub.s32 5, %v3048
      %v3050 = vrot.slane %v338, %v3049
      %v3051 = vlaneseq
      %v3052 = vshrl.u32 %v3051, 7
      %v3053 = vsub.s32 5, %v3052
      %v3054 = vrot.slane %v339, %v3053
      %v3055 = vlaneseq
      %v3056 = vshrl.u32 %v3055, 7
      %v3057 = vsub.s32 5, %v3056
      %v3058 = vrot.slane %v340, %v3057
      %v3059 = vlaneseq
      %v3060 = vshrl.u32 %v3059, 7
      %v3061 = vsub.s32 5, %v3060
      %v3062 = vrot.slane %v341, %v3061
      %v3063 = vlaneseq
      %v3064 = vshrl.u32 %v3063, 7
      %v3065 = vsub.s32 5, %v3064
      %v3066 = vrot.slane %v342, %v3065
      %v3067 = vlaneseq
      %v3068 = vshrl.u32 %v3067, 7
      %v3069 = vsub.s32 5, %v3068
      %v3070 = vrot.slane %v343, %v3069
      %v3071 = vlaneseq
      %v3072 = vshrl.u32 %v3071, 7
      %v3073 = vsub.s32 5, %v3072
      %v3074 = vrot.slane %v344, %v3073
      %v3075 = vmul.f32 %v2945, %v2950
      %v3076 = vmul.f32 %v2945, %v2954
      %v3077 = vmul.f32 %v2945, %v2958
      %v3078 = vmul.f32 %v2945, %v2962
      %v3079 = vmul.f32 %v2945, %v2966
      %v3080 = vmul.f32 %v2945, %v2970
      %v3081 = vmul.f32 %v2945, %v2974
      %v3082 = vmul.f32 %v2945, %v2978
      %v3083 = vmul.f32 %v2945, %v2982
      %v3084 = vmul.f32 %v2945, %v2986
      %v3085 = vmul.f32 %v2945, %v2990
      %v3086 = vmul.f32 %v2945, %v2994
      %v3087 = vmul.f32 %v2945, %v2998
      %v3088 = vmul.f32 %v2945, %v3002
      %v3089 = vmul.f32 %v2945, %v3006
      %v3090 = vmul.f32 %v2945, %v3010
      %v3091 = vmul.f32 %v2945, %v3014
      %v3092 = vmul.f32 %v2945, %v3018
      %v3093 = vmul.f32 %v2945, %v3022
      %v3094 = vmul.f32 %v2945, %v3026
      %v3095 = vmul.f32 %v2945, %v3030
      %v3096 = vmul.f32 %v2945, %v3034
      %v3097 = vmul.f32 %v2945, %v3038
      %v3098 = vmul.f32 %v2945, %v3042
      %v3099 = vmul.f32 %v2945, %v3046
      %v3100 = vmul.f32 %v2945, %v3050
      %v3101 = vmul.f32 %v2945, %v3054
      %v3102 = vmul.f32 %v2945, %v3058
      %v3103 = vmul.f32 %v2945, %v3062
      %v3104 = vmul.f32 %v2945, %v3066
      %v3105 = vmul.f32 %v2945, %v3070
      %v3106 = vmul.f32 %v2945, %v3074
      %v3107 = vadd.f32 %v2911, %v3075
      %v3108 = vadd.f32 %v2912, %v3076
      %v3109 = vadd.f32 %v2913, %v3077
      %v3110 = vadd.f32 %v2914, %v3078
      %v3111 = vadd.f32 %v2915, %v3079
      %v3112 = vadd.f32 %v2916, %v3080
      %v3113 = vadd.f32 %v2917, %v3081
      %v3114 = vadd.f32 %v2918, %v3082
      %v3115 = vadd.f32 %v2919, %v3083
      %v3116 = vadd.f32 %v2920, %v3084
      %v3117 = vadd.f32 %v2921, %v3085
      %v3118 = vadd.f32 %v2922, %v3086
      %v3119 = vadd.f32 %v2923, %v3087
      %v3120 = vadd.f32 %v2924, %v3088
      %v3121 = vadd.f32 %v2925, %v3089
      %v3122 = vadd.f32 %v2926, %v3090
      %v3123 = vadd.f32 %v2927, %v3091
      %v3124 = vadd.f32 %v2928, %v3092
      %v3125 = vadd.f32 %v2929, %v3093
      %v3126 = vadd.f32 %v2930, %v3094
      %v3127 = vadd.f32 %v2931, %v3095
      %v3128 = vadd.f32 %v2932, %v3096
      %v3129 = vadd.f32 %v2933, %v3097
      %v3130 = vadd.f32 %v2934, %v3098
      %v3131 = vadd.f32 %v2935, %v3099
      %v3132 = vadd.f32 %v2936, %v3100
      %v3133 = vadd.f32 %v2937, %v3101
      %v3134 = vadd.f32 %v2938, %v3102
      %v3135 = vadd.f32 %v2939, %v3103
      %v3136 = vadd.f32 %v2940, %v3104
      %v3137 = vadd.f32 %v2941, %v3105
      %v3138 = vadd.f32 %v2942, %v3106
      %3139 = vset.pattern.permute.xlu0 10
      %3140 = vperm.xlu0 %3139, %v345
      %v3141 = vpop.permute.xlu0 %3140
      %v3143 = vlaneseq
      %v3144 = vshrl.u32 %v3143, 7
      %v3145 = vsub.s32 6, %v3144
      %v3146 = vrot.slane %v313, %v3145
      %v3147 = vlaneseq
      %v3148 = vshrl.u32 %v3147, 7
      %v3149 = vsub.s32 6, %v3148
      %v3150 = vrot.slane %v314, %v3149
      %v3151 = vlaneseq
      %v3152 = vshrl.u32 %v3151, 7
      %v3153 = vsub.s32 6, %v3152
      %v3154 = vrot.slane %v315, %v3153
      %v3155 = vlaneseq
      %v3156 = vshrl.u32 %v3155, 7
      %v3157 = vsub.s32 6, %v3156
      %v3158 = vrot.slane %v316, %v3157
      %v3159 = vlaneseq
      %v3160 = vshrl.u32 %v3159, 7
      %v3161 = vsub.s32 6, %v3160
      %v3162 = vrot.slane %v317, %v3161
      %v3163 = vlaneseq
      %v3164 = vshrl.u32 %v3163, 7
      %v3165 = vsub.s32 6, %v3164
      %v3166 = vrot.slane %v318, %v3165
      %v3167 = vlaneseq
      %v3168 = vshrl.u32 %v3167, 7
      %v3169 = vsub.s32 6, %v3168
      %v3170 = vrot.slane %v319, %v3169
      %v3171 = vlaneseq
      %v3172 = vshrl.u32 %v3171, 7
      %v3173 = vsub.s32 6, %v3172
      %v3174 = vrot.slane %v320, %v3173
      %v3175 = vlaneseq
      %v3176 = vshrl.u32 %v3175, 7
      %v3177 = vsub.s32 6, %v3176
      %v3178 = vrot.slane %v321, %v3177
      %v3179 = vlaneseq
      %v3180 = vshrl.u32 %v3179, 7
      %v3181 = vsub.s32 6, %v3180
      %v3182 = vrot.slane %v322, %v3181
      %v3183 = vlaneseq
      %v3184 = vshrl.u32 %v3183, 7
      %v3185 = vsub.s32 6, %v3184
      %v3186 = vrot.slane %v323, %v3185
      %v3187 = vlaneseq
      %v3188 = vshrl.u32 %v3187, 7
      %v3189 = vsub.s32 6, %v3188
      %v3190 = vrot.slane %v324, %v3189
      %v3191 = vlaneseq
      %v3192 = vshrl.u32 %v3191, 7
      %v3193 = vsub.s32 6, %v3192
      %v3194 = vrot.slane %v325, %v3193
      %v3195 = vlaneseq
      %v3196 = vshrl.u32 %v3195, 7
      %v3197 = vsub.s32 6, %v3196
      %v3198 = vrot.slane %v326, %v3197
      %v3199 = vlaneseq
      %v3200 = vshrl.u32 %v3199, 7
      %v3201 = vsub.s32 6, %v3200
      %v3202 = vrot.slane %v327, %v3201
      %v3203 = vlaneseq
      %v3204 = vshrl.u32 %v3203, 7
      %v3205 = vsub.s32 6, %v3204
      %v3206 = vrot.slane %v328, %v3205
      %v3207 = vlaneseq
      %v3208 = vshrl.u32 %v3207, 7
      %v3209 = vsub.s32 6, %v3208
      %v3210 = vrot.slane %v329, %v3209
      %v3211 = vlaneseq
      %v3212 = vshrl.u32 %v3211, 7
      %v3213 = vsub.s32 6, %v3212
      %v3214 = vrot.slane %v330, %v3213
      %v3215 = vlaneseq
      %v3216 = vshrl.u32 %v3215, 7
      %v3217 = vsub.s32 6, %v3216
      %v3218 = vrot.slane %v331, %v3217
      %v3219 = vlaneseq
      %v3220 = vshrl.u32 %v3219, 7
      %v3221 = vsub.s32 6, %v3220
      %v3222 = vrot.slane %v332, %v3221
      %v3223 = vlaneseq
      %v3224 = vshrl.u32 %v3223, 7
      %v3225 = vsub.s32 6, %v3224
      %v3226 = vrot.slane %v333, %v3225
      %v3227 = vlaneseq
      %v3228 = vshrl.u32 %v3227, 7
      %v3229 = vsub.s32 6, %v3228
      %v3230 = vrot.slane %v334, %v3229
      %v3231 = vlaneseq
      %v3232 = vshrl.u32 %v3231, 7
      %v3233 = vsub.s32 6, %v3232
      %v3234 = vrot.slane %v335, %v3233
      %v3235 = vlaneseq
      %v3236 = vshrl.u32 %v3235, 7
      %v3237 = vsub.s32 6, %v3236
      %v3238 = vrot.slane %v336, %v3237
      %v3239 = vlaneseq
      %v3240 = vshrl.u32 %v3239, 7
      %v3241 = vsub.s32 6, %v3240
      %v3242 = vrot.slane %v337, %v3241
      %v3243 = vlaneseq
      %v3244 = vshrl.u32 %v3243, 7
      %v3245 = vsub.s32 6, %v3244
      %v3246 = vrot.slane %v338, %v3245
      %v3247 = vlaneseq
      %v3248 = vshrl.u32 %v3247, 7
      %v3249 = vsub.s32 6, %v3248
      %v3250 = vrot.slane %v339, %v3249
      %v3251 = vlaneseq
      %v3252 = vshrl.u32 %v3251, 7
      %v3253 = vsub.s32 6, %v3252
      %v3254 = vrot.slane %v340, %v3253
      %v3255 = vlaneseq
      %v3256 = vshrl.u32 %v3255, 7
      %v3257 = vsub.s32 6, %v3256
      %v3258 = vrot.slane %v341, %v3257
      %v3259 = vlaneseq
      %v3260 = vshrl.u32 %v3259, 7
      %v3261 = vsub.s32 6, %v3260
      %v3262 = vrot.slane %v342, %v3261
      %v3263 = vlaneseq
      %v3264 = vshrl.u32 %v3263, 7
      %v3265 = vsub.s32 6, %v3264
      %v3266 = vrot.slane %v343, %v3265
      %v3267 = vlaneseq
      %v3268 = vshrl.u32 %v3267, 7
      %v3269 = vsub.s32 6, %v3268
      %v3270 = vrot.slane %v344, %v3269
      %v3271 = vmul.f32 %v3141, %v3146
      %v3272 = vmul.f32 %v3141, %v3150
      %v3273 = vmul.f32 %v3141, %v3154
      %v3274 = vmul.f32 %v3141, %v3158
      %v3275 = vmul.f32 %v3141, %v3162
      %v3276 = vmul.f32 %v3141, %v3166
      %v3277 = vmul.f32 %v3141, %v3170
      %v3278 = vmul.f32 %v3141, %v3174
      %v3279 = vmul.f32 %v3141, %v3178
      %v3280 = vmul.f32 %v3141, %v3182
      %v3281 = vmul.f32 %v3141, %v3186
      %v3282 = vmul.f32 %v3141, %v3190
      %v3283 = vmul.f32 %v3141, %v3194
      %v3284 = vmul.f32 %v3141, %v3198
      %v3285 = vmul.f32 %v3141, %v3202
      %v3286 = vmul.f32 %v3141, %v3206
      %v3287 = vmul.f32 %v3141, %v3210
      %v3288 = vmul.f32 %v3141, %v3214
      %v3289 = vmul.f32 %v3141, %v3218
      %v3290 = vmul.f32 %v3141, %v3222
      %v3291 = vmul.f32 %v3141, %v3226
      %v3292 = vmul.f32 %v3141, %v3230
      %v3293 = vmul.f32 %v3141, %v3234
      %v3294 = vmul.f32 %v3141, %v3238
      %v3295 = vmul.f32 %v3141, %v3242
      %v3296 = vmul.f32 %v3141, %v3246
      %v3297 = vmul.f32 %v3141, %v3250
      %v3298 = vmul.f32 %v3141, %v3254
      %v3299 = vmul.f32 %v3141, %v3258
      %v3300 = vmul.f32 %v3141, %v3262
      %v3301 = vmul.f32 %v3141, %v3266
      %v3302 = vmul.f32 %v3141, %v3270
      %v3303 = vadd.f32 %v3107, %v3271
      %v3304 = vadd.f32 %v3108, %v3272
      %v3305 = vadd.f32 %v3109, %v3273
      %v3306 = vadd.f32 %v3110, %v3274
      %v3307 = vadd.f32 %v3111, %v3275
      %v3308 = vadd.f32 %v3112, %v3276
      %v3309 = vadd.f32 %v3113, %v3277
      %v3310 = vadd.f32 %v3114, %v3278
      %v3311 = vadd.f32 %v3115, %v3279
      %v3312 = vadd.f32 %v3116, %v3280
      %v3313 = vadd.f32 %v3117, %v3281
      %v3314 = vadd.f32 %v3118, %v3282
      %v3315 = vadd.f32 %v3119, %v3283
      %v3316 = vadd.f32 %v3120, %v3284
      %v3317 = vadd.f32 %v3121, %v3285
      %v3318 = vadd.f32 %v3122, %v3286
      %v3319 = vadd.f32 %v3123, %v3287
      %v3320 = vadd.f32 %v3124, %v3288
      %v3321 = vadd.f32 %v3125, %v3289
      %v3322 = vadd.f32 %v3126, %v3290
      %v3323 = vadd.f32 %v3127, %v3291
      %v3324 = vadd.f32 %v3128, %v3292
      %v3325 = vadd.f32 %v3129, %v3293
      %v3326 = vadd.f32 %v3130, %v3294
      %v3327 = vadd.f32 %v3131, %v3295
      %v3328 = vadd.f32 %v3132, %v3296
      %v3329 = vadd.f32 %v3133, %v3297
      %v3330 = vadd.f32 %v3134, %v3298
      %v3331 = vadd.f32 %v3135, %v3299
      %v3332 = vadd.f32 %v3136, %v3300
      %v3333 = vadd.f32 %v3137, %v3301
      %v3334 = vadd.f32 %v3138, %v3302
      %3335 = vset.pattern.permute.xlu0 11
      %3336 = vperm.xlu0 %3335, %v345
      %v3337 = vpop.permute.xlu0 %3336
      %v3339 = vlaneseq
      %v3340 = vshrl.u32 %v3339, 7
      %v3341 = vsub.s32 7, %v3340
      %v3342 = vrot.slane %v313, %v3341
      %v3343 = vlaneseq
      %v3344 = vshrl.u32 %v3343, 7
      %v3345 = vsub.s32 7, %v3344
      %v3346 = vrot.slane %v314, %v3345
      %v3347 = vlaneseq
      %v3348 = vshrl.u32 %v3347, 7
      %v3349 = vsub.s32 7, %v3348
      %v3350 = vrot.slane %v315, %v3349
      %v3351 = vlaneseq
      %v3352 = vshrl.u32 %v3351, 7
      %v3353 = vsub.s32 7, %v3352
      %v3354 = vrot.slane %v316, %v3353
      %v3355 = vlaneseq
      %v3356 = vshrl.u32 %v3355, 7
      %v3357 = vsub.s32 7, %v3356
      %v3358 = vrot.slane %v317, %v3357
      %v3359 = vlaneseq
      %v3360 = vshrl.u32 %v3359, 7
      %v3361 = vsub.s32 7, %v3360
      %v3362 = vrot.slane %v318, %v3361
      %v3363 = vlaneseq
      %v3364 = vshrl.u32 %v3363, 7
      %v3365 = vsub.s32 7, %v3364
      %v3366 = vrot.slane %v319, %v3365
      %v3367 = vlaneseq
      %v3368 = vshrl.u32 %v3367, 7
      %v3369 = vsub.s32 7, %v3368
      %v3370 = vrot.slane %v320, %v3369
      %v3371 = vlaneseq
      %v3372 = vshrl.u32 %v3371, 7
      %v3373 = vsub.s32 7, %v3372
      %v3374 = vrot.slane %v321, %v3373
      %v3375 = vlaneseq
      %v3376 = vshrl.u32 %v3375, 7
      %v3377 = vsub.s32 7, %v3376
      %v3378 = vrot.slane %v322, %v3377
      %v3379 = vlaneseq
      %v3380 = vshrl.u32 %v3379, 7
      %v3381 = vsub.s32 7, %v3380
      %v3382 = vrot.slane %v323, %v3381
      %v3383 = vlaneseq
      %v3384 = vshrl.u32 %v3383, 7
      %v3385 = vsub.s32 7, %v3384
      %v3386 = vrot.slane %v324, %v3385
      %v3387 = vlaneseq
      %v3388 = vshrl.u32 %v3387, 7
      %v3389 = vsub.s32 7, %v3388
      %v3390 = vrot.slane %v325, %v3389
      %v3391 = vlaneseq
      %v3392 = vshrl.u32 %v3391, 7
      %v3393 = vsub.s32 7, %v3392
      %v3394 = vrot.slane %v326, %v3393
      %v3395 = vlaneseq
      %v3396 = vshrl.u32 %v3395, 7
      %v3397 = vsub.s32 7, %v3396
      %v3398 = vrot.slane %v327, %v3397
      %v3399 = vlaneseq
      %v3400 = vshrl.u32 %v3399, 7
      %v3401 = vsub.s32 7, %v3400
      %v3402 = vrot.slane %v328, %v3401
      %v3403 = vlaneseq
      %v3404 = vshrl.u32 %v3403, 7
      %v3405 = vsub.s32 7, %v3404
      %v3406 = vrot.slane %v329, %v3405
      %v3407 = vlaneseq
      %v3408 = vshrl.u32 %v3407, 7
      %v3409 = vsub.s32 7, %v3408
      %v3410 = vrot.slane %v330, %v3409
      %v3411 = vlaneseq
      %v3412 = vshrl.u32 %v3411, 7
      %v3413 = vsub.s32 7, %v3412
      %v3414 = vrot.slane %v331, %v3413
      %v3415 = vlaneseq
      %v3416 = vshrl.u32 %v3415, 7
      %v3417 = vsub.s32 7, %v3416
      %v3418 = vrot.slane %v332, %v3417
      %v3419 = vlaneseq
      %v3420 = vshrl.u32 %v3419, 7
      %v3421 = vsub.s32 7, %v3420
      %v3422 = vrot.slane %v333, %v3421
      %v3423 = vlaneseq
      %v3424 = vshrl.u32 %v3423, 7
      %v3425 = vsub.s32 7, %v3424
      %v3426 = vrot.slane %v334, %v3425
      %v3427 = vlaneseq
      %v3428 = vshrl.u32 %v3427, 7
      %v3429 = vsub.s32 7, %v3428
      %v3430 = vrot.slane %v335, %v3429
      %v3431 = vlaneseq
      %v3432 = vshrl.u32 %v3431, 7
      %v3433 = vsub.s32 7, %v3432
      %v3434 = vrot.slane %v336, %v3433
      %v3435 = vlaneseq
      %v3436 = vshrl.u32 %v3435, 7
      %v3437 = vsub.s32 7, %v3436
      %v3438 = vrot.slane %v337, %v3437
      %v3439 = vlaneseq
      %v3440 = vshrl.u32 %v3439, 7
      %v3441 = vsub.s32 7, %v3440
      %v3442 = vrot.slane %v338, %v3441
      %v3443 = vlaneseq
      %v3444 = vshrl.u32 %v3443, 7
      %v3445 = vsub.s32 7, %v3444
      %v3446 = vrot.slane %v339, %v3445
      %v3447 = vlaneseq
      %v3448 = vshrl.u32 %v3447, 7
      %v3449 = vsub.s32 7, %v3448
      %v3450 = vrot.slane %v340, %v3449
      %v3451 = vlaneseq
      %v3452 = vshrl.u32 %v3451, 7
      %v3453 = vsub.s32 7, %v3452
      %v3454 = vrot.slane %v341, %v3453
      %v3455 = vlaneseq
      %v3456 = vshrl.u32 %v3455, 7
      %v3457 = vsub.s32 7, %v3456
      %v3458 = vrot.slane %v342, %v3457
      %v3459 = vlaneseq
      %v3460 = vshrl.u32 %v3459, 7
      %v3461 = vsub.s32 7, %v3460
      %v3462 = vrot.slane %v343, %v3461
      %v3463 = vlaneseq
      %v3464 = vshrl.u32 %v3463, 7
      %v3465 = vsub.s32 7, %v3464
      %v3466 = vrot.slane %v344, %v3465
      %v3467 = vmul.f32 %v3337, %v3342
      %v3468 = vmul.f32 %v3337, %v3346
      %v3469 = vmul.f32 %v3337, %v3350
      %v3470 = vmul.f32 %v3337, %v3354
      %v3471 = vmul.f32 %v3337, %v3358
      %v3472 = vmul.f32 %v3337, %v3362
      %v3473 = vmul.f32 %v3337, %v3366
      %v3474 = vmul.f32 %v3337, %v3370
      %v3475 = vmul.f32 %v3337, %v3374
      %v3476 = vmul.f32 %v3337, %v3378
      %v3477 = vmul.f32 %v3337, %v3382
      %v3478 = vmul.f32 %v3337, %v3386
      %v3479 = vmul.f32 %v3337, %v3390
      %v3480 = vmul.f32 %v3337, %v3394
      %v3481 = vmul.f32 %v3337, %v3398
      %v3482 = vmul.f32 %v3337, %v3402
      %v3483 = vmul.f32 %v3337, %v3406
      %v3484 = vmul.f32 %v3337, %v3410
      %v3485 = vmul.f32 %v3337, %v3414
      %v3486 = vmul.f32 %v3337, %v3418
      %v3487 = vmul.f32 %v3337, %v3422
      %v3488 = vmul.f32 %v3337, %v3426
      %v3489 = vmul.f32 %v3337, %v3430
      %v3490 = vmul.f32 %v3337, %v3434
      %v3491 = vmul.f32 %v3337, %v3438
      %v3492 = vmul.f32 %v3337, %v3442
      %v3493 = vmul.f32 %v3337, %v3446
      %v3494 = vmul.f32 %v3337, %v3450
      %v3495 = vmul.f32 %v3337, %v3454
      %v3496 = vmul.f32 %v3337, %v3458
      %v3497 = vmul.f32 %v3337, %v3462
      %v3498 = vmul.f32 %v3337, %v3466
      %v3499 = vadd.f32 %v3303, %v3467
      %v3500 = vadd.f32 %v3304, %v3468
      %v3501 = vadd.f32 %v3305, %v3469
      %v3502 = vadd.f32 %v3306, %v3470
      %v3503 = vadd.f32 %v3307, %v3471
      %v3504 = vadd.f32 %v3308, %v3472
      %v3505 = vadd.f32 %v3309, %v3473
      %v3506 = vadd.f32 %v3310, %v3474
      %v3507 = vadd.f32 %v3311, %v3475
      %v3508 = vadd.f32 %v3312, %v3476
      %v3509 = vadd.f32 %v3313, %v3477
      %v3510 = vadd.f32 %v3314, %v3478
      %v3511 = vadd.f32 %v3315, %v3479
      %v3512 = vadd.f32 %v3316, %v3480
      %v3513 = vadd.f32 %v3317, %v3481
      %v3514 = vadd.f32 %v3318, %v3482
      %v3515 = vadd.f32 %v3319, %v3483
      %v3516 = vadd.f32 %v3320, %v3484
      %v3517 = vadd.f32 %v3321, %v3485
      %v3518 = vadd.f32 %v3322, %v3486
      %v3519 = vadd.f32 %v3323, %v3487
      %v3520 = vadd.f32 %v3324, %v3488
      %v3521 = vadd.f32 %v3325, %v3489
      %v3522 = vadd.f32 %v3326, %v3490
      %v3523 = vadd.f32 %v3327, %v3491
      %v3524 = vadd.f32 %v3328, %v3492
      %v3525 = vadd.f32 %v3329, %v3493
      %v3526 = vadd.f32 %v3330, %v3494
      %v3527 = vadd.f32 %v3331, %v3495
      %v3528 = vadd.f32 %v3332, %v3496
      %v3529 = vadd.f32 %v3333, %v3497
      %v3530 = vadd.f32 %v3334, %v3498
      %v3531 = vadd.f32 %v1895, %v3499
      %v3532 = vadd.f32 %v1896, %v3500
      %v3533 = vadd.f32 %v1897, %v3501
      %v3534 = vadd.f32 %v1898, %v3502
      %v3535 = vadd.f32 %v1899, %v3503
      %v3536 = vadd.f32 %v1900, %v3504
      %v3537 = vadd.f32 %v1901, %v3505
      %v3538 = vadd.f32 %v1902, %v3506
      %v3539 = vadd.f32 %v1903, %v3507
      %v3540 = vadd.f32 %v1904, %v3508
      %v3541 = vadd.f32 %v1905, %v3509
      %v3542 = vadd.f32 %v1906, %v3510
      %v3543 = vadd.f32 %v1907, %v3511
      %v3544 = vadd.f32 %v1908, %v3512
      %v3545 = vadd.f32 %v1909, %v3513
      %v3546 = vadd.f32 %v1910, %v3514
      %v3547 = vadd.f32 %v1911, %v3515
      %v3548 = vadd.f32 %v1912, %v3516
      %v3549 = vadd.f32 %v1913, %v3517
      %v3550 = vadd.f32 %v1914, %v3518
      %v3551 = vadd.f32 %v1915, %v3519
      %v3552 = vadd.f32 %v1916, %v3520
      %v3553 = vadd.f32 %v1917, %v3521
      %v3554 = vadd.f32 %v1918, %v3522
      %v3555 = vadd.f32 %v1919, %v3523
      %v3556 = vadd.f32 %v1920, %v3524
      %v3557 = vadd.f32 %v1921, %v3525
      %v3558 = vadd.f32 %v1922, %v3526
      %v3559 = vadd.f32 %v1923, %v3527
      %v3560 = vadd.f32 %v1924, %v3528
      %v3561 = vadd.f32 %v1925, %v3529
      %v3562 = vadd.f32 %v1926, %v3530
      %3563 = vset.pattern.permute.xlu0 17
      %3564 = vperm.xlu0 %3563, %v345
      %v3565 = vpop.permute.xlu0 %3564
      %v3567 = vadd.f32 %v3531, %v3565
      %v3568 = vadd.f32 %v3532, %v3565
      %v3569 = vadd.f32 %v3533, %v3565
      %v3570 = vadd.f32 %v3534, %v3565
      %v3571 = vadd.f32 %v3535, %v3565
      %v3572 = vadd.f32 %v3536, %v3565
      %v3573 = vadd.f32 %v3537, %v3565
      %v3574 = vadd.f32 %v3538, %v3565
      %v3575 = vadd.f32 %v3539, %v3565
      %v3576 = vadd.f32 %v3540, %v3565
      %v3577 = vadd.f32 %v3541, %v3565
      %v3578 = vadd.f32 %v3542, %v3565
      %v3579 = vadd.f32 %v3543, %v3565
      %v3580 = vadd.f32 %v3544, %v3565
      %v3581 = vadd.f32 %v3545, %v3565
      %v3582 = vadd.f32 %v3546, %v3565
      %v3583 = vadd.f32 %v3547, %v3565
      %v3584 = vadd.f32 %v3548, %v3565
      %v3585 = vadd.f32 %v3549, %v3565
      %v3586 = vadd.f32 %v3550, %v3565
      %v3587 = vadd.f32 %v3551, %v3565
      %v3588 = vadd.f32 %v3552, %v3565
      %v3589 = vadd.f32 %v3553, %v3565
      %v3590 = vadd.f32 %v3554, %v3565
      %v3591 = vadd.f32 %v3555, %v3565
      %v3592 = vadd.f32 %v3556, %v3565
      %v3593 = vadd.f32 %v3557, %v3565
      %v3594 = vadd.f32 %v3558, %v3565
      %v3595 = vadd.f32 %v3559, %v3565
      %v3596 = vadd.f32 %v3560, %v3565
      %v3597 = vadd.f32 %v3561, %v3565
      %v3598 = vadd.f32 %v3562, %v3565
      %v3599 = vmax.f32 %v3567, 0.0
      %v3600 = vmax.f32 %v3568, 0.0
      %v3601 = vmax.f32 %v3569, 0.0
      %v3602 = vmax.f32 %v3570, 0.0
      %v3603 = vmax.f32 %v3571, 0.0
      %v3604 = vmax.f32 %v3572, 0.0
      %v3605 = vmax.f32 %v3573, 0.0
      %v3606 = vmax.f32 %v3574, 0.0
      %v3607 = vmax.f32 %v3575, 0.0
      %v3608 = vmax.f32 %v3576, 0.0
      %v3609 = vmax.f32 %v3577, 0.0
      %v3610 = vmax.f32 %v3578, 0.0
      %v3611 = vmax.f32 %v3579, 0.0
      %v3612 = vmax.f32 %v3580, 0.0
      %v3613 = vmax.f32 %v3581, 0.0
      %v3614 = vmax.f32 %v3582, 0.0
      %v3615 = vmax.f32 %v3583, 0.0
      %v3616 = vmax.f32 %v3584, 0.0
      %v3617 = vmax.f32 %v3585, 0.0
      %v3618 = vmax.f32 %v3586, 0.0
      %v3619 = vmax.f32 %v3587, 0.0
      %v3620 = vmax.f32 %v3588, 0.0
      %v3621 = vmax.f32 %v3589, 0.0
      %v3622 = vmax.f32 %v3590, 0.0
      %v3623 = vmax.f32 %v3591, 0.0
      %v3624 = vmax.f32 %v3592, 0.0
      %v3625 = vmax.f32 %v3593, 0.0
      %v3626 = vmax.f32 %v3594, 0.0
      %v3627 = vmax.f32 %v3595, 0.0
      %v3628 = vmax.f32 %v3596, 0.0
      %v3629 = vmax.f32 %v3597, 0.0
      %v3630 = vmax.f32 %v3598, 0.0
      %3631 = vset.pattern.permute.xlu0 12
      %3632 = vperm.xlu0 %3631, %v345
      %v3633 = vpop.permute.xlu0 %3632
      %v3635 = vmul.f32 %v3599, %v3633
      %v3636 = vmul.f32 %v3600, %v3633
      %v3637 = vmul.f32 %v3601, %v3633
      %v3638 = vmul.f32 %v3602, %v3633
      %v3639 = vmul.f32 %v3603, %v3633
      %v3640 = vmul.f32 %v3604, %v3633
      %v3641 = vmul.f32 %v3605, %v3633
      %v3642 = vmul.f32 %v3606, %v3633
      %v3643 = vmul.f32 %v3607, %v3633
      %v3644 = vmul.f32 %v3608, %v3633
      %v3645 = vmul.f32 %v3609, %v3633
      %v3646 = vmul.f32 %v3610, %v3633
      %v3647 = vmul.f32 %v3611, %v3633
      %v3648 = vmul.f32 %v3612, %v3633
      %v3649 = vmul.f32 %v3613, %v3633
      %v3650 = vmul.f32 %v3614, %v3633
      %v3651 = vmul.f32 %v3615, %v3633
      %v3652 = vmul.f32 %v3616, %v3633
      %v3653 = vmul.f32 %v3617, %v3633
      %v3654 = vmul.f32 %v3618, %v3633
      %v3655 = vmul.f32 %v3619, %v3633
      %v3656 = vmul.f32 %v3620, %v3633
      %v3657 = vmul.f32 %v3621, %v3633
      %v3658 = vmul.f32 %v3622, %v3633
      %v3659 = vmul.f32 %v3623, %v3633
      %v3660 = vmul.f32 %v3624, %v3633
      %v3661 = vmul.f32 %v3625, %v3633
      %v3662 = vmul.f32 %v3626, %v3633
      %v3663 = vmul.f32 %v3627, %v3633
      %v3664 = vmul.f32 %v3628, %v3633
      %v3665 = vmul.f32 %v3629, %v3633
      %v3666 = vmul.f32 %v3630, %v3633
      %v3667 = vrot.slane %v3635, 4
      %v3668 = vrot.slane %v3636, 4
      %v3669 = vrot.slane %v3637, 4
      %v3670 = vrot.slane %v3638, 4
      %v3671 = vrot.slane %v3639, 4
      %v3672 = vrot.slane %v3640, 4
      %v3673 = vrot.slane %v3641, 4
      %v3674 = vrot.slane %v3642, 4
      %v3675 = vrot.slane %v3643, 4
      %v3676 = vrot.slane %v3644, 4
      %v3677 = vrot.slane %v3645, 4
      %v3678 = vrot.slane %v3646, 4
      %v3679 = vrot.slane %v3647, 4
      %v3680 = vrot.slane %v3648, 4
      %v3681 = vrot.slane %v3649, 4
      %v3682 = vrot.slane %v3650, 4
      %v3683 = vrot.slane %v3651, 4
      %v3684 = vrot.slane %v3652, 4
      %v3685 = vrot.slane %v3653, 4
      %v3686 = vrot.slane %v3654, 4
      %v3687 = vrot.slane %v3655, 4
      %v3688 = vrot.slane %v3656, 4
      %v3689 = vrot.slane %v3657, 4
      %v3690 = vrot.slane %v3658, 4
      %v3691 = vrot.slane %v3659, 4
      %v3692 = vrot.slane %v3660, 4
      %v3693 = vrot.slane %v3661, 4
      %v3694 = vrot.slane %v3662, 4
      %v3695 = vrot.slane %v3663, 4
      %v3696 = vrot.slane %v3664, 4
      %v3697 = vrot.slane %v3665, 4
      %v3698 = vrot.slane %v3666, 4
      %v3699 = vadd.f32 %v3635, %v3667
      %v3700 = vadd.f32 %v3636, %v3668
      %v3701 = vadd.f32 %v3637, %v3669
      %v3702 = vadd.f32 %v3638, %v3670
      %v3703 = vadd.f32 %v3639, %v3671
      %v3704 = vadd.f32 %v3640, %v3672
      %v3705 = vadd.f32 %v3641, %v3673
      %v3706 = vadd.f32 %v3642, %v3674
      %v3707 = vadd.f32 %v3643, %v3675
      %v3708 = vadd.f32 %v3644, %v3676
      %v3709 = vadd.f32 %v3645, %v3677
      %v3710 = vadd.f32 %v3646, %v3678
      %v3711 = vadd.f32 %v3647, %v3679
      %v3712 = vadd.f32 %v3648, %v3680
      %v3713 = vadd.f32 %v3649, %v3681
      %v3714 = vadd.f32 %v3650, %v3682
      %v3715 = vadd.f32 %v3651, %v3683
      %v3716 = vadd.f32 %v3652, %v3684
      %v3717 = vadd.f32 %v3653, %v3685
      %v3718 = vadd.f32 %v3654, %v3686
      %v3719 = vadd.f32 %v3655, %v3687
      %v3720 = vadd.f32 %v3656, %v3688
      %v3721 = vadd.f32 %v3657, %v3689
      %v3722 = vadd.f32 %v3658, %v3690
      %v3723 = vadd.f32 %v3659, %v3691
      %v3724 = vadd.f32 %v3660, %v3692
      %v3725 = vadd.f32 %v3661, %v3693
      %v3726 = vadd.f32 %v3662, %v3694
      %v3727 = vadd.f32 %v3663, %v3695
      %v3728 = vadd.f32 %v3664, %v3696
      %v3729 = vadd.f32 %v3665, %v3697
      %v3730 = vadd.f32 %v3666, %v3698
      %v3731 = vrot.slane %v3699, 6
      %v3732 = vrot.slane %v3700, 6
      %v3733 = vrot.slane %v3701, 6
      %v3734 = vrot.slane %v3702, 6
      %v3735 = vrot.slane %v3703, 6
      %v3736 = vrot.slane %v3704, 6
      %v3737 = vrot.slane %v3705, 6
      %v3738 = vrot.slane %v3706, 6
      %v3739 = vrot.slane %v3707, 6
      %v3740 = vrot.slane %v3708, 6
      %v3741 = vrot.slane %v3709, 6
      %v3742 = vrot.slane %v3710, 6
      %v3743 = vrot.slane %v3711, 6
      %v3744 = vrot.slane %v3712, 6
      %v3745 = vrot.slane %v3713, 6
      %v3746 = vrot.slane %v3714, 6
      %v3747 = vrot.slane %v3715, 6
      %v3748 = vrot.slane %v3716, 6
      %v3749 = vrot.slane %v3717, 6
      %v3750 = vrot.slane %v3718, 6
      %v3751 = vrot.slane %v3719, 6
      %v3752 = vrot.slane %v3720, 6
      %v3753 = vrot.slane %v3721, 6
      %v3754 = vrot.slane %v3722, 6
      %v3755 = vrot.slane %v3723, 6
      %v3756 = vrot.slane %v3724, 6
      %v3757 = vrot.slane %v3725, 6
      %v3758 = vrot.slane %v3726, 6
      %v3759 = vrot.slane %v3727, 6
      %v3760 = vrot.slane %v3728, 6
      %v3761 = vrot.slane %v3729, 6
      %v3762 = vrot.slane %v3730, 6
      %v3763 = vadd.f32 %v3699, %v3731
      %v3764 = vadd.f32 %v3700, %v3732
      %v3765 = vadd.f32 %v3701, %v3733
      %v3766 = vadd.f32 %v3702, %v3734
      %v3767 = vadd.f32 %v3703, %v3735
      %v3768 = vadd.f32 %v3704, %v3736
      %v3769 = vadd.f32 %v3705, %v3737
      %v3770 = vadd.f32 %v3706, %v3738
      %v3771 = vadd.f32 %v3707, %v3739
      %v3772 = vadd.f32 %v3708, %v3740
      %v3773 = vadd.f32 %v3709, %v3741
      %v3774 = vadd.f32 %v3710, %v3742
      %v3775 = vadd.f32 %v3711, %v3743
      %v3776 = vadd.f32 %v3712, %v3744
      %v3777 = vadd.f32 %v3713, %v3745
      %v3778 = vadd.f32 %v3714, %v3746
      %v3779 = vadd.f32 %v3715, %v3747
      %v3780 = vadd.f32 %v3716, %v3748
      %v3781 = vadd.f32 %v3717, %v3749
      %v3782 = vadd.f32 %v3718, %v3750
      %v3783 = vadd.f32 %v3719, %v3751
      %v3784 = vadd.f32 %v3720, %v3752
      %v3785 = vadd.f32 %v3721, %v3753
      %v3786 = vadd.f32 %v3722, %v3754
      %v3787 = vadd.f32 %v3723, %v3755
      %v3788 = vadd.f32 %v3724, %v3756
      %v3789 = vadd.f32 %v3725, %v3757
      %v3790 = vadd.f32 %v3726, %v3758
      %v3791 = vadd.f32 %v3727, %v3759
      %v3792 = vadd.f32 %v3728, %v3760
      %v3793 = vadd.f32 %v3729, %v3761
      %v3794 = vadd.f32 %v3730, %v3762
      %3795 = vset.pattern.permute.xlu0 18
      %3796 = vperm.xlu0 %3795, %v345
      %v3797 = vpop.permute.xlu0 %3796
      %v3799 = vadd.f32 %v3763, %v3797
      %v3800 = vadd.f32 %v3764, %v3797
      %v3801 = vadd.f32 %v3765, %v3797
      %v3802 = vadd.f32 %v3766, %v3797
      %v3803 = vadd.f32 %v3767, %v3797
      %v3804 = vadd.f32 %v3768, %v3797
      %v3805 = vadd.f32 %v3769, %v3797
      %v3806 = vadd.f32 %v3770, %v3797
      %v3807 = vadd.f32 %v3771, %v3797
      %v3808 = vadd.f32 %v3772, %v3797
      %v3809 = vadd.f32 %v3773, %v3797
      %v3810 = vadd.f32 %v3774, %v3797
      %v3811 = vadd.f32 %v3775, %v3797
      %v3812 = vadd.f32 %v3776, %v3797
      %v3813 = vadd.f32 %v3777, %v3797
      %v3814 = vadd.f32 %v3778, %v3797
      %v3815 = vadd.f32 %v3779, %v3797
      %v3816 = vadd.f32 %v3780, %v3797
      %v3817 = vadd.f32 %v3781, %v3797
      %v3818 = vadd.f32 %v3782, %v3797
      %v3819 = vadd.f32 %v3783, %v3797
      %v3820 = vadd.f32 %v3784, %v3797
      %v3821 = vadd.f32 %v3785, %v3797
      %v3822 = vadd.f32 %v3786, %v3797
      %v3823 = vadd.f32 %v3787, %v3797
      %v3824 = vadd.f32 %v3788, %v3797
      %v3825 = vadd.f32 %v3789, %v3797
      %v3826 = vadd.f32 %v3790, %v3797
      %v3827 = vadd.f32 %v3791, %v3797
      %v3828 = vadd.f32 %v3792, %v3797
      %v3829 = vadd.f32 %v3793, %v3797
      %v3830 = vadd.f32 %v3794, %v3797
      %v3831 = vmul.f32 %v3799, 0.5
      %v3832 = vmul.f32 %v3800, 0.5
      %v3833 = vmul.f32 %v3801, 0.5
      %v3834 = vmul.f32 %v3802, 0.5
      %v3835 = vmul.f32 %v3803, 0.5
      %v3836 = vmul.f32 %v3804, 0.5
      %v3837 = vmul.f32 %v3805, 0.5
      %v3838 = vmul.f32 %v3806, 0.5
      %v3839 = vmul.f32 %v3807, 0.5
      %v3840 = vmul.f32 %v3808, 0.5
      %v3841 = vmul.f32 %v3809, 0.5
      %v3842 = vmul.f32 %v3810, 0.5
      %v3843 = vmul.f32 %v3811, 0.5
      %v3844 = vmul.f32 %v3812, 0.5
      %v3845 = vmul.f32 %v3813, 0.5
      %v3846 = vmul.f32 %v3814, 0.5
      %v3847 = vmul.f32 %v3815, 0.5
      %v3848 = vmul.f32 %v3816, 0.5
      %v3849 = vmul.f32 %v3817, 0.5
      %v3850 = vmul.f32 %v3818, 0.5
      %v3851 = vmul.f32 %v3819, 0.5
      %v3852 = vmul.f32 %v3820, 0.5
      %v3853 = vmul.f32 %v3821, 0.5
      %v3854 = vmul.f32 %v3822, 0.5
      %v3855 = vmul.f32 %v3823, 0.5
      %v3856 = vmul.f32 %v3824, 0.5
      %v3857 = vmul.f32 %v3825, 0.5
      %v3858 = vmul.f32 %v3826, 0.5
      %v3859 = vmul.f32 %v3827, 0.5
      %v3860 = vmul.f32 %v3828, 0.5
      %v3861 = vmul.f32 %v3829, 0.5
      %v3862 = vmul.f32 %v3830, 0.5
      %v3863 = vtanh.pop %v3831
      %v3864 = vtanh.pop %v3832
      %v3865 = vtanh.pop %v3833
      %v3866 = vtanh.pop %v3834
      %v3867 = vtanh.pop %v3835
      %v3868 = vtanh.pop %v3836
      %v3869 = vtanh.pop %v3837
      %v3870 = vtanh.pop %v3838
      %v3871 = vtanh.pop %v3839
      %v3872 = vtanh.pop %v3840
      %v3873 = vtanh.pop %v3841
      %v3874 = vtanh.pop %v3842
      %v3875 = vtanh.pop %v3843
      %v3876 = vtanh.pop %v3844
      %v3877 = vtanh.pop %v3845
      %v3878 = vtanh.pop %v3846
      %v3879 = vtanh.pop %v3847
      %v3880 = vtanh.pop %v3848
      %v3881 = vtanh.pop %v3849
      %v3882 = vtanh.pop %v3850
      %v3883 = vtanh.pop %v3851
      %v3884 = vtanh.pop %v3852
      %v3885 = vtanh.pop %v3853
      %v3886 = vtanh.pop %v3854
      %v3887 = vtanh.pop %v3855
      %v3888 = vtanh.pop %v3856
      %v3889 = vtanh.pop %v3857
      %v3890 = vtanh.pop %v3858
      %v3891 = vtanh.pop %v3859
      %v3892 = vtanh.pop %v3860
      %v3893 = vtanh.pop %v3861
      %v3894 = vtanh.pop %v3862
      %v3895 = vadd.f32 %v3863, 1.0
      %v3896 = vadd.f32 %v3864, 1.0
      %v3897 = vadd.f32 %v3865, 1.0
      %v3898 = vadd.f32 %v3866, 1.0
      %v3899 = vadd.f32 %v3867, 1.0
      %v3900 = vadd.f32 %v3868, 1.0
      %v3901 = vadd.f32 %v3869, 1.0
      %v3902 = vadd.f32 %v3870, 1.0
      %v3903 = vadd.f32 %v3871, 1.0
      %v3904 = vadd.f32 %v3872, 1.0
      %v3905 = vadd.f32 %v3873, 1.0
      %v3906 = vadd.f32 %v3874, 1.0
      %v3907 = vadd.f32 %v3875, 1.0
      %v3908 = vadd.f32 %v3876, 1.0
      %v3909 = vadd.f32 %v3877, 1.0
      %v3910 = vadd.f32 %v3878, 1.0
      %v3911 = vadd.f32 %v3879, 1.0
      %v3912 = vadd.f32 %v3880, 1.0
      %v3913 = vadd.f32 %v3881, 1.0
      %v3914 = vadd.f32 %v3882, 1.0
      %v3915 = vadd.f32 %v3883, 1.0
      %v3916 = vadd.f32 %v3884, 1.0
      %v3917 = vadd.f32 %v3885, 1.0
      %v3918 = vadd.f32 %v3886, 1.0
      %v3919 = vadd.f32 %v3887, 1.0
      %v3920 = vadd.f32 %v3888, 1.0
      %v3921 = vadd.f32 %v3889, 1.0
      %v3922 = vadd.f32 %v3890, 1.0
      %v3923 = vadd.f32 %v3891, 1.0
      %v3924 = vadd.f32 %v3892, 1.0
      %v3925 = vadd.f32 %v3893, 1.0
      %v3926 = vadd.f32 %v3894, 1.0
      %v3927 = vmul.f32 %v3895, 0.5
      %v3928 = vmul.f32 %v3896, 0.5
      %v3929 = vmul.f32 %v3897, 0.5
      %v3930 = vmul.f32 %v3898, 0.5
      %v3931 = vmul.f32 %v3899, 0.5
      %v3932 = vmul.f32 %v3900, 0.5
      %v3933 = vmul.f32 %v3901, 0.5
      %v3934 = vmul.f32 %v3902, 0.5
      %v3935 = vmul.f32 %v3903, 0.5
      %v3936 = vmul.f32 %v3904, 0.5
      %v3937 = vmul.f32 %v3905, 0.5
      %v3938 = vmul.f32 %v3906, 0.5
      %v3939 = vmul.f32 %v3907, 0.5
      %v3940 = vmul.f32 %v3908, 0.5
      %v3941 = vmul.f32 %v3909, 0.5
      %v3942 = vmul.f32 %v3910, 0.5
      %v3943 = vmul.f32 %v3911, 0.5
      %v3944 = vmul.f32 %v3912, 0.5
      %v3945 = vmul.f32 %v3913, 0.5
      %v3946 = vmul.f32 %v3914, 0.5
      %v3947 = vmul.f32 %v3915, 0.5
      %v3948 = vmul.f32 %v3916, 0.5
      %v3949 = vmul.f32 %v3917, 0.5
      %v3950 = vmul.f32 %v3918, 0.5
      %v3951 = vmul.f32 %v3919, 0.5
      %v3952 = vmul.f32 %v3920, 0.5
      %v3953 = vmul.f32 %v3921, 0.5
      %v3954 = vmul.f32 %v3922, 0.5
      %v3955 = vmul.f32 %v3923, 0.5
      %v3956 = vmul.f32 %v3924, 0.5
      %v3957 = vmul.f32 %v3925, 0.5
      %v3958 = vmul.f32 %v3926, 0.5
      %v3991 = vcombine.low %v3927, %v3928
      %v3992 = vcombine.low %v3929, %v3930
      %v3994 = vunpack.c.l.s4 1983009808
      %v3995 = vunpack.c.0.s8 %v3994
      %v3996 = vlaneseq
      %v3997 = vshrl.u32 %v3996, 7
      %v3998 = vsub.s32 %v3995, %v3997
      %v3999 = vrot.slane %v3991, %v3998
      %v4001 = vunpack.c.l.s4 1983009808
      %v4002 = vunpack.c.0.s8 %v4001
      %v4003 = vlaneseq
      %v4004 = vshrl.u32 %v4003, 7
      %v4005 = vsub.s32 %v4002, %v4004
      %v4006 = vrot.slane %v3992, %v4005
      %v4007 = vcombine.low %v3999, %v4006
      %v4008 = vcombine.low %v3931, %v3932
      %v4009 = vcombine.low %v3933, %v3934
      %v4011 = vunpack.c.l.s4 1983009808
      %v4012 = vunpack.c.0.s8 %v4011
      %v4013 = vlaneseq
      %v4014 = vshrl.u32 %v4013, 7
      %v4015 = vsub.s32 %v4012, %v4014
      %v4016 = vrot.slane %v4008, %v4015
      %v4018 = vunpack.c.l.s4 1983009808
      %v4019 = vunpack.c.0.s8 %v4018
      %v4020 = vlaneseq
      %v4021 = vshrl.u32 %v4020, 7
      %v4022 = vsub.s32 %v4019, %v4021
      %v4023 = vrot.slane %v4009, %v4022
      %v4024 = vcombine.low %v4016, %v4023
      %v4025 = vcombine.low %v3935, %v3936
      %v4026 = vcombine.low %v3937, %v3938
      %v4028 = vunpack.c.l.s4 1983009808
      %v4029 = vunpack.c.0.s8 %v4028
      %v4030 = vlaneseq
      %v4031 = vshrl.u32 %v4030, 7
      %v4032 = vsub.s32 %v4029, %v4031
      %v4033 = vrot.slane %v4025, %v4032
      %v4035 = vunpack.c.l.s4 1983009808
      %v4036 = vunpack.c.0.s8 %v4035
      %v4037 = vlaneseq
      %v4038 = vshrl.u32 %v4037, 7
      %v4039 = vsub.s32 %v4036, %v4038
      %v4040 = vrot.slane %v4026, %v4039
      %v4041 = vcombine.low %v4033, %v4040
      %v4042 = vcombine.low %v3939, %v3940
      %v4043 = vcombine.low %v3941, %v3942
      %v4045 = vunpack.c.l.s4 1983009808
      %v4046 = vunpack.c.0.s8 %v4045
      %v4047 = vlaneseq
      %v4048 = vshrl.u32 %v4047, 7
      %v4049 = vsub.s32 %v4046, %v4048
      %v4050 = vrot.slane %v4042, %v4049
      %v4052 = vunpack.c.l.s4 1983009808
      %v4053 = vunpack.c.0.s8 %v4052
      %v4054 = vlaneseq
      %v4055 = vshrl.u32 %v4054, 7
      %v4056 = vsub.s32 %v4053, %v4055
      %v4057 = vrot.slane %v4043, %v4056
      %v4058 = vcombine.low %v4050, %v4057
      %v4059 = vcombine.low %v3943, %v3944
      %v4060 = vcombine.low %v3945, %v3946
      %v4062 = vunpack.c.l.s4 1983009808
      %v4063 = vunpack.c.0.s8 %v4062
      %v4064 = vlaneseq
      %v4065 = vshrl.u32 %v4064, 7
      %v4066 = vsub.s32 %v4063, %v4065
      %v4067 = vrot.slane %v4059, %v4066
      %v4069 = vunpack.c.l.s4 1983009808
      %v4070 = vunpack.c.0.s8 %v4069
      %v4071 = vlaneseq
      %v4072 = vshrl.u32 %v4071, 7
      %v4073 = vsub.s32 %v4070, %v4072
      %v4074 = vrot.slane %v4060, %v4073
      %v4075 = vcombine.low %v4067, %v4074
      %v4076 = vcombine.low %v3947, %v3948
      %v4077 = vcombine.low %v3949, %v3950
      %v4079 = vunpack.c.l.s4 1983009808
      %v4080 = vunpack.c.0.s8 %v4079
      %v4081 = vlaneseq
      %v4082 = vshrl.u32 %v4081, 7
      %v4083 = vsub.s32 %v4080, %v4082
      %v4084 = vrot.slane %v4076, %v4083
      %v4086 = vunpack.c.l.s4 1983009808
      %v4087 = vunpack.c.0.s8 %v4086
      %v4088 = vlaneseq
      %v4089 = vshrl.u32 %v4088, 7
      %v4090 = vsub.s32 %v4087, %v4089
      %v4091 = vrot.slane %v4077, %v4090
      %v4092 = vcombine.low %v4084, %v4091
      %v4093 = vcombine.low %v3951, %v3952
      %v4094 = vcombine.low %v3953, %v3954
      %v4096 = vunpack.c.l.s4 1983009808
      %v4097 = vunpack.c.0.s8 %v4096
      %v4098 = vlaneseq
      %v4099 = vshrl.u32 %v4098, 7
      %v4100 = vsub.s32 %v4097, %v4099
      %v4101 = vrot.slane %v4093, %v4100
      %v4103 = vunpack.c.l.s4 1983009808
      %v4104 = vunpack.c.0.s8 %v4103
      %v4105 = vlaneseq
      %v4106 = vshrl.u32 %v4105, 7
      %v4107 = vsub.s32 %v4104, %v4106
      %v4108 = vrot.slane %v4094, %v4107
      %v4109 = vcombine.low %v4101, %v4108
      %v4110 = vcombine.low %v3955, %v3956
      %v4111 = vcombine.low %v3957, %v3958
      %v4113 = vunpack.c.l.s4 1983009808
      %v4114 = vunpack.c.0.s8 %v4113
      %v4115 = vlaneseq
      %v4116 = vshrl.u32 %v4115, 7
      %v4117 = vsub.s32 %v4114, %v4116
      %v4118 = vrot.slane %v4110, %v4117
      %v4120 = vunpack.c.l.s4 1983009808
      %v4121 = vunpack.c.0.s8 %v4120
      %v4122 = vlaneseq
      %v4123 = vshrl.u32 %v4122, 7
      %v4124 = vsub.s32 %v4121, %v4123
      %v4125 = vrot.slane %v4111, %v4124
      %v4126 = vcombine.low %v4118, %v4125
      %4135 = vst [vmem:[%s295] sm:$0xff] %v4007
      %4136 = vst [vmem:[%s295 + $0x8] sm:$0xff] %v4024
      %4137 = vst [vmem:[%s295 + $0x10] sm:$0xff] %v4041
      %4138 = vst [vmem:[%s295 + $0x18] sm:$0xff] %v4058
      %4139 = vst [vmem:[%s295 + $0x20] sm:$0xff] %v4075
      %4140 = vst [vmem:[%s295 + $0x28] sm:$0xff] %v4092
      %4141 = vst [vmem:[%s295 + $0x30] sm:$0xff] %v4109
      %4142 = vst [vmem:[%s295 + $0x38] sm:$0xff] %v4126
      %v4143 = vlaneseq
      %v4144 = vshrl.u32 %v4143, 7
      %v4145 = vsub.s32 0, %v4144
      %v4146 = vrot.slane %v3927, %v4145
      %v4147 = vlaneseq
      %v4148 = vshrl.u32 %v4147, 7
      %v4149 = vsub.s32 0, %v4148
      %v4150 = vrot.slane %v3928, %v4149
      %v4151 = vlaneseq
      %v4152 = vshrl.u32 %v4151, 7
      %v4153 = vsub.s32 0, %v4152
      %v4154 = vrot.slane %v3929, %v4153
      %v4155 = vlaneseq
      %v4156 = vshrl.u32 %v4155, 7
      %v4157 = vsub.s32 0, %v4156
      %v4158 = vrot.slane %v3930, %v4157
      %v4159 = vlaneseq
      %v4160 = vshrl.u32 %v4159, 7
      %v4161 = vsub.s32 0, %v4160
      %v4162 = vrot.slane %v3931, %v4161
      %v4163 = vlaneseq
      %v4164 = vshrl.u32 %v4163, 7
      %v4165 = vsub.s32 0, %v4164
      %v4166 = vrot.slane %v3932, %v4165
      %v4167 = vlaneseq
      %v4168 = vshrl.u32 %v4167, 7
      %v4169 = vsub.s32 0, %v4168
      %v4170 = vrot.slane %v3933, %v4169
      %v4171 = vlaneseq
      %v4172 = vshrl.u32 %v4171, 7
      %v4173 = vsub.s32 0, %v4172
      %v4174 = vrot.slane %v3934, %v4173
      %v4175 = vlaneseq
      %v4176 = vshrl.u32 %v4175, 7
      %v4177 = vsub.s32 0, %v4176
      %v4178 = vrot.slane %v3935, %v4177
      %v4179 = vlaneseq
      %v4180 = vshrl.u32 %v4179, 7
      %v4181 = vsub.s32 0, %v4180
      %v4182 = vrot.slane %v3936, %v4181
      %v4183 = vlaneseq
      %v4184 = vshrl.u32 %v4183, 7
      %v4185 = vsub.s32 0, %v4184
      %v4186 = vrot.slane %v3937, %v4185
      %v4187 = vlaneseq
      %v4188 = vshrl.u32 %v4187, 7
      %v4189 = vsub.s32 0, %v4188
      %v4190 = vrot.slane %v3938, %v4189
      %v4191 = vlaneseq
      %v4192 = vshrl.u32 %v4191, 7
      %v4193 = vsub.s32 0, %v4192
      %v4194 = vrot.slane %v3939, %v4193
      %v4195 = vlaneseq
      %v4196 = vshrl.u32 %v4195, 7
      %v4197 = vsub.s32 0, %v4196
      %v4198 = vrot.slane %v3940, %v4197
      %v4199 = vlaneseq
      %v4200 = vshrl.u32 %v4199, 7
      %v4201 = vsub.s32 0, %v4200
      %v4202 = vrot.slane %v3941, %v4201
      %v4203 = vlaneseq
      %v4204 = vshrl.u32 %v4203, 7
      %v4205 = vsub.s32 0, %v4204
      %v4206 = vrot.slane %v3942, %v4205
      %v4207 = vlaneseq
      %v4208 = vshrl.u32 %v4207, 7
      %v4209 = vsub.s32 0, %v4208
      %v4210 = vrot.slane %v3943, %v4209
      %v4211 = vlaneseq
      %v4212 = vshrl.u32 %v4211, 7
      %v4213 = vsub.s32 0, %v4212
      %v4214 = vrot.slane %v3944, %v4213
      %v4215 = vlaneseq
      %v4216 = vshrl.u32 %v4215, 7
      %v4217 = vsub.s32 0, %v4216
      %v4218 = vrot.slane %v3945, %v4217
      %v4219 = vlaneseq
      %v4220 = vshrl.u32 %v4219, 7
      %v4221 = vsub.s32 0, %v4220
      %v4222 = vrot.slane %v3946, %v4221
      %v4223 = vlaneseq
      %v4224 = vshrl.u32 %v4223, 7
      %v4225 = vsub.s32 0, %v4224
      %v4226 = vrot.slane %v3947, %v4225
      %v4227 = vlaneseq
      %v4228 = vshrl.u32 %v4227, 7
      %v4229 = vsub.s32 0, %v4228
      %v4230 = vrot.slane %v3948, %v4229
      %v4231 = vlaneseq
      %v4232 = vshrl.u32 %v4231, 7
      %v4233 = vsub.s32 0, %v4232
      %v4234 = vrot.slane %v3949, %v4233
      %v4235 = vlaneseq
      %v4236 = vshrl.u32 %v4235, 7
      %v4237 = vsub.s32 0, %v4236
      %v4238 = vrot.slane %v3950, %v4237
      %v4239 = vlaneseq
      %v4240 = vshrl.u32 %v4239, 7
      %v4241 = vsub.s32 0, %v4240
      %v4242 = vrot.slane %v3951, %v4241
      %v4243 = vlaneseq
      %v4244 = vshrl.u32 %v4243, 7
      %v4245 = vsub.s32 0, %v4244
      %v4246 = vrot.slane %v3952, %v4245
      %v4247 = vlaneseq
      %v4248 = vshrl.u32 %v4247, 7
      %v4249 = vsub.s32 0, %v4248
      %v4250 = vrot.slane %v3953, %v4249
      %v4251 = vlaneseq
      %v4252 = vshrl.u32 %v4251, 7
      %v4253 = vsub.s32 0, %v4252
      %v4254 = vrot.slane %v3954, %v4253
      %v4255 = vlaneseq
      %v4256 = vshrl.u32 %v4255, 7
      %v4257 = vsub.s32 0, %v4256
      %v4258 = vrot.slane %v3955, %v4257
      %v4259 = vlaneseq
      %v4260 = vshrl.u32 %v4259, 7
      %v4261 = vsub.s32 0, %v4260
      %v4262 = vrot.slane %v3956, %v4261
      %v4263 = vlaneseq
      %v4264 = vshrl.u32 %v4263, 7
      %v4265 = vsub.s32 0, %v4264
      %v4266 = vrot.slane %v3957, %v4265
      %v4267 = vlaneseq
      %v4268 = vshrl.u32 %v4267, 7
      %v4269 = vsub.s32 0, %v4268
      %v4270 = vrot.slane %v3958, %v4269
      %v4271 = vmul.f32 %v4146, %v1963
      %v4272 = vmul.f32 %v4150, %v1964
      %v4273 = vmul.f32 %v4154, %v1965
      %v4274 = vmul.f32 %v4158, %v1966
      %v4275 = vmul.f32 %v4162, %v1967
      %v4276 = vmul.f32 %v4166, %v1968
      %v4277 = vmul.f32 %v4170, %v1969
      %v4278 = vmul.f32 %v4174, %v1970
      %v4279 = vmul.f32 %v4178, %v1971
      %v4280 = vmul.f32 %v4182, %v1972
      %v4281 = vmul.f32 %v4186, %v1973
      %v4282 = vmul.f32 %v4190, %v1974
      %v4283 = vmul.f32 %v4194, %v1975
      %v4284 = vmul.f32 %v4198, %v1976
      %v4285 = vmul.f32 %v4202, %v1977
      %v4286 = vmul.f32 %v4206, %v1978
      %v4287 = vmul.f32 %v4210, %v1979
      %v4288 = vmul.f32 %v4214, %v1980
      %v4289 = vmul.f32 %v4218, %v1981
      %v4290 = vmul.f32 %v4222, %v1982
      %v4291 = vmul.f32 %v4226, %v1983
      %v4292 = vmul.f32 %v4230, %v1984
      %v4293 = vmul.f32 %v4234, %v1985
      %v4294 = vmul.f32 %v4238, %v1986
      %v4295 = vmul.f32 %v4242, %v1987
      %v4296 = vmul.f32 %v4246, %v1988
      %v4297 = vmul.f32 %v4250, %v1989
      %v4298 = vmul.f32 %v4254, %v1990
      %v4299 = vmul.f32 %v4258, %v1991
      %v4300 = vmul.f32 %v4262, %v1992
      %v4301 = vmul.f32 %v4266, %v1993
      %v4302 = vmul.f32 %v4270, %v1994
      %v4303 = vlaneseq
      %v4304 = vshrl.u32 %v4303, 7
      %v4305 = vsub.s32 1, %v4304
      %v4306 = vrot.slane %v3927, %v4305
      %v4307 = vlaneseq
      %v4308 = vshrl.u32 %v4307, 7
      %v4309 = vsub.s32 1, %v4308
      %v4310 = vrot.slane %v3928, %v4309
      %v4311 = vlaneseq
      %v4312 = vshrl.u32 %v4311, 7
      %v4313 = vsub.s32 1, %v4312
      %v4314 = vrot.slane %v3929, %v4313
      %v4315 = vlaneseq
      %v4316 = vshrl.u32 %v4315, 7
      %v4317 = vsub.s32 1, %v4316
      %v4318 = vrot.slane %v3930, %v4317
      %v4319 = vlaneseq
      %v4320 = vshrl.u32 %v4319, 7
      %v4321 = vsub.s32 1, %v4320
      %v4322 = vrot.slane %v3931, %v4321
      %v4323 = vlaneseq
      %v4324 = vshrl.u32 %v4323, 7
      %v4325 = vsub.s32 1, %v4324
      %v4326 = vrot.slane %v3932, %v4325
      %v4327 = vlaneseq
      %v4328 = vshrl.u32 %v4327, 7
      %v4329 = vsub.s32 1, %v4328
      %v4330 = vrot.slane %v3933, %v4329
      %v4331 = vlaneseq
      %v4332 = vshrl.u32 %v4331, 7
      %v4333 = vsub.s32 1, %v4332
      %v4334 = vrot.slane %v3934, %v4333
      %v4335 = vlaneseq
      %v4336 = vshrl.u32 %v4335, 7
      %v4337 = vsub.s32 1, %v4336
      %v4338 = vrot.slane %v3935, %v4337
      %v4339 = vlaneseq
      %v4340 = vshrl.u32 %v4339, 7
      %v4341 = vsub.s32 1, %v4340
      %v4342 = vrot.slane %v3936, %v4341
      %v4343 = vlaneseq
      %v4344 = vshrl.u32 %v4343, 7
      %v4345 = vsub.s32 1, %v4344
      %v4346 = vrot.slane %v3937, %v4345
      %v4347 = vlaneseq
      %v4348 = vshrl.u32 %v4347, 7
      %v4349 = vsub.s32 1, %v4348
      %v4350 = vrot.slane %v3938, %v4349
      %v4351 = vlaneseq
      %v4352 = vshrl.u32 %v4351, 7
      %v4353 = vsub.s32 1, %v4352
      %v4354 = vrot.slane %v3939, %v4353
      %v4355 = vlaneseq
      %v4356 = vshrl.u32 %v4355, 7
      %v4357 = vsub.s32 1, %v4356
      %v4358 = vrot.slane %v3940, %v4357
      %v4359 = vlaneseq
      %v4360 = vshrl.u32 %v4359, 7
      %v4361 = vsub.s32 1, %v4360
      %v4362 = vrot.slane %v3941, %v4361
      %v4363 = vlaneseq
      %v4364 = vshrl.u32 %v4363, 7
      %v4365 = vsub.s32 1, %v4364
      %v4366 = vrot.slane %v3942, %v4365
      %v4367 = vlaneseq
      %v4368 = vshrl.u32 %v4367, 7
      %v4369 = vsub.s32 1, %v4368
      %v4370 = vrot.slane %v3943, %v4369
      %v4371 = vlaneseq
      %v4372 = vshrl.u32 %v4371, 7
      %v4373 = vsub.s32 1, %v4372
      %v4374 = vrot.slane %v3944, %v4373
      %v4375 = vlaneseq
      %v4376 = vshrl.u32 %v4375, 7
      %v4377 = vsub.s32 1, %v4376
      %v4378 = vrot.slane %v3945, %v4377
      %v4379 = vlaneseq
      %v4380 = vshrl.u32 %v4379, 7
      %v4381 = vsub.s32 1, %v4380
      %v4382 = vrot.slane %v3946, %v4381
      %v4383 = vlaneseq
      %v4384 = vshrl.u32 %v4383, 7
      %v4385 = vsub.s32 1, %v4384
      %v4386 = vrot.slane %v3947, %v4385
      %v4387 = vlaneseq
      %v4388 = vshrl.u32 %v4387, 7
      %v4389 = vsub.s32 1, %v4388
      %v4390 = vrot.slane %v3948, %v4389
      %v4391 = vlaneseq
      %v4392 = vshrl.u32 %v4391, 7
      %v4393 = vsub.s32 1, %v4392
      %v4394 = vrot.slane %v3949, %v4393
      %v4395 = vlaneseq
      %v4396 = vshrl.u32 %v4395, 7
      %v4397 = vsub.s32 1, %v4396
      %v4398 = vrot.slane %v3950, %v4397
      %v4399 = vlaneseq
      %v4400 = vshrl.u32 %v4399, 7
      %v4401 = vsub.s32 1, %v4400
      %v4402 = vrot.slane %v3951, %v4401
      %v4403 = vlaneseq
      %v4404 = vshrl.u32 %v4403, 7
      %v4405 = vsub.s32 1, %v4404
      %v4406 = vrot.slane %v3952, %v4405
      %v4407 = vlaneseq
      %v4408 = vshrl.u32 %v4407, 7
      %v4409 = vsub.s32 1, %v4408
      %v4410 = vrot.slane %v3953, %v4409
      %v4411 = vlaneseq
      %v4412 = vshrl.u32 %v4411, 7
      %v4413 = vsub.s32 1, %v4412
      %v4414 = vrot.slane %v3954, %v4413
      %v4415 = vlaneseq
      %v4416 = vshrl.u32 %v4415, 7
      %v4417 = vsub.s32 1, %v4416
      %v4418 = vrot.slane %v3955, %v4417
      %v4419 = vlaneseq
      %v4420 = vshrl.u32 %v4419, 7
      %v4421 = vsub.s32 1, %v4420
      %v4422 = vrot.slane %v3956, %v4421
      %v4423 = vlaneseq
      %v4424 = vshrl.u32 %v4423, 7
      %v4425 = vsub.s32 1, %v4424
      %v4426 = vrot.slane %v3957, %v4425
      %v4427 = vlaneseq
      %v4428 = vshrl.u32 %v4427, 7
      %v4429 = vsub.s32 1, %v4428
      %v4430 = vrot.slane %v3958, %v4429
      %v4431 = vmul.f32 %v4306, %v1963
      %v4432 = vmul.f32 %v4310, %v1964
      %v4433 = vmul.f32 %v4314, %v1965
      %v4434 = vmul.f32 %v4318, %v1966
      %v4435 = vmul.f32 %v4322, %v1967
      %v4436 = vmul.f32 %v4326, %v1968
      %v4437 = vmul.f32 %v4330, %v1969
      %v4438 = vmul.f32 %v4334, %v1970
      %v4439 = vmul.f32 %v4338, %v1971
      %v4440 = vmul.f32 %v4342, %v1972
      %v4441 = vmul.f32 %v4346, %v1973
      %v4442 = vmul.f32 %v4350, %v1974
      %v4443 = vmul.f32 %v4354, %v1975
      %v4444 = vmul.f32 %v4358, %v1976
      %v4445 = vmul.f32 %v4362, %v1977
      %v4446 = vmul.f32 %v4366, %v1978
      %v4447 = vmul.f32 %v4370, %v1979
      %v4448 = vmul.f32 %v4374, %v1980
      %v4449 = vmul.f32 %v4378, %v1981
      %v4450 = vmul.f32 %v4382, %v1982
      %v4451 = vmul.f32 %v4386, %v1983
      %v4452 = vmul.f32 %v4390, %v1984
      %v4453 = vmul.f32 %v4394, %v1985
      %v4454 = vmul.f32 %v4398, %v1986
      %v4455 = vmul.f32 %v4402, %v1987
      %v4456 = vmul.f32 %v4406, %v1988
      %v4457 = vmul.f32 %v4410, %v1989
      %v4458 = vmul.f32 %v4414, %v1990
      %v4459 = vmul.f32 %v4418, %v1991
      %v4460 = vmul.f32 %v4422, %v1992
      %v4461 = vmul.f32 %v4426, %v1993
      %v4462 = vmul.f32 %v4430, %v1994
      %v4495 = vrot.slane %v4431, 4
      %v4496 = vrot.slane %v4432, 4
      %v4497 = vrot.slane %v4433, 4
      %v4498 = vrot.slane %v4434, 4
      %v4499 = vrot.slane %v4435, 4
      %v4500 = vrot.slane %v4436, 4
      %v4501 = vrot.slane %v4437, 4
      %v4502 = vrot.slane %v4438, 4
      %v4503 = vrot.slane %v4439, 4
      %v4504 = vrot.slane %v4440, 4
      %v4505 = vrot.slane %v4441, 4
      %v4506 = vrot.slane %v4442, 4
      %v4507 = vrot.slane %v4443, 4
      %v4508 = vrot.slane %v4444, 4
      %v4509 = vrot.slane %v4445, 4
      %v4510 = vrot.slane %v4446, 4
      %v4511 = vrot.slane %v4447, 4
      %v4512 = vrot.slane %v4448, 4
      %v4513 = vrot.slane %v4449, 4
      %v4514 = vrot.slane %v4450, 4
      %v4515 = vrot.slane %v4451, 4
      %v4516 = vrot.slane %v4452, 4
      %v4517 = vrot.slane %v4453, 4
      %v4518 = vrot.slane %v4454, 4
      %v4519 = vrot.slane %v4455, 4
      %v4520 = vrot.slane %v4456, 4
      %v4521 = vrot.slane %v4457, 4
      %v4522 = vrot.slane %v4458, 4
      %v4523 = vrot.slane %v4459, 4
      %v4524 = vrot.slane %v4460, 4
      %v4525 = vrot.slane %v4461, 4
      %v4526 = vrot.slane %v4462, 4
      %v4559 = vadd.f32 %v4271, %v4495
      %v4560 = vadd.f32 %v4272, %v4496
      %v4561 = vadd.f32 %v4273, %v4497
      %v4562 = vadd.f32 %v4274, %v4498
      %v4563 = vadd.f32 %v4275, %v4499
      %v4564 = vadd.f32 %v4276, %v4500
      %v4565 = vadd.f32 %v4277, %v4501
      %v4566 = vadd.f32 %v4278, %v4502
      %v4567 = vadd.f32 %v4279, %v4503
      %v4568 = vadd.f32 %v4280, %v4504
      %v4569 = vadd.f32 %v4281, %v4505
      %v4570 = vadd.f32 %v4282, %v4506
      %v4571 = vadd.f32 %v4283, %v4507
      %v4572 = vadd.f32 %v4284, %v4508
      %v4573 = vadd.f32 %v4285, %v4509
      %v4574 = vadd.f32 %v4286, %v4510
      %v4575 = vadd.f32 %v4287, %v4511
      %v4576 = vadd.f32 %v4288, %v4512
      %v4577 = vadd.f32 %v4289, %v4513
      %v4578 = vadd.f32 %v4290, %v4514
      %v4579 = vadd.f32 %v4291, %v4515
      %v4580 = vadd.f32 %v4292, %v4516
      %v4581 = vadd.f32 %v4293, %v4517
      %v4582 = vadd.f32 %v4294, %v4518
      %v4583 = vadd.f32 %v4295, %v4519
      %v4584 = vadd.f32 %v4296, %v4520
      %v4585 = vadd.f32 %v4297, %v4521
      %v4586 = vadd.f32 %v4298, %v4522
      %v4587 = vadd.f32 %v4299, %v4523
      %v4588 = vadd.f32 %v4300, %v4524
      %v4589 = vadd.f32 %v4301, %v4525
      %v4590 = vadd.f32 %v4302, %v4526
      %4591 = vset.pattern.permute.xlu0 19
      %4592 = vperm.xlu0 %4591, %v345
      %v4593 = vpop.permute.xlu0 %4592
      %v4595 = vadd.f32 %v4559, %v4593
      %v4596 = vadd.f32 %v4560, %v4593
      %v4597 = vadd.f32 %v4561, %v4593
      %v4598 = vadd.f32 %v4562, %v4593
      %v4599 = vadd.f32 %v4563, %v4593
      %v4600 = vadd.f32 %v4564, %v4593
      %v4601 = vadd.f32 %v4565, %v4593
      %v4602 = vadd.f32 %v4566, %v4593
      %v4603 = vadd.f32 %v4567, %v4593
      %v4604 = vadd.f32 %v4568, %v4593
      %v4605 = vadd.f32 %v4569, %v4593
      %v4606 = vadd.f32 %v4570, %v4593
      %v4607 = vadd.f32 %v4571, %v4593
      %v4608 = vadd.f32 %v4572, %v4593
      %v4609 = vadd.f32 %v4573, %v4593
      %v4610 = vadd.f32 %v4574, %v4593
      %v4611 = vadd.f32 %v4575, %v4593
      %v4612 = vadd.f32 %v4576, %v4593
      %v4613 = vadd.f32 %v4577, %v4593
      %v4614 = vadd.f32 %v4578, %v4593
      %v4615 = vadd.f32 %v4579, %v4593
      %v4616 = vadd.f32 %v4580, %v4593
      %v4617 = vadd.f32 %v4581, %v4593
      %v4618 = vadd.f32 %v4582, %v4593
      %v4619 = vadd.f32 %v4583, %v4593
      %v4620 = vadd.f32 %v4584, %v4593
      %v4621 = vadd.f32 %v4585, %v4593
      %v4622 = vadd.f32 %v4586, %v4593
      %v4623 = vadd.f32 %v4587, %v4593
      %v4624 = vadd.f32 %v4588, %v4593
      %v4625 = vadd.f32 %v4589, %v4593
      %v4626 = vadd.f32 %v4590, %v4593
      %v4627 = vmax.f32 %v4595, 0.0
      %v4628 = vmax.f32 %v4596, 0.0
      %v4629 = vmax.f32 %v4597, 0.0
      %v4630 = vmax.f32 %v4598, 0.0
      %v4631 = vmax.f32 %v4599, 0.0
      %v4632 = vmax.f32 %v4600, 0.0
      %v4633 = vmax.f32 %v4601, 0.0
      %v4634 = vmax.f32 %v4602, 0.0
      %v4635 = vmax.f32 %v4603, 0.0
      %v4636 = vmax.f32 %v4604, 0.0
      %v4637 = vmax.f32 %v4605, 0.0
      %v4638 = vmax.f32 %v4606, 0.0
      %v4639 = vmax.f32 %v4607, 0.0
      %v4640 = vmax.f32 %v4608, 0.0
      %v4641 = vmax.f32 %v4609, 0.0
      %v4642 = vmax.f32 %v4610, 0.0
      %v4643 = vmax.f32 %v4611, 0.0
      %v4644 = vmax.f32 %v4612, 0.0
      %v4645 = vmax.f32 %v4613, 0.0
      %v4646 = vmax.f32 %v4614, 0.0
      %v4647 = vmax.f32 %v4615, 0.0
      %v4648 = vmax.f32 %v4616, 0.0
      %v4649 = vmax.f32 %v4617, 0.0
      %v4650 = vmax.f32 %v4618, 0.0
      %v4651 = vmax.f32 %v4619, 0.0
      %v4652 = vmax.f32 %v4620, 0.0
      %v4653 = vmax.f32 %v4621, 0.0
      %v4654 = vmax.f32 %v4622, 0.0
      %v4655 = vmax.f32 %v4623, 0.0
      %v4656 = vmax.f32 %v4624, 0.0
      %v4657 = vmax.f32 %v4625, 0.0
      %v4658 = vmax.f32 %v4626, 0.0
      %v4691 = vcombine.low %v4627, %v4628
      %v4692 = vcombine.low %v4629, %v4630
      %v4693 = vcombine.low %v4631, %v4632
      %v4694 = vcombine.low %v4633, %v4634
      %v4695 = vcombine.low %v4635, %v4636
      %v4696 = vcombine.low %v4637, %v4638
      %v4697 = vcombine.low %v4639, %v4640
      %v4698 = vcombine.low %v4641, %v4642
      %v4699 = vcombine.low %v4643, %v4644
      %v4700 = vcombine.low %v4645, %v4646
      %v4701 = vcombine.low %v4647, %v4648
      %v4702 = vcombine.low %v4649, %v4650
      %v4703 = vcombine.low %v4651, %v4652
      %v4704 = vcombine.low %v4653, %v4654
      %v4705 = vcombine.low %v4655, %v4656
      %v4706 = vcombine.low %v4657, %v4658
      %4723 = vst [vmem:[%s285] sm:$0xff] %v4691
      %4724 = vst [vmem:[%s285 + $0x8] sm:$0xff] %v4692
      %4725 = vst [vmem:[%s285 + $0x10] sm:$0xff] %v4693
      %4726 = vst [vmem:[%s285 + $0x18] sm:$0xff] %v4694
      %4727 = vst [vmem:[%s285 + $0x20] sm:$0xff] %v4695
      %4728 = vst [vmem:[%s285 + $0x28] sm:$0xff] %v4696
      %4729 = vst [vmem:[%s285 + $0x30] sm:$0xff] %v4697
      %4730 = vst [vmem:[%s285 + $0x38] sm:$0xff] %v4698
      %4731 = vst [vmem:[%s285 + $0x40] sm:$0xff] %v4699
      %4732 = vst [vmem:[%s285 + $0x48] sm:$0xff] %v4700
      %4733 = vst [vmem:[%s285 + $0x50] sm:$0xff] %v4701
      %4734 = vst [vmem:[%s285 + $0x58] sm:$0xff] %v4702
      %4735 = vst [vmem:[%s285 + $0x60] sm:$0xff] %v4703
      %4736 = vst [vmem:[%s285 + $0x68] sm:$0xff] %v4704
      %4737 = vst [vmem:[%s285 + $0x70] sm:$0xff] %v4705
      %4738 = vst [vmem:[%s285 + $0x78] sm:$0xff] %v4706
      %s4739 = smul.u32 32, %s21
      %p4740 = scmp.lt.s32.totalorder %s20, 1
      %s4741 = scalar_select %p4740, %s20, 1
      %p4742 = scmp.lt.s32.totalorder %s4739, 31
      %s4743 = scalar_select %p4742, %s4739, 31
      %s4744 = smul.addr %s4741, 32
      %s4745 = sadd.s32 %s4743, %s4744
      %s4746 = smul.addr %s4745, 4
      %s4747 = scalar_lea.vmem %s3, %s4746
      %s4748 = smul.u32 32, %s21
      %p4749 = scmp.lt.s32.totalorder %s20, 1
      %s4750 = scalar_select %p4749, %s20, 1
      %p4751 = scmp.lt.s32.totalorder %s4748, 31
      %s4752 = scalar_select %p4751, %s4748, 31
      %s4753 = smul.addr %s4750, 32
      %s4754 = sadd.s32 %s4752, %s4753
      %s4755 = smul.addr %s4754, 2
      %s4756 = scalar_lea.vmem %s4, %s4755
      // Predicated region
      $region33: #{multi_attention_block3d.1} parent=31 // pred_check
        %p4757 = pneg %p125
      $region34: #{multi_attention_block3d.1} parent=31 // pred_check_branch
        %4759 = sbr.rel (%p4757) target = $region36
      $region35: #{multi_attention_block3d.1} parent=31 // pred_region
        %s4760 = smul.u32 32, %s21
      $region36: #{multi_attention_block3d.1} parent=31 // pred_fallthru
        _
      // Predicated region
      $region37: #{multi_attention_block3d.1} parent=31 // pred_check
        %p4761 = pneg %p153
      $region38: #{multi_attention_block3d.1} parent=31 // pred_check_branch
        %4763 = sbr.rel (%p4761) target = $region40
      $region39: #{multi_attention_block3d.1} parent=31 // pred_region
        %s4764 = smul.u32 32, %s21
      $region40: #{multi_attention_block3d.1} parent=31 // pred_fallthru
        _
    $region32: #{multi_attention_block3d.1} parent=5 // pred_fallthru
      _
    %p4765 = scmp.le.s32.totalorder 2, %s11
    // Predicated region
    $region41: #{multi_attention_block3d.1} parent=5 // pred_check
      %p4766 = pneg %p4765
    $region42: #{multi_attention_block3d.1} parent=5 // pred_check_branch
      %4768 = sbr.rel (%p4766) target = $region44
    $region43: #{multi_attention_block3d.1} parent=5 // pred_region
      %s4769 = ssub.s32 %s11, 2
      // Predicated region
      $region45: #{multi_attention_block3d.1} parent=43 // pred_check
        %p4770 = pneg %p131
      $region46: #{multi_attention_block3d.1} parent=43 // pred_check_branch
        %4772 = sbr.rel (%p4770) target = $region48
      $region47: #{multi_attention_block3d.1} parent=43 // pred_region
        %s4773 = smul.u32 32, %s23
        %p4774 = scmp.lt.s32.totalorder %s22, 1
        %s4775 = scalar_select %p4774, %s22, 1
        %p4776 = scmp.lt.s32.totalorder %s4773, 31
        %s4777 = scalar_select %p4776, %s4773, 31
        %s4778 = smul.addr %s4775, 32
        %s4779 = sadd.s32 %s4777, %s4778
        %s4780 = smul.addr %s4779, 4
        %s4781 = scalar_lea.vmem %s3, %s4780
      $region48: #{multi_attention_block3d.1} parent=43 // pred_fallthru
        _
      // Predicated region
      $region49: #{multi_attention_block3d.1} parent=43 // pred_check
        %p4782 = pneg %p159
      $region50: #{multi_attention_block3d.1} parent=43 // pred_check_branch
        %4784 = sbr.rel (%p4782) target = $region52
      $region51: #{multi_attention_block3d.1} parent=43 // pred_region
        %s4785 = smul.u32 32, %s23
        %p4786 = scmp.lt.s32.totalorder %s22, 1
        %s4787 = scalar_select %p4786, %s22, 1
        %p4788 = scmp.lt.s32.totalorder %s4785, 31
        %s4789 = scalar_select %p4788, %s4785, 31
        %s4790 = smul.addr %s4787, 32
        %s4791 = sadd.s32 %s4789, %s4790
        %s4792 = smul.addr %s4791, 2
        %s4793 = scalar_lea.vmem %s4, %s4792
      $region52: #{multi_attention_block3d.1} parent=43 // pred_fallthru
        _
    $region44: #{multi_attention_block3d.1} parent=5 // pred_fallthru
      _
  $region6: #{multi_attention_block3d.1} parent=0 // loop_footer
    %s15 = sadd.s32 1, %s11
  $region7: #{multi_attention_block3d.1} parent=0 // loop_footer_branch
    %10 = sbr.rel target = $region3
  $region8: #{multi_attention_block3d.1} parent=0 // loop_exit
    _

</llo_original>
